<compile_context>
chip_gen: v5e
topology: v5e:2x2
jax: 0.10.0
libtpu: 0.0.40
codegen_flags: <defaults>
</compile_context>

<pallas_src>
import functools

import jax
import jax.numpy as jnp
from jax.experimental import pallas as pl
from jax.experimental.pallas import tpu as pltpu


def _round_up(x, m):
    return (x + m - 1) // m * m


def _vpu_has_bf16():
    # v6e / v7x VPUs have bf16 VALUs; v2-v5 (incl. v5e) do not.
    try:
        kind = jax.devices()[0].device_kind.lower()
    except Exception:
        return False
    return not any(t in kind for t in ("v2", "v3", "v4", "v5"))


def pick_tile(batch):
    """Adaptive batch tile: avoid padding tiny batches, keep >=2 grid steps for
    mid-size batches (v7x megacore), amortize per-step overhead at large B."""
    if batch <= 32:
        return _round_up(max(batch, 1), 16)
    if batch <= 512:
        return _round_up(pl.cdiv(batch, 2), 16)
    if batch <= 2048:
        return 256
    return 512


def mlp_kernel(x_ref, w1_ref, b1_ref, w2_ref, b2_ref, w3_ref, b3_ref, o_ref,
               *, bf16_elementwise):
    # Layer 1: [TB, Kp] bf16 @ [Kp, 512] bf16 -> f32 accumulator on the MXU.
    a1 = jnp.dot(x_ref[...], w1_ref[...], preferred_element_type=jnp.float32)
    if bf16_elementwise:
        # v6e/v7x: bias+ReLU in bf16 (halves VPU lane work and h1/h2 footprint).
        h1 = jnp.maximum(a1.astype(jnp.bfloat16) + b1_ref[...], 0)
    else:
        # v5e: f32 VPU path, cast to bf16 only for the next MXU op.
        h1 = jnp.maximum(a1 + b1_ref[...], 0.0).astype(jnp.bfloat16)

    # Layer 2.
    a2 = jnp.dot(h1, w2_ref[...], preferred_element_type=jnp.float32)
    if bf16_elementwise:
        h2 = jnp.maximum(a2.astype(jnp.bfloat16) + b2_ref[...], 0)
    else:
        h2 = jnp.maximum(a2 + b2_ref[...], 0.0).astype(jnp.bfloat16)

    # Layer 3: N padded to 128 -> lane-dense output store; bias add in f32.
    logits = jnp.dot(h2, w3_ref[...], preferred_element_type=jnp.float32)
    o_ref[...] = (logits + b3_ref[...]).astype(o_ref.dtype)


def prepare_params(w1, b1, w2, b2, w3, b3, *, bf16_elementwise):
    """One-time weight/bias reformatting (pad + bf16 cast), hoisted out of the
    per-call path."""
    d_in, h = w1.shape                     # 784, 512
    d_out = w3.shape[1]                    # 10
    k_pad = _round_up(d_in, 128)           # 784 -> 896
    n_pad = max(_round_up(d_out, 128), 128)

    w1_p = jnp.zeros((k_pad, h), jnp.bfloat16).at[:d_in, :].set(
        w1.astype(jnp.bfloat16))
    w2_p = w2.astype(jnp.bfloat16)
    w3_p = jnp.zeros((h, n_pad), jnp.bfloat16).at[:, :d_out].set(
        w3.astype(jnp.bfloat16))
    b_dt = jnp.bfloat16 if bf16_elementwise else jnp.float32
    b1_p = b1.reshape(1, h).astype(b_dt)
    b2_p = b2.reshape(1, h).astype(b_dt)
    b3_p = jnp.zeros((1, n_pad), jnp.float32).at[:, :d_out].set(
        b3.astype(jnp.float32))
    return (w1_p, b1_p, w2_p, b2_p, w3_p, b3_p)


def _block_spec(shape, index_map, buffers=None):
    if buffers is not None:
        try:
            return pl.BlockSpec(shape, index_map,
                                pipeline_mode=pl.Buffered(buffers))
        except TypeError:
            pass
    return pl.BlockSpec(shape, index_map)


@functools.partial(jax.jit,
                   static_argnames=("tb", "d_out", "bf16_elementwise",
                                    "use_buffered"))
def _mlp_forward(x, params, *, tb, d_out, bf16_elementwise, use_buffered):
    w1_p, b1_p, w2_p, b2_p, w3_p, b3_p = params
    k_pad, h = w1_p.shape
    n_pad = w3_p.shape[1]

    # x: [B, 1, 28, 28] -> flatten (start_dim=1) to [B, 784]; pad + cast fused.
    batch = x.shape[0]
    x2d = x.reshape(batch, -1)
    d_in = x2d.shape[1]
    b_pad = _round_up(batch, tb)
    x_p = jnp.zeros((b_pad, k_pad), jnp.bfloat16).at[:batch, :d_in].set(
        x2d.astype(jnp.bfloat16))

    resident_buf = 1 if use_buffered else None
    x_buf = 3 if (use_buffered and tb >= 512) else None
    vmem_limit = (16 << 20) if tb <= 256 else (24 << 20)

    out = pl.pallas_call(
        functools.partial(mlp_kernel, bf16_elementwise=bf16_elementwise),
        out_shape=jax.ShapeDtypeStruct((b_pad, n_pad), jnp.float32),
        grid=(b_pad // tb,),
        in_specs=[
            _block_spec((tb, k_pad), lambda i: (i, 0), x_buf),   # x: batch-tiled
            _block_spec((k_pad, h), lambda i: (0, 0), resident_buf),
            _block_spec((1, h), lambda i: (0, 0), resident_buf),
            _block_spec((h, h), lambda i: (0, 0), resident_buf),
            _block_spec((1, h), lambda i: (0, 0), resident_buf),
            _block_spec((h, n_pad), lambda i: (0, 0), resident_buf),
            _block_spec((1, n_pad), lambda i: (0, 0), resident_buf),
        ],
        out_specs=pl.BlockSpec((tb, n_pad), lambda i: (i, 0)),
        compiler_params=pltpu.CompilerParams(
            dimension_semantics=("parallel",),   # megacore sharding on v7x
            vmem_limit_bytes=vmem_limit,
        ),
    )(x_p, w1_p, b1_p, w2_p, b2_p, w3_p, b3_p)

    return out[:batch, :d_out]


def mlp_forward(x, params, *, tb, d_out, bf16_elementwise):
    """Runs the Pallas forward.  Falls back to default (double) buffering if this
    JAX/Mosaic version rejects pipeline_mode=pl.Buffered on TPU BlockSpecs."""
    try:
        out = _mlp_forward(x, params, tb=tb, d_out=d_out,
                           bf16_elementwise=bf16_elementwise, use_buffered=True)
        return jax.block_until_ready(out)
    except Exception:
        out = _mlp_forward(x, params, tb=tb, d_out=d_out,
                           bf16_elementwise=bf16_elementwise, use_buffered=False)
        return jax.block_until_ready(out)


def init_params(key):
    # Matches PyTorch nn.Linear default init: U(-1/sqrt(fan_in), 1/sqrt(fan_in))
    def linear(k, fan_in, fan_out):
        kw, kb = jax.random.split(k)
        bound = 1.0 / jnp.sqrt(fan_in)
        w = jax.random.uniform(kw, (fan_in, fan_out), jnp.float32, -bound, bound)
        b = jax.random.uniform(kb, (fan_out,), jnp.float32, -bound, bound)
        return w, b

    k1, k2, k3 = jax.random.split(key, 3)
    w1, b1 = linear(k1, 28 * 28, 512)
    w2, b2 = linear(k2, 512, 512)
    w3, b3 = linear(k3, 512, 10)
    return w1, b1, w2, b2, w3, b3


def reference_forward(x, w1, b1, w2, b2, w3, b3, *, bf16_elementwise):
    # Plain-JAX reference mirroring the kernel's bf16 casts (f32 accumulation),
    # so tolerances stay tight while validating the pipeline structure.
    hp = jax.lax.Precision.HIGHEST
    bf = lambda a: a.astype(jnp.bfloat16)
    f32 = lambda a: a.astype(jnp.float32)
    batch = x.shape[0]

    xb = bf(x.reshape(batch, -1))
    a1 = jnp.dot(f32(xb), f32(bf(w1)), precision=hp)
    h1 = (jnp.maximum(bf(a1) + bf(b1), 0) if bf16_elementwise
          else bf(jnp.maximum(a1 + b1, 0.0)))
    a2 = jnp.dot(f32(h1), f32(bf(w2)), precision=hp)
    h2 = (jnp.maximum(bf(a2) + bf(b2), 0) if bf16_elementwise
          else bf(jnp.maximum(a2 + b2, 0.0)))
    return jnp.dot(f32(h2), f32(bf(w3)), precision=hp) + b3


if __name__ == "__main__":
    key = jax.random.PRNGKey(0)
    kx, kp = jax.random.split(key)

    B = 8
    x = jax.random.normal(kx, (B, 1, 28, 28), jnp.float32)
    params = init_params(kp)

    bf16_elem = _vpu_has_bf16()
    prepared = prepare_params(*params, bf16_elementwise=bf16_elem)
    prepared = jax.block_until_ready(prepared)        # one-time reformat
    tb = pick_tile(B)                                 # B=8 -> tb=16 (no 16x pad)

    logits = mlp_forward(x, prepared, tb=tb, d_out=10,
                         bf16_elementwise=bf16_elem)
    assert logits.shape == (B, 10)

    ref = reference_forward(x, *params, bf16_elementwise=bf16_elem)
    max_err = float(jnp.max(jnp.abs(logits - ref)))
    assert jnp.allclose(logits, ref, atol=2e-2, rtol=2e-2), max_err

    print("KERNEL_OK")
</pallas_src>

<mosaic_0001>
module attributes {stable_mosaic.version = 11 : i64} {
  func.func @mlp_kernel(%arg0: i32, %arg1: memref<16x896xbf16, #tpu.memory_space<vmem>>, %arg2: memref<896x512xbf16, #tpu.memory_space<vmem>>, %arg3: memref<1x512xbf16, #tpu.memory_space<vmem>>, %arg4: memref<512x512xbf16, #tpu.memory_space<vmem>>, %arg5: memref<1x512xbf16, #tpu.memory_space<vmem>>, %arg6: memref<512x128xbf16, #tpu.memory_space<vmem>>, %arg7: memref<1x128xf32, #tpu.memory_space<vmem>>, %arg8: memref<16x128xf32, #tpu.memory_space<vmem>>) attributes {dimension_semantics = [#tpu.dimension_semantics<parallel>], iteration_bounds = array<i64: 1>, scalar_prefetch = 0 : i64, scratch_operands = 0 : i64, tpu.core_type = #tpu.core_type<tc>, window_params = [{transform_indices = @transform_0, window_bounds = array<i64: 16, 896>}, {pipeline_mode = #tpu.pipeline_mode<synchronous>, transform_indices = @transform_1, window_bounds = array<i64: 896, 512>}, {pipeline_mode = #tpu.pipeline_mode<synchronous>, transform_indices = @transform_2, window_bounds = array<i64: 1, 512>}, {pipeline_mode = #tpu.pipeline_mode<synchronous>, transform_indices = @transform_3, window_bounds = array<i64: 512, 512>}, {pipeline_mode = #tpu.pipeline_mode<synchronous>, transform_indices = @transform_4, window_bounds = array<i64: 1, 512>}, {pipeline_mode = #tpu.pipeline_mode<synchronous>, transform_indices = @transform_5, window_bounds = array<i64: 512, 128>}, {pipeline_mode = #tpu.pipeline_mode<synchronous>, transform_indices = @transform_6, window_bounds = array<i64: 1, 128>}, {transform_indices = @transform_7, window_bounds = array<i64: 16, 128>}]} {
    %c0 = arith.constant 0 : index
    %c0_0 = arith.constant 0 : index
    %0 = vector.load %arg1[%c0, %c0_0] : memref<16x896xbf16, #tpu.memory_space<vmem>>, vector<16x896xbf16>
    %c0_1 = arith.constant 0 : index
    %c0_2 = arith.constant 0 : index
    %1 = vector.load %arg2[%c0_1, %c0_2] : memref<896x512xbf16, #tpu.memory_space<vmem>>, vector<896x512xbf16>
    %cst = arith.constant dense<0.000000e+00> : vector<16x512xf32>
    %2 = tpu.matmul %0, %1, %cst {dimension_numbers = #tpu.dot_dimension_numbers<[1], [0], [0], [1], [0, 0, 1, 1], [], []>} : vector<16x896xbf16>, vector<896x512xbf16>, vector<16x512xf32> -> vector<16x512xf32>
    %3 = arith.truncf %2 : vector<16x512xf32> to vector<16x512xbf16>
    %c0_3 = arith.constant 0 : index
    %c0_4 = arith.constant 0 : index
    %4 = vector.load %arg3[%c0_3, %c0_4] : memref<1x512xbf16, #tpu.memory_space<vmem>>, vector<1x512xbf16>
    %5 = vector.broadcast %4 : vector<1x512xbf16> to vector<16x512xbf16>
    %6 = arith.addf %3, %5 : vector<16x512xbf16>
    %cst_5 = arith.constant 0.000000e+00 : bf16
    %7 = vector.broadcast %cst_5 : bf16 to vector<16x512xbf16>
    %8 = arith.maximumf %6, %7 : vector<16x512xbf16>
    %c0_6 = arith.constant 0 : index
    %c0_7 = arith.constant 0 : index
    %9 = vector.load %arg4[%c0_6, %c0_7] : memref<512x512xbf16, #tpu.memory_space<vmem>>, vector<512x512xbf16>
    %cst_8 = arith.constant dense<0.000000e+00> : vector<16x512xf32>
    %10 = tpu.matmul %8, %9, %cst_8 {dimension_numbers = #tpu.dot_dimension_numbers<[1], [0], [0], [1], [0, 0, 1, 1], [], []>} : vector<16x512xbf16>, vector<512x512xbf16>, vector<16x512xf32> -> vector<16x512xf32>
    %11 = arith.truncf %10 : vector<16x512xf32> to vector<16x512xbf16>
    %c0_9 = arith.constant 0 : index
    %c0_10 = arith.constant 0 : index
    %12 = vector.load %arg5[%c0_9, %c0_10] : memref<1x512xbf16, #tpu.memory_space<vmem>>, vector<1x512xbf16>
    %13 = vector.broadcast %12 : vector<1x512xbf16> to vector<16x512xbf16>
    %14 = arith.addf %11, %13 : vector<16x512xbf16>
    %cst_11 = arith.constant 0.000000e+00 : bf16
    %15 = vector.broadcast %cst_11 : bf16 to vector<16x512xbf16>
    %16 = arith.maximumf %14, %15 : vector<16x512xbf16>
    %c0_12 = arith.constant 0 : index
    %c0_13 = arith.constant 0 : index
    %17 = vector.load %arg6[%c0_12, %c0_13] : memref<512x128xbf16, #tpu.memory_space<vmem>>, vector<512x128xbf16>
    %cst_14 = arith.constant dense<0.000000e+00> : vector<16x128xf32>
    %18 = tpu.matmul %16, %17, %cst_14 {dimension_numbers = #tpu.dot_dimension_numbers<[1], [0], [0], [1], [0, 0, 1, 1], [], []>} : vector<16x512xbf16>, vector<512x128xbf16>, vector<16x128xf32> -> vector<16x128xf32>
    %c0_15 = arith.constant 0 : index
    %c0_16 = arith.constant 0 : index
    %19 = vector.load %arg7[%c0_15, %c0_16] : memref<1x128xf32, #tpu.memory_space<vmem>>, vector<1x128xf32>
    %20 = vector.broadcast %19 : vector<1x128xf32> to vector<16x128xf32>
    %21 = arith.addf %18, %20 : vector<16x128xf32>
    %c0_17 = arith.constant 0 : index
    %c0_18 = arith.constant 0 : index
    %22 = vector.load %arg8[%c0_17, %c0_18] : memref<16x128xf32, #tpu.memory_space<vmem>>, vector<16x128xf32>
    tpu.vector_store %arg8[%c0_17, %c0_18], %21 {strides = array<i32>} : memref<16x128xf32, #tpu.memory_space<vmem>>, vector<16x128xf32>,
    return
  }
  func.func @transform_0(%arg0: i32) -> (i32, i32) {
    %c0_i32 = arith.constant 0 : i32
    %c0_i32_0 = arith.constant 0 : i32
    return %arg0, %c0_i32 : i32, i32
  }
  func.func @transform_1(%arg0: i32) -> (i32, i32) {
    %c0_i32 = arith.constant 0 : i32
    %c0_i32_0 = arith.constant 0 : i32
    %c0_i32_1 = arith.constant 0 : i32
    return %c0_i32, %c0_i32_0 : i32, i32
  }
  func.func @transform_2(%arg0: i32) -> (i32, i32) {
    %c0_i32 = arith.constant 0 : i32
    %c0_i32_0 = arith.constant 0 : i32
    %c0_i32_1 = arith.constant 0 : i32
    return %c0_i32, %c0_i32_0 : i32, i32
  }
  func.func @transform_3(%arg0: i32) -> (i32, i32) {
    %c0_i32 = arith.constant 0 : i32
    %c0_i32_0 = arith.constant 0 : i32
    %c0_i32_1 = arith.constant 0 : i32
    return %c0_i32, %c0_i32_0 : i32, i32
  }
  func.func @transform_4(%arg0: i32) -> (i32, i32) {
    %c0_i32 = arith.constant 0 : i32
    %c0_i32_0 = arith.constant 0 : i32
    %c0_i32_1 = arith.constant 0 : i32
    return %c0_i32, %c0_i32_0 : i32, i32
  }
  func.func @transform_5(%arg0: i32) -> (i32, i32) {
    %c0_i32 = arith.constant 0 : i32
    %c0_i32_0 = arith.constant 0 : i32
    %c0_i32_1 = arith.constant 0 : i32
    return %c0_i32, %c0_i32_0 : i32, i32
  }
  func.func @transform_6(%arg0: i32) -> (i32, i32) {
    %c0_i32 = arith.constant 0 : i32
    %c0_i32_0 = arith.constant 0 : i32
    %c0_i32_1 = arith.constant 0 : i32
    return %c0_i32, %c0_i32_0 : i32, i32
  }
  func.func @transform_7(%arg0: i32) -> (i32, i32) {
    %c0_i32 = arith.constant 0 : i32
    %c0_i32_0 = arith.constant 0 : i32
    return %arg0, %c0_i32 : i32, i32
  }
}

module attributes {stable_mosaic.version = 11 : i64} {
  func.func @mlp_kernel(%arg0: i32, %arg1: memref<16x896xbf16, #tpu.memory_space<vmem>>, %arg2: memref<896x512xbf16, #tpu.memory_space<vmem>>, %arg3: memref<1x512xbf16, #tpu.memory_space<vmem>>, %arg4: memref<512x512xbf16, #tpu.memory_space<vmem>>, %arg5: memref<1x512xbf16, #tpu.memory_space<vmem>>, %arg6: memref<512x128xbf16, #tpu.memory_space<vmem>>, %arg7: memref<1x128xf32, #tpu.memory_space<vmem>>, %arg8: memref<16x128xf32, #tpu.memory_space<vmem>>) attributes {dimension_semantics = [#tpu.dimension_semantics<parallel>], iteration_bounds = array<i64: 1>, scalar_prefetch = 0 : i64, scratch_operands = 0 : i64, tpu.core_type = #tpu.core_type<tc>, window_params = [{transform_indices = @transform_0, window_bounds = array<i64: 16, 896>}, {pipeline_mode = #tpu.pipeline_mode<synchronous>, transform_indices = @transform_1, window_bounds = array<i64: 896, 512>}, {pipeline_mode = #tpu.pipeline_mode<synchronous>, transform_indices = @transform_2, window_bounds = array<i64: 1, 512>}, {pipeline_mode = #tpu.pipeline_mode<synchronous>, transform_indices = @transform_3, window_bounds = array<i64: 512, 512>}, {pipeline_mode = #tpu.pipeline_mode<synchronous>, transform_indices = @transform_4, window_bounds = array<i64: 1, 512>}, {pipeline_mode = #tpu.pipeline_mode<synchronous>, transform_indices = @transform_5, window_bounds = array<i64: 512, 128>}, {pipeline_mode = #tpu.pipeline_mode<synchronous>, transform_indices = @transform_6, window_bounds = array<i64: 1, 128>}, {transform_indices = @transform_7, window_bounds = array<i64: 16, 128>}]} {
    %c0 = arith.constant 0 : index
    %c0_0 = arith.constant 0 : index
    %0 = vector.load %arg1[%c0, %c0_0] : memref<16x896xbf16, #tpu.memory_space<vmem>>, vector<16x896xbf16>
    %c0_1 = arith.constant 0 : index
    %c0_2 = arith.constant 0 : index
    %1 = vector.load %arg2[%c0_1, %c0_2] : memref<896x512xbf16, #tpu.memory_space<vmem>>, vector<896x512xbf16>
    %cst = arith.constant dense<0.000000e+00> : vector<16x512xf32>
    %2 = tpu.matmul %0, %1, %cst {dimension_numbers = #tpu.dot_dimension_numbers<[1], [0], [0], [1], [0, 0, 1, 1], [], []>} : vector<16x896xbf16>, vector<896x512xbf16>, vector<16x512xf32> -> vector<16x512xf32>
    %3 = arith.truncf %2 : vector<16x512xf32> to vector<16x512xbf16>
    %c0_3 = arith.constant 0 : index
    %c0_4 = arith.constant 0 : index
    %4 = vector.load %arg3[%c0_3, %c0_4] : memref<1x512xbf16, #tpu.memory_space<vmem>>, vector<1x512xbf16>
    %5 = vector.broadcast %4 : vector<1x512xbf16> to vector<16x512xbf16>
    %6 = arith.addf %3, %5 : vector<16x512xbf16>
    %cst_5 = arith.constant 0.000000e+00 : bf16
    %7 = vector.broadcast %cst_5 : bf16 to vector<16x512xbf16>
    %8 = arith.maximumf %6, %7 : vector<16x512xbf16>
    %c0_6 = arith.constant 0 : index
    %c0_7 = arith.constant 0 : index
    %9 = vector.load %arg4[%c0_6, %c0_7] : memref<512x512xbf16, #tpu.memory_space<vmem>>, vector<512x512xbf16>
    %cst_8 = arith.constant dense<0.000000e+00> : vector<16x512xf32>
    %10 = tpu.matmul %8, %9, %cst_8 {dimension_numbers = #tpu.dot_dimension_numbers<[1], [0], [0], [1], [0, 0, 1, 1], [], []>} : vector<16x512xbf16>, vector<512x512xbf16>, vector<16x512xf32> -> vector<16x512xf32>
    %11 = arith.truncf %10 : vector<16x512xf32> to vector<16x512xbf16>
    %c0_9 = arith.constant 0 : index
    %c0_10 = arith.constant 0 : index
    %12 = vector.load %arg5[%c0_9, %c0_10] : memref<1x512xbf16, #tpu.memory_space<vmem>>, vector<1x512xbf16>
    %13 = vector.broadcast %12 : vector<1x512xbf16> to vector<16x512xbf16>
    %14 = arith.addf %11, %13 : vector<16x512xbf16>
    %cst_11 = arith.constant 0.000000e+00 : bf16
    %15 = vector.broadcast %cst_11 : bf16 to vector<16x512xbf16>
    %16 = arith.maximumf %14, %15 : vector<16x512xbf16>
    %c0_12 = arith.constant 0 : index
    %c0_13 = arith.constant 0 : index
    %17 = vector.load %arg6[%c0_12, %c0_13] : memref<512x128xbf16, #tpu.memory_space<vmem>>, vector<512x128xbf16>
    %cst_14 = arith.constant dense<0.000000e+00> : vector<16x128xf32>
    %18 = tpu.matmul %16, %17, %cst_14 {dimension_numbers = #tpu.dot_dimension_numbers<[1], [0], [0], [1], [0, 0, 1, 1], [], []>} : vector<16x512xbf16>, vector<512x128xbf16>, vector<16x128xf32> -> vector<16x128xf32>
    %c0_15 = arith.constant 0 : index
    %c0_16 = arith.constant 0 : index
    %19 = vector.load %arg7[%c0_15, %c0_16] : memref<1x128xf32, #tpu.memory_space<vmem>>, vector<1x128xf32>
    %20 = vector.broadcast %19 : vector<1x128xf32> to vector<16x128xf32>
    %21 = arith.addf %18, %20 : vector<16x128xf32>
    %c0_17 = arith.constant 0 : index
    %c0_18 = arith.constant 0 : index
    %22 = vector.load %arg8[%c0_17, %c0_18] : memref<16x128xf32, #tpu.memory_space<vmem>>, vector<16x128xf32>
    tpu.vector_store %arg8[%c0_17, %c0_18], %21 {strides = array<i32>} : memref<16x128xf32, #tpu.memory_space<vmem>>, vector<16x128xf32>,
    return
  }
  func.func @transform_0(%arg0: i32) -> (i32, i32) {
    %c0_i32 = arith.constant 0 : i32
    %c0_i32_0 = arith.constant 0 : i32
    return %arg0, %c0_i32 : i32, i32
  }
  func.func @transform_1(%arg0: i32) -> (i32, i32) {
    %c0_i32 = arith.constant 0 : i32
    %c0_i32_0 = arith.constant 0 : i32
    %c0_i32_1 = arith.constant 0 : i32
    return %c0_i32, %c0_i32_0 : i32, i32
  }
  func.func @transform_2(%arg0: i32) -> (i32, i32) {
    %c0_i32 = arith.constant 0 : i32
    %c0_i32_0 = arith.constant 0 : i32
    %c0_i32_1 = arith.constant 0 : i32
    return %c0_i32, %c0_i32_0 : i32, i32
  }
  func.func @transform_3(%arg0: i32) -> (i32, i32) {
    %c0_i32 = arith.constant 0 : i32
    %c0_i32_0 = arith.constant 0 : i32
    %c0_i32_1 = arith.constant 0 : i32
    return %c0_i32, %c0_i32_0 : i32, i32
  }
  func.func @transform_4(%arg0: i32) -> (i32, i32) {
    %c0_i32 = arith.constant 0 : i32
    %c0_i32_0 = arith.constant 0 : i32
    %c0_i32_1 = arith.constant 0 : i32
    return %c0_i32, %c0_i32_0 : i32, i32
  }
  func.func @transform_5(%arg0: i32) -> (i32, i32) {
    %c0_i32 = arith.constant 0 : i32
    %c0_i32_0 = arith.constant 0 : i32
    %c0_i32_1 = arith.constant 0 : i32
    return %c0_i32, %c0_i32_0 : i32, i32
  }
  func.func @transform_6(%arg0: i32) -> (i32, i32) {
    %c0_i32 = arith.constant 0 : i32
    %c0_i32_0 = arith.constant 0 : i32
    %c0_i32_1 = arith.constant 0 : i32
    return %c0_i32, %c0_i32_0 : i32, i32
  }
  func.func @transform_7(%arg0: i32) -> (i32, i32) {
    %c0_i32 = arith.constant 0 : i32
    %c0_i32_0 = arith.constant 0 : i32
    return %arg0, %c0_i32 : i32, i32
  }
}

</mosaic_0001>

<llo_original>
// kernel: _mlp_forward.1
$region0: #{_mlp_forward.1}
  #allocation0 [shape = 'u32[]', space=smem, size = 0x4, offset = 0x4, fixed_abs, tag = 'smem constant byte address 0x4 - core index']
  #allocation1 [shape = 'u32[72,128]{1,0:T(1,128)}', space=vmem, size = 0x9000, scoped, tag = 'internal scratch']
  %s0 = inlined_call_operand.vmem [shape: bf16[16,896], index: 0, kind: input, shape index: {}]
  %s1 = inlined_call_operand.hbm [shape: bf16[896,512], index: 1, kind: input, shape index: {}]
  %s2 = inlined_call_operand.vmem [shape: bf16[1,512], index: 2, kind: input, shape index: {}]
  %s3 = inlined_call_operand.hbm [shape: bf16[512,512], index: 3, kind: input, shape index: {}]
  %s4 = inlined_call_operand.vmem [shape: bf16[1,512], index: 4, kind: input, shape index: {}]
  %s5 = inlined_call_operand.vmem [shape: bf16[512,128], index: 5, kind: input, shape index: {}]
  %s6 = inlined_call_operand.vmem [shape: f32[1,128], index: 6, kind: input, shape index: {}]
  %s7 = inlined_call_operand.vmem [shape: f32[16,128], index: 7, kind: output, shape index: {}]
  %s8 = sld [smem:[#allocation0]]
  $region46: #{_mlp_forward.1} parent=0
    _
  %s10 = ssub.s32 1, %s8
  %s11 = scalar_select 0, %s10, %s8
  $region1: #{_mlp_forward.1} parent=0
    #allocation2 [shape = 'u8[917504]{0}', space=vmem, size = 0xe0000, scoped, tag = 'input window, operand 1, single buffered']
    #allocation3 [shape = 's32[1]{0}', space=sflag, size = 0x4, scoped, tag = 'scoped memory for _mlp_forward.1']
    #allocation4 [shape = 'u8[524288]{0}', space=vmem, size = 0x80000, scoped, tag = 'input window, operand 3, single buffered']
    #allocation5 [shape = 's32[1]{0}', space=sflag, size = 0x4, scoped, tag = 'scoped memory for _mlp_forward.1']
    %12 = vsyncpa [#allocation3], 0
    %13 = vsyncpa [#allocation5], 0
    // Predicated region
    $region2: #{_mlp_forward.1} parent=1 // pred_check
      _
    $region3: #{_mlp_forward.1} parent=1 // pred_check_branch
      %15 = sbr.rel (0) target = $region5
    $region4: #{_mlp_forward.1} parent=1 // pred_region
      _
    $region5: #{_mlp_forward.1} parent=1 // pred_fallthru
      _
    // Predicated region
    $region6: #{_mlp_forward.1} parent=1 // pred_check
      _
    $region7: #{_mlp_forward.1} parent=1 // pred_check_branch
      %17 = sbr.rel (0) target = $region9
    $region8: #{_mlp_forward.1} parent=1 // pred_region
      %19 = vsyncadd [#allocation3], 0
      %s20 = sshll.u32 %s1, 4
      %s21 = int_to_ptr.hbm [resolvable:$true] %s20
      %s22 = sshll.u32 [#allocation2], 4
      %s23 = int_to_ptr.vmem [resolvable:$true] %s22
      %28 = dma.hbm_to_vmem [thread:$0]  %s21, 28672, %s23, [#allocation3], 256, 256, 16
    $region9: #{_mlp_forward.1} parent=1 // pred_fallthru
      _
    // Predicated region
    $region10: #{_mlp_forward.1} parent=1 // pred_check
      _
    $region11: #{_mlp_forward.1} parent=1 // pred_check_branch
      %30 = sbr.rel (0) target = $region13
    $region12: #{_mlp_forward.1} parent=1 // pred_region
      _
    $region13: #{_mlp_forward.1} parent=1 // pred_fallthru
      _
    // Predicated region
    $region14: #{_mlp_forward.1} parent=1 // pred_check
      _
    $region15: #{_mlp_forward.1} parent=1 // pred_check_branch
      %32 = sbr.rel (0) target = $region17
    $region16: #{_mlp_forward.1} parent=1 // pred_region
      %34 = vsyncadd [#allocation5], 0
      %s35 = sshll.u32 %s3, 4
      %s36 = int_to_ptr.hbm [resolvable:$true] %s35
      %s37 = sshll.u32 [#allocation4], 4
      %s38 = int_to_ptr.vmem [resolvable:$true] %s37
      %43 = dma.hbm_to_vmem [thread:$0]  %s36, 16384, %s38, [#allocation5], 256, 256, 16
    $region17: #{_mlp_forward.1} parent=1 // pred_fallthru
      _
    // Predicated region
    $region18: #{_mlp_forward.1} parent=1 // pred_check
      _
    $region19: #{_mlp_forward.1} parent=1 // pred_check_branch
      %45 = sbr.rel (0) target = $region21
    $region20: #{_mlp_forward.1} parent=1 // pred_region
      _
    $region21: #{_mlp_forward.1} parent=1 // pred_fallthru
      _
    // Predicated region
    $region22: #{_mlp_forward.1} parent=1 // pred_check
      _
    $region23: #{_mlp_forward.1} parent=1 // pred_check_branch
      %47 = sbr.rel (0) target = $region25
    $region24: #{_mlp_forward.1} parent=1 // pred_region
      _
    $region25: #{_mlp_forward.1} parent=1 // pred_fallthru
      _
    // Predicated region
    $region26: #{_mlp_forward.1} parent=1 // pred_check
      _
    $region27: #{_mlp_forward.1} parent=1 // pred_check_branch
      %49 = sbr.rel (0) target = $region29
    $region28: #{_mlp_forward.1} parent=1 // pred_region
      _
    $region29: #{_mlp_forward.1} parent=1 // pred_fallthru
      _
    // Predicated region
    $region30: #{_mlp_forward.1} parent=1 // pred_check
      _
    $region31: #{_mlp_forward.1} parent=1 // pred_check_branch
      %51 = sbr.rel (0) target = $region33
    $region32: #{_mlp_forward.1} parent=1 // pred_region
      %53 = dma.done [#allocation3], 28672
    $region33: #{_mlp_forward.1} parent=1 // pred_fallthru
      _
    // Predicated region
    $region34: #{_mlp_forward.1} parent=1 // pred_check
      _
    $region35: #{_mlp_forward.1} parent=1 // pred_check_branch
      %55 = sbr.rel (0) target = $region37
    $region36: #{_mlp_forward.1} parent=1 // pred_region
      %57 = dma.done [#allocation5], 16384
    $region37: #{_mlp_forward.1} parent=1 // pred_fallthru
      _
    %v58 = vld [vmem:[%s0] sm:$0xff]
    %v59 = vld [vmem:[%s0 + $0x8] sm:$0xff]
    %v60 = vld [vmem:[%s0 + $0x10] sm:$0xff]
    %v61 = vld [vmem:[%s0 + $0x18] sm:$0xf]
    %v62 = vld [vmem:[%s0 + $0x1c] sm:$0xff]
    %v63 = vld [vmem:[%s0 + $0x24] sm:$0xff]
    %v64 = vld [vmem:[%s0 + $0x2c] sm:$0xff]
    %v65 = vld [vmem:[%s0 + $0x34] sm:$0xf]
    %v66 = vld [vmem:[#allocation2] sm:$0xff]
    %v67 = vld [vmem:[#allocation2 + $0x8] sm:$0xff]
    %v68 = vld [vmem:[#allocation2 + $0x10] sm:$0xff]
    %v69 = vld [vmem:[#allocation2 + $0x18] sm:$0xff]
    %v70 = vld [vmem:[#allocation2 + $0x20] sm:$0xff]
    %v71 = vld [vmem:[#allocation2 + $0x28] sm:$0xff]
    %v72 = vld [vmem:[#allocation2 + $0x30] sm:$0xff]
    %v73 = vld [vmem:[#allocation2 + $0x38] sm:$0xff]
    %v74 = vld [vmem:[#allocation2 + $0x40] sm:$0xff]
    %v75 = vld [vmem:[#allocation2 + $0x48] sm:$0xff]
    %v76 = vld [vmem:[#allocation2 + $0x50] sm:$0xff]
    %v77 = vld [vmem:[#allocation2 + $0x58] sm:$0xff]
    %v78 = vld [vmem:[#allocation2 + $0x60] sm:$0xff]
    %v79 = vld [vmem:[#allocation2 + $0x68] sm:$0xff]
    %v80 = vld [vmem:[#allocation2 + $0x70] sm:$0xff]
    %v81 = vld [vmem:[#allocation2 + $0x78] sm:$0xff]
    %v82 = vld [vmem:[#allocation2 + $0x80] sm:$0xff]
    %v83 = vld [vmem:[#allocation2 + $0x88] sm:$0xff]
    %v84 = vld [vmem:[#allocation2 + $0x90] sm:$0xff]
    %v85 = vld [vmem:[#allocation2 + $0x98] sm:$0xff]
    %v86 = vld [vmem:[#allocation2 + $0xa0] sm:$0xff]
    %v87 = vld [vmem:[#allocation2 + $0xa8] sm:$0xff]
    %v88 = vld [vmem:[#allocation2 + $0xb0] sm:$0xff]
    %v89 = vld [vmem:[#allocation2 + $0xb8] sm:$0xff]
    %v90 = vld [vmem:[#allocation2 + $0xc0] sm:$0xff]
    %v91 = vld [vmem:[#allocation2 + $0xc8] sm:$0xff]
    %v92 = vld [vmem:[#allocation2 + $0xd0] sm:$0xff]
    %v93 = vld [vmem:[#allocation2 + $0xd8] sm:$0xff]
    %v94 = vld [vmem:[#allocation2 + $0xe0] sm:$0xff]
    %v95 = vld [vmem:[#allocation2 + $0xe8] sm:$0xff]
    %v96 = vld [vmem:[#allocation2 + $0xf0] sm:$0xff]
    %v97 = vld [vmem:[#allocation2 + $0xf8] sm:$0xff]
    %v98 = vld [vmem:[#allocation2 + $0x100] sm:$0xff]
    %v99 = vld [vmem:[#allocation2 + $0x108] sm:$0xff]
    %v100 = vld [vmem:[#allocation2 + $0x110] sm:$0xff]
    %v101 = vld [vmem:[#allocation2 + $0x118] sm:$0xff]
    %v102 = vld [vmem:[#allocation2 + $0x120] sm:$0xff]
    %v103 = vld [vmem:[#allocation2 + $0x128] sm:$0xff]
    %v104 = vld [vmem:[#allocation2 + $0x130] sm:$0xff]
    %v105 = vld [vmem:[#allocation2 + $0x138] sm:$0xff]
    %v106 = vld [vmem:[#allocation2 + $0x140] sm:$0xff]
    %v107 = vld [vmem:[#allocation2 + $0x148] sm:$0xff]
    %v108 = vld [vmem:[#allocation2 + $0x150] sm:$0xff]
    %v109 = vld [vmem:[#allocation2 + $0x158] sm:$0xff]
    %v110 = vld [vmem:[#allocation2 + $0x160] sm:$0xff]
    %v111 = vld [vmem:[#allocation2 + $0x168] sm:$0xff]
    %v112 = vld [vmem:[#allocation2 + $0x170] sm:$0xff]
    %v113 = vld [vmem:[#allocation2 + $0x178] sm:$0xff]
    %v114 = vld [vmem:[#allocation2 + $0x180] sm:$0xff]
    %v115 = vld [vmem:[#allocation2 + $0x188] sm:$0xff]
    %v116 = vld [vmem:[#allocation2 + $0x190] sm:$0xff]
    %v117 = vld [vmem:[#allocation2 + $0x198] sm:$0xff]
    %v118 = vld [vmem:[#allocation2 + $0x1a0] sm:$0xff]
    %v119 = vld [vmem:[#allocation2 + $0x1a8] sm:$0xff]
    %v120 = vld [vmem:[#allocation2 + $0x1b0] sm:$0xff]
    %v121 = vld [vmem:[#allocation2 + $0x1b8] sm:$0xff]
    %v122 = vld [vmem:[#allocation2 + $0x1c0] sm:$0xff]
    %v123 = vld [vmem:[#allocation2 + $0x1c8] sm:$0xff]
    %v124 = vld [vmem:[#allocation2 + $0x1d0] sm:$0xff]
    %v125 = vld [vmem:[#allocation2 + $0x1d8] sm:$0xff]
    %v126 = vld [vmem:[#allocation2 + $0x1e0] sm:$0xff]
    %v127 = vld [vmem:[#allocation2 + $0x1e8] sm:$0xff]
    %v128 = vld [vmem:[#allocation2 + $0x1f0] sm:$0xff]
    %v129 = vld [vmem:[#allocation2 + $0x1f8] sm:$0xff]
    %v130 = vld [vmem:[#allocation2 + $0x200] sm:$0xff]
    %v131 = vld [vmem:[#allocation2 + $0x208] sm:$0xff]
    %v132 = vld [vmem:[#allocation2 + $0x210] sm:$0xff]
    %v133 = vld [vmem:[#allocation2 + $0x218] sm:$0xff]
    %v134 = vld [vmem:[#allocation2 + $0x220] sm:$0xff]
    %v135 = vld [vmem:[#allocation2 + $0x228] sm:$0xff]
    %v136 = vld [vmem:[#allocation2 + $0x230] sm:$0xff]
    %v137 = vld [vmem:[#allocation2 + $0x238] sm:$0xff]
    %v138 = vld [vmem:[#allocation2 + $0x240] sm:$0xff]
    %v139 = vld [vmem:[#allocation2 + $0x248] sm:$0xff]
    %v140 = vld [vmem:[#allocation2 + $0x250] sm:$0xff]
    %v141 = vld [vmem:[#allocation2 + $0x258] sm:$0xff]
    %v142 = vld [vmem:[#allocation2 + $0x260] sm:$0xff]
    %v143 = vld [vmem:[#allocation2 + $0x268] sm:$0xff]
    %v144 = vld [vmem:[#allocation2 + $0x270] sm:$0xff]
    %v145 = vld [vmem:[#allocation2 + $0x278] sm:$0xff]
    %v146 = vld [vmem:[#allocation2 + $0x280] sm:$0xff]
    %v147 = vld [vmem:[#allocation2 + $0x288] sm:$0xff]
    %v148 = vld [vmem:[#allocation2 + $0x290] sm:$0xff]
    %v149 = vld [vmem:[#allocation2 + $0x298] sm:$0xff]
    %v150 = vld [vmem:[#allocation2 + $0x2a0] sm:$0xff]
    %v151 = vld [vmem:[#allocation2 + $0x2a8] sm:$0xff]
    %v152 = vld [vmem:[#allocation2 + $0x2b0] sm:$0xff]
    %v153 = vld [vmem:[#allocation2 + $0x2b8] sm:$0xff]
    %v154 = vld [vmem:[#allocation2 + $0x2c0] sm:$0xff]
    %v155 = vld [vmem:[#allocation2 + $0x2c8] sm:$0xff]
    %v156 = vld [vmem:[#allocation2 + $0x2d0] sm:$0xff]
    %v157 = vld [vmem:[#allocation2 + $0x2d8] sm:$0xff]
    %v158 = vld [vmem:[#allocation2 + $0x2e0] sm:$0xff]
    %v159 = vld [vmem:[#allocation2 + $0x2e8] sm:$0xff]
    %v160 = vld [vmem:[#allocation2 + $0x2f0] sm:$0xff]
    %v161 = vld [vmem:[#allocation2 + $0x2f8] sm:$0xff]
    %v162 = vld [vmem:[#allocation2 + $0x300] sm:$0xff]
    %v163 = vld [vmem:[#allocation2 + $0x308] sm:$0xff]
    %v164 = vld [vmem:[#allocation2 + $0x310] sm:$0xff]
    %v165 = vld [vmem:[#allocation2 + $0x318] sm:$0xff]
    %v166 = vld [vmem:[#allocation2 + $0x320] sm:$0xff]
    %v167 = vld [vmem:[#allocation2 + $0x328] sm:$0xff]
    %v168 = vld [vmem:[#allocation2 + $0x330] sm:$0xff]
    %v169 = vld [vmem:[#allocation2 + $0x338] sm:$0xff]
    %v170 = vld [vmem:[#allocation2 + $0x340] sm:$0xff]
    %v171 = vld [vmem:[#allocation2 + $0x348] sm:$0xff]
    %v172 = vld [vmem:[#allocation2 + $0x350] sm:$0xff]
    %v173 = vld [vmem:[#allocation2 + $0x358] sm:$0xff]
    %v174 = vld [vmem:[#allocation2 + $0x360] sm:$0xff]
    %v175 = vld [vmem:[#allocation2 + $0x368] sm:$0xff]
    %v176 = vld [vmem:[#allocation2 + $0x370] sm:$0xff]
    %v177 = vld [vmem:[#allocation2 + $0x378] sm:$0xff]
    %v178 = vld [vmem:[#allocation2 + $0x380] sm:$0xff]
    %v179 = vld [vmem:[#allocation2 + $0x388] sm:$0xff]
    %v180 = vld [vmem:[#allocation2 + $0x390] sm:$0xff]
    %v181 = vld [vmem:[#allocation2 + $0x398] sm:$0xff]
    %v182 = vld [vmem:[#allocation2 + $0x3a0] sm:$0xff]
    %v183 = vld [vmem:[#allocation2 + $0x3a8] sm:$0xff]
    %v184 = vld [vmem:[#allocation2 + $0x3b0] sm:$0xff]
    %v185 = vld [vmem:[#allocation2 + $0x3b8] sm:$0xff]
    %v186 = vld [vmem:[#allocation2 + $0x3c0] sm:$0xff]
    %v187 = vld [vmem:[#allocation2 + $0x3c8] sm:$0xff]
    %v188 = vld [vmem:[#allocation2 + $0x3d0] sm:$0xff]
    %v189 = vld [vmem:[#allocation2 + $0x3d8] sm:$0xff]
    %v190 = vld [vmem:[#allocation2 + $0x3e0] sm:$0xff]
    %v191 = vld [vmem:[#allocation2 + $0x3e8] sm:$0xff]
    %v192 = vld [vmem:[#allocation2 + $0x3f0] sm:$0xff]
    %v193 = vld [vmem:[#allocation2 + $0x3f8] sm:$0xff]
    %v194 = vld [vmem:[#allocation2 + $0x400] sm:$0xff]
    %v195 = vld [vmem:[#allocation2 + $0x408] sm:$0xff]
    %v196 = vld [vmem:[#allocation2 + $0x410] sm:$0xff]
    %v197 = vld [vmem:[#allocation2 + $0x418] sm:$0xff]
    %v198 = vld [vmem:[#allocation2 + $0x420] sm:$0xff]
    %v199 = vld [vmem:[#allocation2 + $0x428] sm:$0xff]
    %v200 = vld [vmem:[#allocation2 + $0x430] sm:$0xff]
    %v201 = vld [vmem:[#allocation2 + $0x438] sm:$0xff]
    %v202 = vld [vmem:[#allocation2 + $0x440] sm:$0xff]
    %v203 = vld [vmem:[#allocation2 + $0x448] sm:$0xff]
    %v204 = vld [vmem:[#allocation2 + $0x450] sm:$0xff]
    %v205 = vld [vmem:[#allocation2 + $0x458] sm:$0xff]
    %v206 = vld [vmem:[#allocation2 + $0x460] sm:$0xff]
    %v207 = vld [vmem:[#allocation2 + $0x468] sm:$0xff]
    %v208 = vld [vmem:[#allocation2 + $0x470] sm:$0xff]
    %v209 = vld [vmem:[#allocation2 + $0x478] sm:$0xff]
    %v210 = vld [vmem:[#allocation2 + $0x480] sm:$0xff]
    %v211 = vld [vmem:[#allocation2 + $0x488] sm:$0xff]
    %v212 = vld [vmem:[#allocation2 + $0x490] sm:$0xff]
    %v213 = vld [vmem:[#allocation2 + $0x498] sm:$0xff]
    %v214 = vld [vmem:[#allocation2 + $0x4a0] sm:$0xff]
    %v215 = vld [vmem:[#allocation2 + $0x4a8] sm:$0xff]
    %v216 = vld [vmem:[#allocation2 + $0x4b0] sm:$0xff]
    %v217 = vld [vmem:[#allocation2 + $0x4b8] sm:$0xff]
    %v218 = vld [vmem:[#allocation2 + $0x4c0] sm:$0xff]
    %v219 = vld [vmem:[#allocation2 + $0x4c8] sm:$0xff]
    %v220 = vld [vmem:[#allocation2 + $0x4d0] sm:$0xff]
    %v221 = vld [vmem:[#allocation2 + $0x4d8] sm:$0xff]
    %v222 = vld [vmem:[#allocation2 + $0x4e0] sm:$0xff]
    %v223 = vld [vmem:[#allocation2 + $0x4e8] sm:$0xff]
    %v224 = vld [vmem:[#allocation2 + $0x4f0] sm:$0xff]
    %v225 = vld [vmem:[#allocation2 + $0x4f8] sm:$0xff]
    %v226 = vld [vmem:[#allocation2 + $0x500] sm:$0xff]
    %v227 = vld [vmem:[#allocation2 + $0x508] sm:$0xff]
    %v228 = vld [vmem:[#allocation2 + $0x510] sm:$0xff]
    %v229 = vld [vmem:[#allocation2 + $0x518] sm:$0xff]
    %v230 = vld [vmem:[#allocation2 + $0x520] sm:$0xff]
    %v231 = vld [vmem:[#allocation2 + $0x528] sm:$0xff]
    %v232 = vld [vmem:[#allocation2 + $0x530] sm:$0xff]
    %v233 = vld [vmem:[#allocation2 + $0x538] sm:$0xff]
    %v234 = vld [vmem:[#allocation2 + $0x540] sm:$0xff]
    %v235 = vld [vmem:[#allocation2 + $0x548] sm:$0xff]
    %v236 = vld [vmem:[#allocation2 + $0x550] sm:$0xff]
    %v237 = vld [vmem:[#allocation2 + $0x558] sm:$0xff]
    %v238 = vld [vmem:[#allocation2 + $0x560] sm:$0xff]
    %v239 = vld [vmem:[#allocation2 + $0x568] sm:$0xff]
    %v240 = vld [vmem:[#allocation2 + $0x570] sm:$0xff]
    %v241 = vld [vmem:[#allocation2 + $0x578] sm:$0xff]
    %v242 = vld [vmem:[#allocation2 + $0x580] sm:$0xff]
    %v243 = vld [vmem:[#allocation2 + $0x588] sm:$0xff]
    %v244 = vld [vmem:[#allocation2 + $0x590] sm:$0xff]
    %v245 = vld [vmem:[#allocation2 + $0x598] sm:$0xff]
    %v246 = vld [vmem:[#allocation2 + $0x5a0] sm:$0xff]
    %v247 = vld [vmem:[#allocation2 + $0x5a8] sm:$0xff]
    %v248 = vld [vmem:[#allocation2 + $0x5b0] sm:$0xff]
    %v249 = vld [vmem:[#allocation2 + $0x5b8] sm:$0xff]
    %v250 = vld [vmem:[#allocation2 + $0x5c0] sm:$0xff]
    %v251 = vld [vmem:[#allocation2 + $0x5c8] sm:$0xff]
    %v252 = vld [vmem:[#allocation2 + $0x5d0] sm:$0xff]
    %v253 = vld [vmem:[#allocation2 + $0x5d8] sm:$0xff]
    %v254 = vld [vmem:[#allocation2 + $0x5e0] sm:$0xff]
    %v255 = vld [vmem:[#allocation2 + $0x5e8] sm:$0xff]
    %v256 = vld [vmem:[#allocation2 + $0x5f0] sm:$0xff]
    %v257 = vld [vmem:[#allocation2 + $0x5f8] sm:$0xff]
    %v258 = vld [vmem:[#allocation2 + $0x600] sm:$0xff]
    %v259 = vld [vmem:[#allocation2 + $0x608] sm:$0xff]
    %v260 = vld [vmem:[#allocation2 + $0x610] sm:$0xff]
    %v261 = vld [vmem:[#allocation2 + $0x618] sm:$0xff]
    %v262 = vld [vmem:[#allocation2 + $0x620] sm:$0xff]
    %v263 = vld [vmem:[#allocation2 + $0x628] sm:$0xff]
    %v264 = vld [vmem:[#allocation2 + $0x630] sm:$0xff]
    %v265 = vld [vmem:[#allocation2 + $0x638] sm:$0xff]
    %v266 = vld [vmem:[#allocation2 + $0x640] sm:$0xff]
    %v267 = vld [vmem:[#allocation2 + $0x648] sm:$0xff]
    %v268 = vld [vmem:[#allocation2 + $0x650] sm:$0xff]
    %v269 = vld [vmem:[#allocation2 + $0x658] sm:$0xff]
    %v270 = vld [vmem:[#allocation2 + $0x660] sm:$0xff]
    %v271 = vld [vmem:[#allocation2 + $0x668] sm:$0xff]
    %v272 = vld [vmem:[#allocation2 + $0x670] sm:$0xff]
    %v273 = vld [vmem:[#allocation2 + $0x678] sm:$0xff]
    %v274 = vld [vmem:[#allocation2 + $0x680] sm:$0xff]
    %v275 = vld [vmem:[#allocation2 + $0x688] sm:$0xff]
    %v276 = vld [vmem:[#allocation2 + $0x690] sm:$0xff]
    %v277 = vld [vmem:[#allocation2 + $0x698] sm:$0xff]
    %v278 = vld [vmem:[#allocation2 + $0x6a0] sm:$0xff]
    %v279 = vld [vmem:[#allocation2 + $0x6a8] sm:$0xff]
    %v280 = vld [vmem:[#allocation2 + $0x6b0] sm:$0xff]
    %v281 = vld [vmem:[#allocation2 + $0x6b8] sm:$0xff]
    %v282 = vld [vmem:[#allocation2 + $0x6c0] sm:$0xff]
    %v283 = vld [vmem:[#allocation2 + $0x6c8] sm:$0xff]
    %v284 = vld [vmem:[#allocation2 + $0x6d0] sm:$0xff]
    %v285 = vld [vmem:[#allocation2 + $0x6d8] sm:$0xff]
    %v286 = vld [vmem:[#allocation2 + $0x6e0] sm:$0xff]
    %v287 = vld [vmem:[#allocation2 + $0x6e8] sm:$0xff]
    %v288 = vld [vmem:[#allocation2 + $0x6f0] sm:$0xff]
    %v289 = vld [vmem:[#allocation2 + $0x6f8] sm:$0xff]
    %v298 = vunpack.c.l.b16 %v58
    %v299 = vunpack.c.h.b16 %v58
    %v300 = vunpack.c.l.b16 %v59
    %v301 = vunpack.c.h.b16 %v59
    %v302 = vunpack.c.l.b16 %v60
    %v303 = vunpack.c.h.b16 %v60
    %v304 = vunpack.c.l.b16 %v61
    %v305 = vunpack.c.l.b16 %v62
    %v306 = vunpack.c.h.b16 %v62
    %v307 = vunpack.c.l.b16 %v63
    %v308 = vunpack.c.h.b16 %v63
    %v309 = vunpack.c.l.b16 %v64
    %v310 = vunpack.c.h.b16 %v64
    %v311 = vunpack.c.l.b16 %v65
    %v312 = vpack.c.b16 %v305, %v298
    %v313 = vpack.c.b16 %v306, %v299
    %v314 = vpack.c.b16 %v307, %v300
    %v315 = vpack.c.b16 %v308, %v301
    %v316 = vpack.c.b16 %v309, %v302
    %v317 = vpack.c.b16 %v310, %v303
    %v318 = vpack.c.b16 %v311, %v304
    %v550 = vunpack.c.l.b16 %v66
    %v551 = vunpack.c.h.b16 %v66
    %v552 = vunpack.c.l.b16 %v67
    %v553 = vunpack.c.h.b16 %v67
    %v554 = vunpack.c.l.b16 %v68
    %v555 = vunpack.c.h.b16 %v68
    %v556 = vunpack.c.l.b16 %v69
    %v557 = vunpack.c.h.b16 %v69
    %v558 = vunpack.c.l.b16 %v70
    %v559 = vunpack.c.h.b16 %v70
    %v560 = vunpack.c.l.b16 %v71
    %v561 = vunpack.c.h.b16 %v71
    %v562 = vunpack.c.l.b16 %v72
    %v563 = vunpack.c.h.b16 %v72
    %v564 = vunpack.c.l.b16 %v73
    %v565 = vunpack.c.h.b16 %v73
    %v566 = vunpack.c.l.b16 %v74
    %v567 = vunpack.c.h.b16 %v74
    %v568 = vunpack.c.l.b16 %v75
    %v569 = vunpack.c.h.b16 %v75
    %v570 = vunpack.c.l.b16 %v76
    %v571 = vunpack.c.h.b16 %v76
    %v572 = vunpack.c.l.b16 %v77
    %v573 = vunpack.c.h.b16 %v77
    %v574 = vunpack.c.l.b16 %v78
    %v575 = vunpack.c.h.b16 %v78
    %v576 = vunpack.c.l.b16 %v79
    %v577 = vunpack.c.h.b16 %v79
    %v578 = vunpack.c.l.b16 %v80
    %v579 = vunpack.c.h.b16 %v80
    %v580 = vunpack.c.l.b16 %v81
    %v581 = vunpack.c.h.b16 %v81
    %v582 = vunpack.c.l.b16 %v82
    %v583 = vunpack.c.h.b16 %v82
    %v584 = vunpack.c.l.b16 %v83
    %v585 = vunpack.c.h.b16 %v83
    %v586 = vunpack.c.l.b16 %v84
    %v587 = vunpack.c.h.b16 %v84
    %v588 = vunpack.c.l.b16 %v85
    %v589 = vunpack.c.h.b16 %v85
    %v590 = vunpack.c.l.b16 %v86
    %v591 = vunpack.c.h.b16 %v86
    %v592 = vunpack.c.l.b16 %v87
    %v593 = vunpack.c.h.b16 %v87
    %v594 = vunpack.c.l.b16 %v88
    %v595 = vunpack.c.h.b16 %v88
    %v596 = vunpack.c.l.b16 %v89
    %v597 = vunpack.c.h.b16 %v89
    %v598 = vunpack.c.l.b16 %v90
    %v599 = vunpack.c.h.b16 %v90
    %v600 = vunpack.c.l.b16 %v91
    %v601 = vunpack.c.h.b16 %v91
    %v602 = vunpack.c.l.b16 %v92
    %v603 = vunpack.c.h.b16 %v92
    %v604 = vunpack.c.l.b16 %v93
    %v605 = vunpack.c.h.b16 %v93
    %v606 = vunpack.c.l.b16 %v94
    %v607 = vunpack.c.h.b16 %v94
    %v608 = vunpack.c.l.b16 %v95
    %v609 = vunpack.c.h.b16 %v95
    %v610 = vunpack.c.l.b16 %v96
    %v611 = vunpack.c.h.b16 %v96
    %v612 = vunpack.c.l.b16 %v97
    %v613 = vunpack.c.h.b16 %v97
    %v614 = vunpack.c.l.b16 %v98
    %v615 = vunpack.c.h.b16 %v98
    %v616 = vunpack.c.l.b16 %v99
    %v617 = vunpack.c.h.b16 %v99
    %v618 = vunpack.c.l.b16 %v100
    %v619 = vunpack.c.h.b16 %v100
    %v620 = vunpack.c.l.b16 %v101
    %v621 = vunpack.c.h.b16 %v101
    %v622 = vunpack.c.l.b16 %v102
    %v623 = vunpack.c.h.b16 %v102
    %v624 = vunpack.c.l.b16 %v103
    %v625 = vunpack.c.h.b16 %v103
    %v626 = vunpack.c.l.b16 %v104
    %v627 = vunpack.c.h.b16 %v104
    %v628 = vunpack.c.l.b16 %v105
    %v629 = vunpack.c.h.b16 %v105
    %v630 = vunpack.c.l.b16 %v106
    %v631 = vunpack.c.h.b16 %v106
    %v632 = vunpack.c.l.b16 %v107
    %v633 = vunpack.c.h.b16 %v107
    %v634 = vunpack.c.l.b16 %v108
    %v635 = vunpack.c.h.b16 %v108
    %v636 = vunpack.c.l.b16 %v109
    %v637 = vunpack.c.h.b16 %v109
    %v638 = vunpack.c.l.b16 %v110
    %v639 = vunpack.c.h.b16 %v110
    %v640 = vunpack.c.l.b16 %v111
    %v641 = vunpack.c.h.b16 %v111
    %v642 = vunpack.c.l.b16 %v112
    %v643 = vunpack.c.h.b16 %v112
    %v644 = vunpack.c.l.b16 %v113
    %v645 = vunpack.c.h.b16 %v113
    %v646 = vunpack.c.l.b16 %v114
    %v647 = vunpack.c.h.b16 %v114
    %v648 = vunpack.c.l.b16 %v115
    %v649 = vunpack.c.h.b16 %v115
    %v650 = vunpack.c.l.b16 %v116
    %v651 = vunpack.c.h.b16 %v116
    %v652 = vunpack.c.l.b16 %v117
    %v653 = vunpack.c.h.b16 %v117
    %v654 = vunpack.c.l.b16 %v118
    %v655 = vunpack.c.h.b16 %v118
    %v656 = vunpack.c.l.b16 %v119
    %v657 = vunpack.c.h.b16 %v119
    %v658 = vunpack.c.l.b16 %v120
    %v659 = vunpack.c.h.b16 %v120
    %v660 = vunpack.c.l.b16 %v121
    %v661 = vunpack.c.h.b16 %v121
    %v662 = vunpack.c.l.b16 %v122
    %v663 = vunpack.c.h.b16 %v122
    %v664 = vunpack.c.l.b16 %v123
    %v665 = vunpack.c.h.b16 %v123
    %v666 = vunpack.c.l.b16 %v124
    %v667 = vunpack.c.h.b16 %v124
    %v668 = vunpack.c.l.b16 %v125
    %v669 = vunpack.c.h.b16 %v125
    %v670 = vunpack.c.l.b16 %v126
    %v671 = vunpack.c.h.b16 %v126
    %v672 = vunpack.c.l.b16 %v127
    %v673 = vunpack.c.h.b16 %v127
    %v674 = vunpack.c.l.b16 %v128
    %v675 = vunpack.c.h.b16 %v128
    %v676 = vunpack.c.l.b16 %v129
    %v677 = vunpack.c.h.b16 %v129
    %v678 = vunpack.c.l.b16 %v130
    %v679 = vunpack.c.h.b16 %v130
    %v680 = vunpack.c.l.b16 %v131
    %v681 = vunpack.c.h.b16 %v131
    %v682 = vunpack.c.l.b16 %v132
    %v683 = vunpack.c.h.b16 %v132
    %v684 = vunpack.c.l.b16 %v133
    %v685 = vunpack.c.h.b16 %v133
    %v686 = vunpack.c.l.b16 %v134
    %v687 = vunpack.c.h.b16 %v134
    %v688 = vunpack.c.l.b16 %v135
    %v689 = vunpack.c.h.b16 %v135
    %v690 = vunpack.c.l.b16 %v136
    %v691 = vunpack.c.h.b16 %v136
    %v692 = vunpack.c.l.b16 %v137
    %v693 = vunpack.c.h.b16 %v137
    %v694 = vunpack.c.l.b16 %v138
    %v695 = vunpack.c.h.b16 %v138
    %v696 = vunpack.c.l.b16 %v139
    %v697 = vunpack.c.h.b16 %v139
    %v698 = vunpack.c.l.b16 %v140
    %v699 = vunpack.c.h.b16 %v140
    %v700 = vunpack.c.l.b16 %v141
    %v701 = vunpack.c.h.b16 %v141
    %v702 = vunpack.c.l.b16 %v142
    %v703 = vunpack.c.h.b16 %v142
    %v704 = vunpack.c.l.b16 %v143
    %v705 = vunpack.c.h.b16 %v143
    %v706 = vunpack.c.l.b16 %v144
    %v707 = vunpack.c.h.b16 %v144
    %v708 = vunpack.c.l.b16 %v145
    %v709 = vunpack.c.h.b16 %v145
    %v710 = vunpack.c.l.b16 %v146
    %v711 = vunpack.c.h.b16 %v146
    %v712 = vunpack.c.l.b16 %v147
    %v713 = vunpack.c.h.b16 %v147
    %v714 = vunpack.c.l.b16 %v148
    %v715 = vunpack.c.h.b16 %v148
    %v716 = vunpack.c.l.b16 %v149
    %v717 = vunpack.c.h.b16 %v149
    %v718 = vunpack.c.l.b16 %v150
    %v719 = vunpack.c.h.b16 %v150
    %v720 = vunpack.c.l.b16 %v151
    %v721 = vunpack.c.h.b16 %v151
    %v722 = vunpack.c.l.b16 %v152
    %v723 = vunpack.c.h.b16 %v152
    %v724 = vunpack.c.l.b16 %v153
    %v725 = vunpack.c.h.b16 %v153
    %v726 = vunpack.c.l.b16 %v154
    %v727 = vunpack.c.h.b16 %v154
    %v728 = vunpack.c.l.b16 %v155
    %v729 = vunpack.c.h.b16 %v155
    %v730 = vunpack.c.l.b16 %v156
    %v731 = vunpack.c.h.b16 %v156
    %v732 = vunpack.c.l.b16 %v157
    %v733 = vunpack.c.h.b16 %v157
    %v734 = vunpack.c.l.b16 %v158
    %v735 = vunpack.c.h.b16 %v158
    %v736 = vunpack.c.l.b16 %v159
    %v737 = vunpack.c.h.b16 %v159
    %v738 = vunpack.c.l.b16 %v160
    %v739 = vunpack.c.h.b16 %v160
    %v740 = vunpack.c.l.b16 %v161
    %v741 = vunpack.c.h.b16 %v161
    %v742 = vunpack.c.l.b16 %v162
    %v743 = vunpack.c.h.b16 %v162
    %v744 = vunpack.c.l.b16 %v163
    %v745 = vunpack.c.h.b16 %v163
    %v746 = vunpack.c.l.b16 %v164
    %v747 = vunpack.c.h.b16 %v164
    %v748 = vunpack.c.l.b16 %v165
    %v749 = vunpack.c.h.b16 %v165
    %v750 = vunpack.c.l.b16 %v166
    %v751 = vunpack.c.h.b16 %v166
    %v752 = vunpack.c.l.b16 %v167
    %v753 = vunpack.c.h.b16 %v167
    %v754 = vunpack.c.l.b16 %v168
    %v755 = vunpack.c.h.b16 %v168
    %v756 = vunpack.c.l.b16 %v169
    %v757 = vunpack.c.h.b16 %v169
    %v758 = vunpack.c.l.b16 %v170
    %v759 = vunpack.c.h.b16 %v170
    %v760 = vunpack.c.l.b16 %v171
    %v761 = vunpack.c.h.b16 %v171
    %v762 = vunpack.c.l.b16 %v172
    %v763 = vunpack.c.h.b16 %v172
    %v764 = vunpack.c.l.b16 %v173
    %v765 = vunpack.c.h.b16 %v173
    %v766 = vunpack.c.l.b16 %v174
    %v767 = vunpack.c.h.b16 %v174
    %v768 = vunpack.c.l.b16 %v175
    %v769 = vunpack.c.h.b16 %v175
    %v770 = vunpack.c.l.b16 %v176
    %v771 = vunpack.c.h.b16 %v176
    %v772 = vunpack.c.l.b16 %v177
    %v773 = vunpack.c.h.b16 %v177
    %v774 = vunpack.c.l.b16 %v178
    %v775 = vunpack.c.h.b16 %v178
    %v776 = vunpack.c.l.b16 %v179
    %v777 = vunpack.c.h.b16 %v179
    %v778 = vunpack.c.l.b16 %v180
    %v779 = vunpack.c.h.b16 %v180
    %v780 = vunpack.c.l.b16 %v181
    %v781 = vunpack.c.h.b16 %v181
    %v782 = vunpack.c.l.b16 %v182
    %v783 = vunpack.c.h.b16 %v182
    %v784 = vunpack.c.l.b16 %v183
    %v785 = vunpack.c.h.b16 %v183
    %v786 = vunpack.c.l.b16 %v184
    %v787 = vunpack.c.h.b16 %v184
    %v788 = vunpack.c.l.b16 %v185
    %v789 = vunpack.c.h.b16 %v185
    %v790 = vunpack.c.l.b16 %v186
    %v791 = vunpack.c.h.b16 %v186
    %v792 = vunpack.c.l.b16 %v187
    %v793 = vunpack.c.h.b16 %v187
    %v794 = vunpack.c.l.b16 %v188
    %v795 = vunpack.c.h.b16 %v188
    %v796 = vunpack.c.l.b16 %v189
    %v797 = vunpack.c.h.b16 %v189
    %v798 = vunpack.c.l.b16 %v190
    %v799 = vunpack.c.h.b16 %v190
    %v800 = vunpack.c.l.b16 %v191
    %v801 = vunpack.c.h.b16 %v191
    %v802 = vunpack.c.l.b16 %v192
    %v803 = vunpack.c.h.b16 %v192
    %v804 = vunpack.c.l.b16 %v193
    %v805 = vunpack.c.h.b16 %v193
    %v806 = vunpack.c.l.b16 %v194
    %v807 = vunpack.c.h.b16 %v194
    %v808 = vunpack.c.l.b16 %v195
    %v809 = vunpack.c.h.b16 %v195
    %v810 = vunpack.c.l.b16 %v196
    %v811 = vunpack.c.h.b16 %v196
    %v812 = vunpack.c.l.b16 %v197
    %v813 = vunpack.c.h.b16 %v197
    %v814 = vunpack.c.l.b16 %v198
    %v815 = vunpack.c.h.b16 %v198
    %v816 = vunpack.c.l.b16 %v199
    %v817 = vunpack.c.h.b16 %v199
    %v818 = vunpack.c.l.b16 %v200
    %v819 = vunpack.c.h.b16 %v200
    %v820 = vunpack.c.l.b16 %v201
    %v821 = vunpack.c.h.b16 %v201
    %v822 = vunpack.c.l.b16 %v202
    %v823 = vunpack.c.h.b16 %v202
    %v824 = vunpack.c.l.b16 %v203
    %v825 = vunpack.c.h.b16 %v203
    %v826 = vunpack.c.l.b16 %v204
    %v827 = vunpack.c.h.b16 %v204
    %v828 = vunpack.c.l.b16 %v205
    %v829 = vunpack.c.h.b16 %v205
    %v830 = vunpack.c.l.b16 %v206
    %v831 = vunpack.c.h.b16 %v206
    %v832 = vunpack.c.l.b16 %v207
    %v833 = vunpack.c.h.b16 %v207
    %v834 = vunpack.c.l.b16 %v208
    %v835 = vunpack.c.h.b16 %v208
    %v836 = vunpack.c.l.b16 %v209
    %v837 = vunpack.c.h.b16 %v209
    %v838 = vunpack.c.l.b16 %v210
    %v839 = vunpack.c.h.b16 %v210
    %v840 = vunpack.c.l.b16 %v211
    %v841 = vunpack.c.h.b16 %v211
    %v842 = vunpack.c.l.b16 %v212
    %v843 = vunpack.c.h.b16 %v212
    %v844 = vunpack.c.l.b16 %v213
    %v845 = vunpack.c.h.b16 %v213
    %v846 = vunpack.c.l.b16 %v214
    %v847 = vunpack.c.h.b16 %v214
    %v848 = vunpack.c.l.b16 %v215
    %v849 = vunpack.c.h.b16 %v215
    %v850 = vunpack.c.l.b16 %v216
    %v851 = vunpack.c.h.b16 %v216
    %v852 = vunpack.c.l.b16 %v217
    %v853 = vunpack.c.h.b16 %v217
    %v854 = vunpack.c.l.b16 %v218
    %v855 = vunpack.c.h.b16 %v218
    %v856 = vunpack.c.l.b16 %v219
    %v857 = vunpack.c.h.b16 %v219
    %v858 = vunpack.c.l.b16 %v220
    %v859 = vunpack.c.h.b16 %v220
    %v860 = vunpack.c.l.b16 %v221
    %v861 = vunpack.c.h.b16 %v221
    %v862 = vunpack.c.l.b16 %v222
    %v863 = vunpack.c.h.b16 %v222
    %v864 = vunpack.c.l.b16 %v223
    %v865 = vunpack.c.h.b16 %v223
    %v866 = vunpack.c.l.b16 %v224
    %v867 = vunpack.c.h.b16 %v224
    %v868 = vunpack.c.l.b16 %v225
    %v869 = vunpack.c.h.b16 %v225
    %v870 = vunpack.c.l.b16 %v226
    %v871 = vunpack.c.h.b16 %v226
    %v872 = vunpack.c.l.b16 %v227
    %v873 = vunpack.c.h.b16 %v227
    %v874 = vunpack.c.l.b16 %v228
    %v875 = vunpack.c.h.b16 %v228
    %v876 = vunpack.c.l.b16 %v229
    %v877 = vunpack.c.h.b16 %v229
    %v878 = vunpack.c.l.b16 %v230
    %v879 = vunpack.c.h.b16 %v230
    %v880 = vunpack.c.l.b16 %v231
    %v881 = vunpack.c.h.b16 %v231
    %v882 = vunpack.c.l.b16 %v232
    %v883 = vunpack.c.h.b16 %v232
    %v884 = vunpack.c.l.b16 %v233
    %v885 = vunpack.c.h.b16 %v233
    %v886 = vunpack.c.l.b16 %v234
    %v887 = vunpack.c.h.b16 %v234
    %v888 = vunpack.c.l.b16 %v235
    %v889 = vunpack.c.h.b16 %v235
    %v890 = vunpack.c.l.b16 %v236
    %v891 = vunpack.c.h.b16 %v236
    %v892 = vunpack.c.l.b16 %v237
    %v893 = vunpack.c.h.b16 %v237
    %v894 = vunpack.c.l.b16 %v238
    %v895 = vunpack.c.h.b16 %v238
    %v896 = vunpack.c.l.b16 %v239
    %v897 = vunpack.c.h.b16 %v239
    %v898 = vunpack.c.l.b16 %v240
    %v899 = vunpack.c.h.b16 %v240
    %v900 = vunpack.c.l.b16 %v241
    %v901 = vunpack.c.h.b16 %v241
    %v902 = vunpack.c.l.b16 %v242
    %v903 = vunpack.c.h.b16 %v242
    %v904 = vunpack.c.l.b16 %v243
    %v905 = vunpack.c.h.b16 %v243
    %v906 = vunpack.c.l.b16 %v244
    %v907 = vunpack.c.h.b16 %v244
    %v908 = vunpack.c.l.b16 %v245
    %v909 = vunpack.c.h.b16 %v245
    %v910 = vunpack.c.l.b16 %v246
    %v911 = vunpack.c.h.b16 %v246
    %v912 = vunpack.c.l.b16 %v247
    %v913 = vunpack.c.h.b16 %v247
    %v914 = vunpack.c.l.b16 %v248
    %v915 = vunpack.c.h.b16 %v248
    %v916 = vunpack.c.l.b16 %v249
    %v917 = vunpack.c.h.b16 %v249
    %v918 = vunpack.c.l.b16 %v250
    %v919 = vunpack.c.h.b16 %v250
    %v920 = vunpack.c.l.b16 %v251
    %v921 = vunpack.c.h.b16 %v251
    %v922 = vunpack.c.l.b16 %v252
    %v923 = vunpack.c.h.b16 %v252
    %v924 = vunpack.c.l.b16 %v253
    %v925 = vunpack.c.h.b16 %v253
    %v926 = vunpack.c.l.b16 %v254
    %v927 = vunpack.c.h.b16 %v254
    %v928 = vunpack.c.l.b16 %v255
    %v929 = vunpack.c.h.b16 %v255
    %v930 = vunpack.c.l.b16 %v256
    %v931 = vunpack.c.h.b16 %v256
    %v932 = vunpack.c.l.b16 %v257
    %v933 = vunpack.c.h.b16 %v257
    %v934 = vunpack.c.l.b16 %v258
    %v935 = vunpack.c.h.b16 %v258
    %v936 = vunpack.c.l.b16 %v259
    %v937 = vunpack.c.h.b16 %v259
    %v938 = vunpack.c.l.b16 %v260
    %v939 = vunpack.c.h.b16 %v260
    %v940 = vunpack.c.l.b16 %v261
    %v941 = vunpack.c.h.b16 %v261
    %v942 = vunpack.c.l.b16 %v262
    %v943 = vunpack.c.h.b16 %v262
    %v944 = vunpack.c.l.b16 %v263
    %v945 = vunpack.c.h.b16 %v263
    %v946 = vunpack.c.l.b16 %v264
    %v947 = vunpack.c.h.b16 %v264
    %v948 = vunpack.c.l.b16 %v265
    %v949 = vunpack.c.h.b16 %v265
    %v950 = vunpack.c.l.b16 %v266
    %v951 = vunpack.c.h.b16 %v266
    %v952 = vunpack.c.l.b16 %v267
    %v953 = vunpack.c.h.b16 %v267
    %v954 = vunpack.c.l.b16 %v268
    %v955 = vunpack.c.h.b16 %v268
    %v956 = vunpack.c.l.b16 %v269
    %v957 = vunpack.c.h.b16 %v269
    %v958 = vunpack.c.l.b16 %v270
    %v959 = vunpack.c.h.b16 %v270
    %v960 = vunpack.c.l.b16 %v271
    %v961 = vunpack.c.h.b16 %v271
    %v962 = vunpack.c.l.b16 %v272
    %v963 = vunpack.c.h.b16 %v272
    %v964 = vunpack.c.l.b16 %v273
    %v965 = vunpack.c.h.b16 %v273
    %v966 = vunpack.c.l.b16 %v274
    %v967 = vunpack.c.h.b16 %v274
    %v968 = vunpack.c.l.b16 %v275
    %v969 = vunpack.c.h.b16 %v275
    %v970 = vunpack.c.l.b16 %v276
    %v971 = vunpack.c.h.b16 %v276
    %v972 = vunpack.c.l.b16 %v277
    %v973 = vunpack.c.h.b16 %v277
    %v974 = vunpack.c.l.b16 %v278
    %v975 = vunpack.c.h.b16 %v278
    %v976 = vunpack.c.l.b16 %v279
    %v977 = vunpack.c.h.b16 %v279
    %v978 = vunpack.c.l.b16 %v280
    %v979 = vunpack.c.h.b16 %v280
    %v980 = vunpack.c.l.b16 %v281
    %v981 = vunpack.c.h.b16 %v281
    %v982 = vunpack.c.l.b16 %v282
    %v983 = vunpack.c.h.b16 %v282
    %v984 = vunpack.c.l.b16 %v283
    %v985 = vunpack.c.h.b16 %v283
    %v986 = vunpack.c.l.b16 %v284
    %v987 = vunpack.c.h.b16 %v284
    %v988 = vunpack.c.l.b16 %v285
    %v989 = vunpack.c.h.b16 %v285
    %v990 = vunpack.c.l.b16 %v286
    %v991 = vunpack.c.h.b16 %v286
    %v992 = vunpack.c.l.b16 %v287
    %v993 = vunpack.c.h.b16 %v287
    %v994 = vunpack.c.l.b16 %v288
    %v995 = vunpack.c.h.b16 %v288
    %v996 = vunpack.c.l.b16 %v289
    %v997 = vunpack.c.h.b16 %v289
    %v998 = vpack.c.b16 %v554, %v550
    %v999 = vpack.c.b16 %v555, %v551
    %v1000 = vpack.c.b16 %v556, %v552
    %v1001 = vpack.c.b16 %v557, %v553
    %v1002 = vpack.c.b16 %v562, %v558
    %v1003 = vpack.c.b16 %v563, %v559
    %v1004 = vpack.c.b16 %v564, %v560
    %v1005 = vpack.c.b16 %v565, %v561
    %v1006 = vpack.c.b16 %v570, %v566
    %v1007 = vpack.c.b16 %v571, %v567
    %v1008 = vpack.c.b16 %v572, %v568
    %v1009 = vpack.c.b16 %v573, %v569
    %v1010 = vpack.c.b16 %v578, %v574
    %v1011 = vpack.c.b16 %v579, %v575
    %v1012 = vpack.c.b16 %v580, %v576
    %v1013 = vpack.c.b16 %v581, %v577
    %v1014 = vpack.c.b16 %v586, %v582
    %v1015 = vpack.c.b16 %v587, %v583
    %v1016 = vpack.c.b16 %v588, %v584
    %v1017 = vpack.c.b16 %v589, %v585
    %v1018 = vpack.c.b16 %v594, %v590
    %v1019 = vpack.c.b16 %v595, %v591
    %v1020 = vpack.c.b16 %v596, %v592
    %v1021 = vpack.c.b16 %v597, %v593
    %v1022 = vpack.c.b16 %v602, %v598
    %v1023 = vpack.c.b16 %v603, %v599
    %v1024 = vpack.c.b16 %v604, %v600
    %v1025 = vpack.c.b16 %v605, %v601
    %v1026 = vpack.c.b16 %v610, %v606
    %v1027 = vpack.c.b16 %v611, %v607
    %v1028 = vpack.c.b16 %v612, %v608
    %v1029 = vpack.c.b16 %v613, %v609
    %v1030 = vpack.c.b16 %v618, %v614
    %v1031 = vpack.c.b16 %v619, %v615
    %v1032 = vpack.c.b16 %v620, %v616
    %v1033 = vpack.c.b16 %v621, %v617
    %v1034 = vpack.c.b16 %v626, %v622
    %v1035 = vpack.c.b16 %v627, %v623
    %v1036 = vpack.c.b16 %v628, %v624
    %v1037 = vpack.c.b16 %v629, %v625
    %v1038 = vpack.c.b16 %v634, %v630
    %v1039 = vpack.c.b16 %v635, %v631
    %v1040 = vpack.c.b16 %v636, %v632
    %v1041 = vpack.c.b16 %v637, %v633
    %v1042 = vpack.c.b16 %v642, %v638
    %v1043 = vpack.c.b16 %v643, %v639
    %v1044 = vpack.c.b16 %v644, %v640
    %v1045 = vpack.c.b16 %v645, %v641
    %v1046 = vpack.c.b16 %v650, %v646
    %v1047 = vpack.c.b16 %v651, %v647
    %v1048 = vpack.c.b16 %v652, %v648
    %v1049 = vpack.c.b16 %v653, %v649
    %v1050 = vpack.c.b16 %v658, %v654
    %v1051 = vpack.c.b16 %v659, %v655
    %v1052 = vpack.c.b16 %v660, %v656
    %v1053 = vpack.c.b16 %v661, %v657
    %v1054 = vpack.c.b16 %v666, %v662
    %v1055 = vpack.c.b16 %v667, %v663
    %v1056 = vpack.c.b16 %v668, %v664
    %v1057 = vpack.c.b16 %v669, %v665
    %v1058 = vpack.c.b16 %v674, %v670
    %v1059 = vpack.c.b16 %v675, %v671
    %v1060 = vpack.c.b16 %v676, %v672
    %v1061 = vpack.c.b16 %v677, %v673
    %v1062 = vpack.c.b16 %v682, %v678
    %v1063 = vpack.c.b16 %v683, %v679
    %v1064 = vpack.c.b16 %v684, %v680
    %v1065 = vpack.c.b16 %v685, %v681
    %v1066 = vpack.c.b16 %v690, %v686
    %v1067 = vpack.c.b16 %v691, %v687
    %v1068 = vpack.c.b16 %v692, %v688
    %v1069 = vpack.c.b16 %v693, %v689
    %v1070 = vpack.c.b16 %v698, %v694
    %v1071 = vpack.c.b16 %v699, %v695
    %v1072 = vpack.c.b16 %v700, %v696
    %v1073 = vpack.c.b16 %v701, %v697
    %v1074 = vpack.c.b16 %v706, %v702
    %v1075 = vpack.c.b16 %v707, %v703
    %v1076 = vpack.c.b16 %v708, %v704
    %v1077 = vpack.c.b16 %v709, %v705
    %v1078 = vpack.c.b16 %v714, %v710
    %v1079 = vpack.c.b16 %v715, %v711
    %v1080 = vpack.c.b16 %v716, %v712
    %v1081 = vpack.c.b16 %v717, %v713
    %v1082 = vpack.c.b16 %v722, %v718
    %v1083 = vpack.c.b16 %v723, %v719
    %v1084 = vpack.c.b16 %v724, %v720
    %v1085 = vpack.c.b16 %v725, %v721
    %v1086 = vpack.c.b16 %v730, %v726
    %v1087 = vpack.c.b16 %v731, %v727
    %v1088 = vpack.c.b16 %v732, %v728
    %v1089 = vpack.c.b16 %v733, %v729
    %v1090 = vpack.c.b16 %v738, %v734
    %v1091 = vpack.c.b16 %v739, %v735
    %v1092 = vpack.c.b16 %v740, %v736
    %v1093 = vpack.c.b16 %v741, %v737
    %v1094 = vpack.c.b16 %v746, %v742
    %v1095 = vpack.c.b16 %v747, %v743
    %v1096 = vpack.c.b16 %v748, %v744
    %v1097 = vpack.c.b16 %v749, %v745
    %v1098 = vpack.c.b16 %v754, %v750
    %v1099 = vpack.c.b16 %v755, %v751
    %v1100 = vpack.c.b16 %v756, %v752
    %v1101 = vpack.c.b16 %v757, %v753
    %v1102 = vpack.c.b16 %v762, %v758
    %v1103 = vpack.c.b16 %v763, %v759
    %v1104 = vpack.c.b16 %v764, %v760
    %v1105 = vpack.c.b16 %v765, %v761
    %v1106 = vpack.c.b16 %v770, %v766
    %v1107 = vpack.c.b16 %v771, %v767
    %v1108 = vpack.c.b16 %v772, %v768
    %v1109 = vpack.c.b16 %v773, %v769
    %v1110 = vpack.c.b16 %v778, %v774
    %v1111 = vpack.c.b16 %v779, %v775
    %v1112 = vpack.c.b16 %v780, %v776
    %v1113 = vpack.c.b16 %v781, %v777
    %v1114 = vpack.c.b16 %v786, %v782
    %v1115 = vpack.c.b16 %v787, %v783
    %v1116 = vpack.c.b16 %v788, %v784
    %v1117 = vpack.c.b16 %v789, %v785
    %v1118 = vpack.c.b16 %v794, %v790
    %v1119 = vpack.c.b16 %v795, %v791
    %v1120 = vpack.c.b16 %v796, %v792
    %v1121 = vpack.c.b16 %v797, %v793
    %v1122 = vpack.c.b16 %v802, %v798
    %v1123 = vpack.c.b16 %v803, %v799
    %v1124 = vpack.c.b16 %v804, %v800
    %v1125 = vpack.c.b16 %v805, %v801
    %v1126 = vpack.c.b16 %v810, %v806
    %v1127 = vpack.c.b16 %v811, %v807
    %v1128 = vpack.c.b16 %v812, %v808
    %v1129 = vpack.c.b16 %v813, %v809
    %v1130 = vpack.c.b16 %v818, %v814
    %v1131 = vpack.c.b16 %v819, %v815
    %v1132 = vpack.c.b16 %v820, %v816
    %v1133 = vpack.c.b16 %v821, %v817
    %v1134 = vpack.c.b16 %v826, %v822
    %v1135 = vpack.c.b16 %v827, %v823
    %v1136 = vpack.c.b16 %v828, %v824
    %v1137 = vpack.c.b16 %v829, %v825
    %v1138 = vpack.c.b16 %v834, %v830
    %v1139 = vpack.c.b16 %v835, %v831
    %v1140 = vpack.c.b16 %v836, %v832
    %v1141 = vpack.c.b16 %v837, %v833
    %v1142 = vpack.c.b16 %v842, %v838
    %v1143 = vpack.c.b16 %v843, %v839
    %v1144 = vpack.c.b16 %v844, %v840
    %v1145 = vpack.c.b16 %v845, %v841
    %v1146 = vpack.c.b16 %v850, %v846
    %v1147 = vpack.c.b16 %v851, %v847
    %v1148 = vpack.c.b16 %v852, %v848
    %v1149 = vpack.c.b16 %v853, %v849
    %v1150 = vpack.c.b16 %v858, %v854
    %v1151 = vpack.c.b16 %v859, %v855
    %v1152 = vpack.c.b16 %v860, %v856
    %v1153 = vpack.c.b16 %v861, %v857
    %v1154 = vpack.c.b16 %v866, %v862
    %v1155 = vpack.c.b16 %v867, %v863
    %v1156 = vpack.c.b16 %v868, %v864
    %v1157 = vpack.c.b16 %v869, %v865
    %v1158 = vpack.c.b16 %v874, %v870
    %v1159 = vpack.c.b16 %v875, %v871
    %v1160 = vpack.c.b16 %v876, %v872
    %v1161 = vpack.c.b16 %v877, %v873
    %v1162 = vpack.c.b16 %v882, %v878
    %v1163 = vpack.c.b16 %v883, %v879
    %v1164 = vpack.c.b16 %v884, %v880
    %v1165 = vpack.c.b16 %v885, %v881
    %v1166 = vpack.c.b16 %v890, %v886
    %v1167 = vpack.c.b16 %v891, %v887
    %v1168 = vpack.c.b16 %v892, %v888
    %v1169 = vpack.c.b16 %v893, %v889
    %v1170 = vpack.c.b16 %v898, %v894
    %v1171 = vpack.c.b16 %v899, %v895
    %v1172 = vpack.c.b16 %v900, %v896
    %v1173 = vpack.c.b16 %v901, %v897
    %v1174 = vpack.c.b16 %v906, %v902
    %v1175 = vpack.c.b16 %v907, %v903
    %v1176 = vpack.c.b16 %v908, %v904
    %v1177 = vpack.c.b16 %v909, %v905
    %v1178 = vpack.c.b16 %v914, %v910
    %v1179 = vpack.c.b16 %v915, %v911
    %v1180 = vpack.c.b16 %v916, %v912
    %v1181 = vpack.c.b16 %v917, %v913
    %v1182 = vpack.c.b16 %v922, %v918
    %v1183 = vpack.c.b16 %v923, %v919
    %v1184 = vpack.c.b16 %v924, %v920
    %v1185 = vpack.c.b16 %v925, %v921
    %v1186 = vpack.c.b16 %v930, %v926
    %v1187 = vpack.c.b16 %v931, %v927
    %v1188 = vpack.c.b16 %v932, %v928
    %v1189 = vpack.c.b16 %v933, %v929
    %v1190 = vpack.c.b16 %v938, %v934
    %v1191 = vpack.c.b16 %v939, %v935
    %v1192 = vpack.c.b16 %v940, %v936
    %v1193 = vpack.c.b16 %v941, %v937
    %v1194 = vpack.c.b16 %v946, %v942
    %v1195 = vpack.c.b16 %v947, %v943
    %v1196 = vpack.c.b16 %v948, %v944
    %v1197 = vpack.c.b16 %v949, %v945
    %v1198 = vpack.c.b16 %v954, %v950
    %v1199 = vpack.c.b16 %v955, %v951
    %v1200 = vpack.c.b16 %v956, %v952
    %v1201 = vpack.c.b16 %v957, %v953
    %v1202 = vpack.c.b16 %v962, %v958
    %v1203 = vpack.c.b16 %v963, %v959
    %v1204 = vpack.c.b16 %v964, %v960
    %v1205 = vpack.c.b16 %v965, %v961
    %v1206 = vpack.c.b16 %v970, %v966
    %v1207 = vpack.c.b16 %v971, %v967
    %v1208 = vpack.c.b16 %v972, %v968
    %v1209 = vpack.c.b16 %v973, %v969
    %v1210 = vpack.c.b16 %v978, %v974
    %v1211 = vpack.c.b16 %v979, %v975
    %v1212 = vpack.c.b16 %v980, %v976
    %v1213 = vpack.c.b16 %v981, %v977
    %v1214 = vpack.c.b16 %v986, %v982
    %v1215 = vpack.c.b16 %v987, %v983
    %v1216 = vpack.c.b16 %v988, %v984
    %v1217 = vpack.c.b16 %v989, %v985
    %v1218 = vpack.c.b16 %v994, %v990
    %v1219 = vpack.c.b16 %v995, %v991
    %v1220 = vpack.c.b16 %v996, %v992
    %v1221 = vpack.c.b16 %v997, %v993
    %1446 = vmatpush.bf16.msra.mxu0 %v1026
    %1447 = vmatpush.bf16.msra.mxu0 %v1022
    %1448 = vmatpush.bf16.msra.mxu0 %v1018
    %1449 = vmatpush.bf16.msra.mxu0 %v1014
    %1450 = vmatpush.bf16.msra.mxu0 %v1010
    %1451 = vmatpush.bf16.msra.mxu0 %v1006
    %1452 = vmatpush.bf16.msra.mxu0 %v1002
    %1453 = vmatpush.bf16.msra.mxu0 %v998
    %1454 = vmatmul.bf16.gmra.mxu0 %v312
    %v1455 = vpop.f32.mrf.mxu0
    %v1456 = vadd.f32 0.0, %v1455
    %v1457 = vpop.f32.mrf.mxu0
    %v1458 = vadd.f32 0.0, %v1457
    %1459 = vdwg.mxu0
    %1460 = vmatpush.bf16.msra.mxu0 %v1058
    %1461 = vmatpush.bf16.msra.mxu0 %v1054
    %1462 = vmatpush.bf16.msra.mxu0 %v1050
    %1463 = vmatpush.bf16.msra.mxu0 %v1046
    %1464 = vmatpush.bf16.msra.mxu0 %v1042
    %1465 = vmatpush.bf16.msra.mxu0 %v1038
    %1466 = vmatpush.bf16.msra.mxu0 %v1034
    %1467 = vmatpush.bf16.msra.mxu0 %v1030
    %1468 = vmatmul.bf16.gmra.mxu0 %v313
    %v1469 = vpop.f32.mrf.mxu0
    %v1470 = vadd.f32 %v1456, %v1469
    %v1471 = vpop.f32.mrf.mxu0
    %v1472 = vadd.f32 %v1458, %v1471
    %1473 = vdwg.mxu0
    %1474 = vmatpush.bf16.msra.mxu0 %v1090
    %1475 = vmatpush.bf16.msra.mxu0 %v1086
    %1476 = vmatpush.bf16.msra.mxu0 %v1082
    %1477 = vmatpush.bf16.msra.mxu0 %v1078
    %1478 = vmatpush.bf16.msra.mxu0 %v1074
    %1479 = vmatpush.bf16.msra.mxu0 %v1070
    %1480 = vmatpush.bf16.msra.mxu0 %v1066
    %1481 = vmatpush.bf16.msra.mxu0 %v1062
    %1482 = vmatmul.bf16.gmra.mxu0 %v314
    %v1483 = vpop.f32.mrf.mxu0
    %v1484 = vadd.f32 %v1470, %v1483
    %v1485 = vpop.f32.mrf.mxu0
    %v1486 = vadd.f32 %v1472, %v1485
    %1487 = vdwg.mxu0
    %1488 = vmatpush.bf16.msra.mxu0 %v1122
    %1489 = vmatpush.bf16.msra.mxu0 %v1118
    %1490 = vmatpush.bf16.msra.mxu0 %v1114
    %1491 = vmatpush.bf16.msra.mxu0 %v1110
    %1492 = vmatpush.bf16.msra.mxu0 %v1106
    %1493 = vmatpush.bf16.msra.mxu0 %v1102
    %1494 = vmatpush.bf16.msra.mxu0 %v1098
    %1495 = vmatpush.bf16.msra.mxu0 %v1094
    %1496 = vmatmul.bf16.gmra.mxu0 %v315
    %v1497 = vpop.f32.mrf.mxu0
    %v1498 = vadd.f32 %v1484, %v1497
    %v1499 = vpop.f32.mrf.mxu0
    %v1500 = vadd.f32 %v1486, %v1499
    %1501 = vdwg.mxu0
    %1502 = vmatpush.bf16.msra.mxu0 %v1154
    %1503 = vmatpush.bf16.msra.mxu0 %v1150
    %1504 = vmatpush.bf16.msra.mxu0 %v1146
    %1505 = vmatpush.bf16.msra.mxu0 %v1142
    %1506 = vmatpush.bf16.msra.mxu0 %v1138
    %1507 = vmatpush.bf16.msra.mxu0 %v1134
    %1508 = vmatpush.bf16.msra.mxu0 %v1130
    %1509 = vmatpush.bf16.msra.mxu0 %v1126
    %1510 = vmatmul.bf16.gmra.mxu0 %v316
    %v1511 = vpop.f32.mrf.mxu0
    %v1512 = vadd.f32 %v1498, %v1511
    %v1513 = vpop.f32.mrf.mxu0
    %v1514 = vadd.f32 %v1500, %v1513
    %1515 = vdwg.mxu0
    %1516 = vmatpush.bf16.msra.mxu0 %v1186
    %1517 = vmatpush.bf16.msra.mxu0 %v1182
    %1518 = vmatpush.bf16.msra.mxu0 %v1178
    %1519 = vmatpush.bf16.msra.mxu0 %v1174
    %1520 = vmatpush.bf16.msra.mxu0 %v1170
    %1521 = vmatpush.bf16.msra.mxu0 %v1166
    %1522 = vmatpush.bf16.msra.mxu0 %v1162
    %1523 = vmatpush.bf16.msra.mxu0 %v1158
    %1524 = vmatmul.bf16.gmra.mxu0 %v317
    %v1525 = vpop.f32.mrf.mxu0
    %v1526 = vadd.f32 %v1512, %v1525
    %v1527 = vpop.f32.mrf.mxu0
    %v1528 = vadd.f32 %v1514, %v1527
    %1529 = vdwg.mxu0
    %1530 = vmatpush.bf16.msra.mxu0 %v1218
    %1531 = vmatpush.bf16.msra.mxu0 %v1214
    %1532 = vmatpush.bf16.msra.mxu0 %v1210
    %1533 = vmatpush.bf16.msra.mxu0 %v1206
    %1534 = vmatpush.bf16.msra.mxu0 %v1202
    %1535 = vmatpush.bf16.msra.mxu0 %v1198
    %1536 = vmatpush.bf16.msra.mxu0 %v1194
    %1537 = vmatpush.bf16.msra.mxu0 %v1190
    %1538 = vmatmul.bf16.gmra.mxu0 %v318
    %v1539 = vpop.f32.mrf.mxu0
    %v1540 = vadd.f32 %v1526, %v1539
    %v1541 = vpop.f32.mrf.mxu0
    %v1542 = vadd.f32 %v1528, %v1541
    %1543 = vdwg.mxu0
    %1544 = vmatpush.bf16.msra.mxu0 %v1027
    %1545 = vmatpush.bf16.msra.mxu0 %v1023
    %1546 = vmatpush.bf16.msra.mxu0 %v1019
    %1547 = vmatpush.bf16.msra.mxu0 %v1015
    %1548 = vmatpush.bf16.msra.mxu0 %v1011
    %1549 = vmatpush.bf16.msra.mxu0 %v1007
    %1550 = vmatpush.bf16.msra.mxu0 %v1003
    %1551 = vmatpush.bf16.msra.mxu0 %v999
    %1552 = vmatmul.bf16.gmra.mxu0 %v312
    %v1553 = vpop.f32.mrf.mxu0
    %v1554 = vadd.f32 0.0, %v1553
    %v1555 = vpop.f32.mrf.mxu0
    %v1556 = vadd.f32 0.0, %v1555
    %1557 = vdwg.mxu0
    %1558 = vmatpush.bf16.msra.mxu0 %v1059
    %1559 = vmatpush.bf16.msra.mxu0 %v1055
    %1560 = vmatpush.bf16.msra.mxu0 %v1051
    %1561 = vmatpush.bf16.msra.mxu0 %v1047
    %1562 = vmatpush.bf16.msra.mxu0 %v1043
    %1563 = vmatpush.bf16.msra.mxu0 %v1039
    %1564 = vmatpush.bf16.msra.mxu0 %v1035
    %1565 = vmatpush.bf16.msra.mxu0 %v1031
    %1566 = vmatmul.bf16.gmra.mxu0 %v313
    %v1567 = vpop.f32.mrf.mxu0
    %v1568 = vadd.f32 %v1554, %v1567
    %v1569 = vpop.f32.mrf.mxu0
    %v1570 = vadd.f32 %v1556, %v1569
    %1571 = vdwg.mxu0
    %1572 = vmatpush.bf16.msra.mxu0 %v1091
    %1573 = vmatpush.bf16.msra.mxu0 %v1087
    %1574 = vmatpush.bf16.msra.mxu0 %v1083
    %1575 = vmatpush.bf16.msra.mxu0 %v1079
    %1576 = vmatpush.bf16.msra.mxu0 %v1075
    %1577 = vmatpush.bf16.msra.mxu0 %v1071
    %1578 = vmatpush.bf16.msra.mxu0 %v1067
    %1579 = vmatpush.bf16.msra.mxu0 %v1063
    %1580 = vmatmul.bf16.gmra.mxu0 %v314
    %v1581 = vpop.f32.mrf.mxu0
    %v1582 = vadd.f32 %v1568, %v1581
    %v1583 = vpop.f32.mrf.mxu0
    %v1584 = vadd.f32 %v1570, %v1583
    %1585 = vdwg.mxu0
    %1586 = vmatpush.bf16.msra.mxu0 %v1123
    %1587 = vmatpush.bf16.msra.mxu0 %v1119
    %1588 = vmatpush.bf16.msra.mxu0 %v1115
    %1589 = vmatpush.bf16.msra.mxu0 %v1111
    %1590 = vmatpush.bf16.msra.mxu0 %v1107
    %1591 = vmatpush.bf16.msra.mxu0 %v1103
    %1592 = vmatpush.bf16.msra.mxu0 %v1099
    %1593 = vmatpush.bf16.msra.mxu0 %v1095
    %1594 = vmatmul.bf16.gmra.mxu0 %v315
    %v1595 = vpop.f32.mrf.mxu0
    %v1596 = vadd.f32 %v1582, %v1595
    %v1597 = vpop.f32.mrf.mxu0
    %v1598 = vadd.f32 %v1584, %v1597
    %1599 = vdwg.mxu0
    %1600 = vmatpush.bf16.msra.mxu0 %v1155
    %1601 = vmatpush.bf16.msra.mxu0 %v1151
    %1602 = vmatpush.bf16.msra.mxu0 %v1147
    %1603 = vmatpush.bf16.msra.mxu0 %v1143
    %1604 = vmatpush.bf16.msra.mxu0 %v1139
    %1605 = vmatpush.bf16.msra.mxu0 %v1135
    %1606 = vmatpush.bf16.msra.mxu0 %v1131
    %1607 = vmatpush.bf16.msra.mxu0 %v1127
    %1608 = vmatmul.bf16.gmra.mxu0 %v316
    %v1609 = vpop.f32.mrf.mxu0
    %v1610 = vadd.f32 %v1596, %v1609
    %v1611 = vpop.f32.mrf.mxu0
    %v1612 = vadd.f32 %v1598, %v1611
    %1613 = vdwg.mxu0
    %1614 = vmatpush.bf16.msra.mxu0 %v1187
    %1615 = vmatpush.bf16.msra.mxu0 %v1183
    %1616 = vmatpush.bf16.msra.mxu0 %v1179
    %1617 = vmatpush.bf16.msra.mxu0 %v1175
    %1618 = vmatpush.bf16.msra.mxu0 %v1171
    %1619 = vmatpush.bf16.msra.mxu0 %v1167
    %1620 = vmatpush.bf16.msra.mxu0 %v1163
    %1621 = vmatpush.bf16.msra.mxu0 %v1159
    %1622 = vmatmul.bf16.gmra.mxu0 %v317
    %v1623 = vpop.f32.mrf.mxu0
    %v1624 = vadd.f32 %v1610, %v1623
    %v1625 = vpop.f32.mrf.mxu0
    %v1626 = vadd.f32 %v1612, %v1625
    %1627 = vdwg.mxu0
    %1628 = vmatpush.bf16.msra.mxu0 %v1219
    %1629 = vmatpush.bf16.msra.mxu0 %v1215
    %1630 = vmatpush.bf16.msra.mxu0 %v1211
    %1631 = vmatpush.bf16.msra.mxu0 %v1207
    %1632 = vmatpush.bf16.msra.mxu0 %v1203
    %1633 = vmatpush.bf16.msra.mxu0 %v1199
    %1634 = vmatpush.bf16.msra.mxu0 %v1195
    %1635 = vmatpush.bf16.msra.mxu0 %v1191
    %1636 = vmatmul.bf16.gmra.mxu0 %v318
    %v1637 = vpop.f32.mrf.mxu0
    %v1638 = vadd.f32 %v1624, %v1637
    %v1639 = vpop.f32.mrf.mxu0
    %v1640 = vadd.f32 %v1626, %v1639
    %1641 = vdwg.mxu0
    %1642 = vmatpush.bf16.msra.mxu0 %v1028
    %1643 = vmatpush.bf16.msra.mxu0 %v1024
    %1644 = vmatpush.bf16.msra.mxu0 %v1020
    %1645 = vmatpush.bf16.msra.mxu0 %v1016
    %1646 = vmatpush.bf16.msra.mxu0 %v1012
    %1647 = vmatpush.bf16.msra.mxu0 %v1008
    %1648 = vmatpush.bf16.msra.mxu0 %v1004
    %1649 = vmatpush.bf16.msra.mxu0 %v1000
    %1650 = vmatmul.bf16.gmra.mxu0 %v312
    %v1651 = vpop.f32.mrf.mxu0
    %v1652 = vadd.f32 0.0, %v1651
    %v1653 = vpop.f32.mrf.mxu0
    %v1654 = vadd.f32 0.0, %v1653
    %1655 = vdwg.mxu0
    %1656 = vmatpush.bf16.msra.mxu0 %v1060
    %1657 = vmatpush.bf16.msra.mxu0 %v1056
    %1658 = vmatpush.bf16.msra.mxu0 %v1052
    %1659 = vmatpush.bf16.msra.mxu0 %v1048
    %1660 = vmatpush.bf16.msra.mxu0 %v1044
    %1661 = vmatpush.bf16.msra.mxu0 %v1040
    %1662 = vmatpush.bf16.msra.mxu0 %v1036
    %1663 = vmatpush.bf16.msra.mxu0 %v1032
    %1664 = vmatmul.bf16.gmra.mxu0 %v313
    %v1665 = vpop.f32.mrf.mxu0
    %v1666 = vadd.f32 %v1652, %v1665
    %v1667 = vpop.f32.mrf.mxu0
    %v1668 = vadd.f32 %v1654, %v1667
    %1669 = vdwg.mxu0
    %1670 = vmatpush.bf16.msra.mxu0 %v1092
    %1671 = vmatpush.bf16.msra.mxu0 %v1088
    %1672 = vmatpush.bf16.msra.mxu0 %v1084
    %1673 = vmatpush.bf16.msra.mxu0 %v1080
    %1674 = vmatpush.bf16.msra.mxu0 %v1076
    %1675 = vmatpush.bf16.msra.mxu0 %v1072
    %1676 = vmatpush.bf16.msra.mxu0 %v1068
    %1677 = vmatpush.bf16.msra.mxu0 %v1064
    %1678 = vmatmul.bf16.gmra.mxu0 %v314
    %v1679 = vpop.f32.mrf.mxu0
    %v1680 = vadd.f32 %v1666, %v1679
    %v1681 = vpop.f32.mrf.mxu0
    %v1682 = vadd.f32 %v1668, %v1681
    %1683 = vdwg.mxu0
    %1684 = vmatpush.bf16.msra.mxu0 %v1124
    %1685 = vmatpush.bf16.msra.mxu0 %v1120
    %1686 = vmatpush.bf16.msra.mxu0 %v1116
    %1687 = vmatpush.bf16.msra.mxu0 %v1112
    %1688 = vmatpush.bf16.msra.mxu0 %v1108
    %1689 = vmatpush.bf16.msra.mxu0 %v1104
    %1690 = vmatpush.bf16.msra.mxu0 %v1100
    %1691 = vmatpush.bf16.msra.mxu0 %v1096
    %1692 = vmatmul.bf16.gmra.mxu0 %v315
    %v1693 = vpop.f32.mrf.mxu0
    %v1694 = vadd.f32 %v1680, %v1693
    %v1695 = vpop.f32.mrf.mxu0
    %v1696 = vadd.f32 %v1682, %v1695
    %1697 = vdwg.mxu0
    %1698 = vmatpush.bf16.msra.mxu0 %v1156
    %1699 = vmatpush.bf16.msra.mxu0 %v1152
    %1700 = vmatpush.bf16.msra.mxu0 %v1148
    %1701 = vmatpush.bf16.msra.mxu0 %v1144
    %1702 = vmatpush.bf16.msra.mxu0 %v1140
    %1703 = vmatpush.bf16.msra.mxu0 %v1136
    %1704 = vmatpush.bf16.msra.mxu0 %v1132
    %1705 = vmatpush.bf16.msra.mxu0 %v1128
    %1706 = vmatmul.bf16.gmra.mxu0 %v316
    %v1707 = vpop.f32.mrf.mxu0
    %v1708 = vadd.f32 %v1694, %v1707
    %v1709 = vpop.f32.mrf.mxu0
    %v1710 = vadd.f32 %v1696, %v1709
    %1711 = vdwg.mxu0
    %1712 = vmatpush.bf16.msra.mxu0 %v1188
    %1713 = vmatpush.bf16.msra.mxu0 %v1184
    %1714 = vmatpush.bf16.msra.mxu0 %v1180
    %1715 = vmatpush.bf16.msra.mxu0 %v1176
    %1716 = vmatpush.bf16.msra.mxu0 %v1172
    %1717 = vmatpush.bf16.msra.mxu0 %v1168
    %1718 = vmatpush.bf16.msra.mxu0 %v1164
    %1719 = vmatpush.bf16.msra.mxu0 %v1160
    %1720 = vmatmul.bf16.gmra.mxu0 %v317
    %v1721 = vpop.f32.mrf.mxu0
    %v1722 = vadd.f32 %v1708, %v1721
    %v1723 = vpop.f32.mrf.mxu0
    %v1724 = vadd.f32 %v1710, %v1723
    %1725 = vdwg.mxu0
    %1726 = vmatpush.bf16.msra.mxu0 %v1220
    %1727 = vmatpush.bf16.msra.mxu0 %v1216
    %1728 = vmatpush.bf16.msra.mxu0 %v1212
    %1729 = vmatpush.bf16.msra.mxu0 %v1208
    %1730 = vmatpush.bf16.msra.mxu0 %v1204
    %1731 = vmatpush.bf16.msra.mxu0 %v1200
    %1732 = vmatpush.bf16.msra.mxu0 %v1196
    %1733 = vmatpush.bf16.msra.mxu0 %v1192
    %1734 = vmatmul.bf16.gmra.mxu0 %v318
    %v1735 = vpop.f32.mrf.mxu0
    %v1736 = vadd.f32 %v1722, %v1735
    %v1737 = vpop.f32.mrf.mxu0
    %v1738 = vadd.f32 %v1724, %v1737
    %1739 = vdwg.mxu0
    %1740 = vmatpush.bf16.msra.mxu0 %v1029
    %1741 = vmatpush.bf16.msra.mxu0 %v1025
    %1742 = vmatpush.bf16.msra.mxu0 %v1021
    %1743 = vmatpush.bf16.msra.mxu0 %v1017
    %1744 = vmatpush.bf16.msra.mxu0 %v1013
    %1745 = vmatpush.bf16.msra.mxu0 %v1009
    %1746 = vmatpush.bf16.msra.mxu0 %v1005
    %1747 = vmatpush.bf16.msra.mxu0 %v1001
    %1748 = vmatmul.bf16.gmra.mxu0 %v312
    %v1749 = vpop.f32.mrf.mxu0
    %v1750 = vadd.f32 0.0, %v1749
    %v1751 = vpop.f32.mrf.mxu0
    %v1752 = vadd.f32 0.0, %v1751
    %1753 = vdwg.mxu0
    %1754 = vmatpush.bf16.msra.mxu0 %v1061
    %1755 = vmatpush.bf16.msra.mxu0 %v1057
    %1756 = vmatpush.bf16.msra.mxu0 %v1053
    %1757 = vmatpush.bf16.msra.mxu0 %v1049
    %1758 = vmatpush.bf16.msra.mxu0 %v1045
    %1759 = vmatpush.bf16.msra.mxu0 %v1041
    %1760 = vmatpush.bf16.msra.mxu0 %v1037
    %1761 = vmatpush.bf16.msra.mxu0 %v1033
    %1762 = vmatmul.bf16.gmra.mxu0 %v313
    %v1763 = vpop.f32.mrf.mxu0
    %v1764 = vadd.f32 %v1750, %v1763
    %v1765 = vpop.f32.mrf.mxu0
    %v1766 = vadd.f32 %v1752, %v1765
    %1767 = vdwg.mxu0
    %1768 = vmatpush.bf16.msra.mxu0 %v1093
    %1769 = vmatpush.bf16.msra.mxu0 %v1089
    %1770 = vmatpush.bf16.msra.mxu0 %v1085
    %1771 = vmatpush.bf16.msra.mxu0 %v1081
    %1772 = vmatpush.bf16.msra.mxu0 %v1077
    %1773 = vmatpush.bf16.msra.mxu0 %v1073
    %1774 = vmatpush.bf16.msra.mxu0 %v1069
    %1775 = vmatpush.bf16.msra.mxu0 %v1065
    %1776 = vmatmul.bf16.gmra.mxu0 %v314
    %v1777 = vpop.f32.mrf.mxu0
    %v1778 = vadd.f32 %v1764, %v1777
    %v1779 = vpop.f32.mrf.mxu0
    %v1780 = vadd.f32 %v1766, %v1779
    %1781 = vdwg.mxu0
    %1782 = vmatpush.bf16.msra.mxu0 %v1125
    %1783 = vmatpush.bf16.msra.mxu0 %v1121
    %1784 = vmatpush.bf16.msra.mxu0 %v1117
    %1785 = vmatpush.bf16.msra.mxu0 %v1113
    %1786 = vmatpush.bf16.msra.mxu0 %v1109
    %1787 = vmatpush.bf16.msra.mxu0 %v1105
    %1788 = vmatpush.bf16.msra.mxu0 %v1101
    %1789 = vmatpush.bf16.msra.mxu0 %v1097
    %1790 = vmatmul.bf16.gmra.mxu0 %v315
    %v1791 = vpop.f32.mrf.mxu0
    %v1792 = vadd.f32 %v1778, %v1791
    %v1793 = vpop.f32.mrf.mxu0
    %v1794 = vadd.f32 %v1780, %v1793
    %1795 = vdwg.mxu0
    %1796 = vmatpush.bf16.msra.mxu0 %v1157
    %1797 = vmatpush.bf16.msra.mxu0 %v1153
    %1798 = vmatpush.bf16.msra.mxu0 %v1149
    %1799 = vmatpush.bf16.msra.mxu0 %v1145
    %1800 = vmatpush.bf16.msra.mxu0 %v1141
    %1801 = vmatpush.bf16.msra.mxu0 %v1137
    %1802 = vmatpush.bf16.msra.mxu0 %v1133
    %1803 = vmatpush.bf16.msra.mxu0 %v1129
    %1804 = vmatmul.bf16.gmra.mxu0 %v316
    %v1805 = vpop.f32.mrf.mxu0
    %v1806 = vadd.f32 %v1792, %v1805
    %v1807 = vpop.f32.mrf.mxu0
    %v1808 = vadd.f32 %v1794, %v1807
    %1809 = vdwg.mxu0
    %1810 = vmatpush.bf16.msra.mxu0 %v1189
    %1811 = vmatpush.bf16.msra.mxu0 %v1185
    %1812 = vmatpush.bf16.msra.mxu0 %v1181
    %1813 = vmatpush.bf16.msra.mxu0 %v1177
    %1814 = vmatpush.bf16.msra.mxu0 %v1173
    %1815 = vmatpush.bf16.msra.mxu0 %v1169
    %1816 = vmatpush.bf16.msra.mxu0 %v1165
    %1817 = vmatpush.bf16.msra.mxu0 %v1161
    %1818 = vmatmul.bf16.gmra.mxu0 %v317
    %v1819 = vpop.f32.mrf.mxu0
    %v1820 = vadd.f32 %v1806, %v1819
    %v1821 = vpop.f32.mrf.mxu0
    %v1822 = vadd.f32 %v1808, %v1821
    %1823 = vdwg.mxu0
    %1824 = vmatpush.bf16.msra.mxu0 %v1221
    %1825 = vmatpush.bf16.msra.mxu0 %v1217
    %1826 = vmatpush.bf16.msra.mxu0 %v1213
    %1827 = vmatpush.bf16.msra.mxu0 %v1209
    %1828 = vmatpush.bf16.msra.mxu0 %v1205
    %1829 = vmatpush.bf16.msra.mxu0 %v1201
    %1830 = vmatpush.bf16.msra.mxu0 %v1197
    %1831 = vmatpush.bf16.msra.mxu0 %v1193
    %1832 = vmatmul.bf16.gmra.mxu0 %v318
    %v1833 = vpop.f32.mrf.mxu0
    %v1834 = vadd.f32 %v1820, %v1833
    %v1835 = vpop.f32.mrf.mxu0
    %v1836 = vadd.f32 %v1822, %v1835
    %1837 = vdwg.mxu0
    %v1838 = vpack.c.bf16 %v1638, %v1540
    %v1839 = vpack.c.bf16 %v1834, %v1736
    %v1840 = vpack.c.bf16 %v1640, %v1542
    %v1841 = vpack.c.bf16 %v1836, %v1738
    %v1842 = vld [vmem:[%s2] sm:$0xf]
    %1844 = vst [vmem:[#allocation1] ss:$9 sm:$0xff] %v1842
    %v1845 = vld [vmem:[#allocation1] sm:$0xff]
    %v1846 = vld [vmem:[#allocation1 + $0x9] sm:$0xff]
    %v1847 = vld [vmem:[#allocation1 + $0x12] sm:$0xff]
    %v1848 = vld [vmem:[#allocation1 + $0x1b] sm:$0xff]
    %v1849 = vpack.i.b16 %v1845, %v1845
    %v1851 = vperm.slane %v1849, 0
    %v1852 = vpack.i.b16 %v1846, %v1846
    %v1854 = vperm.slane %v1852, 0
    %v1855 = vpack.i.b16 %v1847, %v1847
    %v1857 = vperm.slane %v1855, 0
    %v1858 = vpack.i.b16 %v1848, %v1848
    %v1860 = vperm.slane %v1858, 0
    %v1861 = vunpack.c.l.bf16 %v1838
    %v1862 = vunpack.c.h.bf16 %v1838
    %v1863 = vunpack.c.l.bf16 %v1839
    %v1864 = vunpack.c.h.bf16 %v1839
    %v1865 = vunpack.c.l.bf16 %v1840
    %v1866 = vunpack.c.h.bf16 %v1840
    %v1867 = vunpack.c.l.bf16 %v1841
    %v1868 = vunpack.c.h.bf16 %v1841
    %v1869 = vunpack.c.l.bf16 %v1851
    %v1870 = vunpack.c.l.bf16 %v1854
    %v1871 = vunpack.c.l.bf16 %v1857
    %v1872 = vunpack.c.l.bf16 %v1860
    %v1873 = vadd.f32 %v1861, %v1869
    %v1874 = vadd.f32 %v1862, %v1870
    %v1875 = vadd.f32 %v1863, %v1871
    %v1876 = vadd.f32 %v1864, %v1872
    %v1877 = vadd.f32 %v1865, %v1869
    %v1878 = vadd.f32 %v1866, %v1870
    %v1879 = vadd.f32 %v1867, %v1871
    %v1880 = vadd.f32 %v1868, %v1872
    %v1881 = vpack.c.bf16 %v1874, %v1873
    %v1882 = vpack.c.bf16 %v1876, %v1875
    %v1883 = vpack.c.bf16 %v1878, %v1877
    %v1884 = vpack.c.bf16 %v1880, %v1879
    %v1885 = vunpack.c.l.bf16 %v1881
    %v1886 = vunpack.c.h.bf16 %v1881
    %v1887 = vunpack.c.l.bf16 %v1882
    %v1888 = vunpack.c.h.bf16 %v1882
    %v1889 = vunpack.c.l.bf16 %v1883
    %v1890 = vunpack.c.h.bf16 %v1883
    %v1891 = vunpack.c.l.bf16 %v1884
    %v1892 = vunpack.c.h.bf16 %v1884
    %v1893 = vmax.f32 %v1885, 0.0
    %v1894 = vmax.f32 %v1886, 0.0
    %v1895 = vmax.f32 %v1887, 0.0
    %v1896 = vmax.f32 %v1888, 0.0
    %v1897 = vmax.f32 %v1889, 0.0
    %v1898 = vmax.f32 %v1890, 0.0
    %v1899 = vmax.f32 %v1891, 0.0
    %v1900 = vmax.f32 %v1892, 0.0
    %v1901 = vpack.c.bf16 %v1897, %v1893
    %v1902 = vpack.c.bf16 %v1898, %v1894
    %v1903 = vpack.c.bf16 %v1899, %v1895
    %v1904 = vpack.c.bf16 %v1900, %v1896
    %v1905 = vld [vmem:[#allocation4] sm:$0xff]
    %v1906 = vld [vmem:[#allocation4 + $0x8] sm:$0xff]
    %v1907 = vld [vmem:[#allocation4 + $0x10] sm:$0xff]
    %v1908 = vld [vmem:[#allocation4 + $0x18] sm:$0xff]
    %v1909 = vld [vmem:[#allocation4 + $0x20] sm:$0xff]
    %v1910 = vld [vmem:[#allocation4 + $0x28] sm:$0xff]
    %v1911 = vld [vmem:[#allocation4 + $0x30] sm:$0xff]
    %v1912 = vld [vmem:[#allocation4 + $0x38] sm:$0xff]
    %v1913 = vld [vmem:[#allocation4 + $0x40] sm:$0xff]
    %v1914 = vld [vmem:[#allocation4 + $0x48] sm:$0xff]
    %v1915 = vld [vmem:[#allocation4 + $0x50] sm:$0xff]
    %v1916 = vld [vmem:[#allocation4 + $0x58] sm:$0xff]
    %v1917 = vld [vmem:[#allocation4 + $0x60] sm:$0xff]
    %v1918 = vld [vmem:[#allocation4 + $0x68] sm:$0xff]
    %v1919 = vld [vmem:[#allocation4 + $0x70] sm:$0xff]
    %v1920 = vld [vmem:[#allocation4 + $0x78] sm:$0xff]
    %v1921 = vld [vmem:[#allocation4 + $0x80] sm:$0xff]
    %v1922 = vld [vmem:[#allocation4 + $0x88] sm:$0xff]
    %v1923 = vld [vmem:[#allocation4 + $0x90] sm:$0xff]
    %v1924 = vld [vmem:[#allocation4 + $0x98] sm:$0xff]
    %v1925 = vld [vmem:[#allocation4 + $0xa0] sm:$0xff]
    %v1926 = vld [vmem:[#allocation4 + $0xa8] sm:$0xff]
    %v1927 = vld [vmem:[#allocation4 + $0xb0] sm:$0xff]
    %v1928 = vld [vmem:[#allocation4 + $0xb8] sm:$0xff]
    %v1929 = vld [vmem:[#allocation4 + $0xc0] sm:$0xff]
    %v1930 = vld [vmem:[#allocation4 + $0xc8] sm:$0xff]
    %v1931 = vld [vmem:[#allocation4 + $0xd0] sm:$0xff]
    %v1932 = vld [vmem:[#allocation4 + $0xd8] sm:$0xff]
    %v1933 = vld [vmem:[#allocation4 + $0xe0] sm:$0xff]
    %v1934 = vld [vmem:[#allocation4 + $0xe8] sm:$0xff]
    %v1935 = vld [vmem:[#allocation4 + $0xf0] sm:$0xff]
    %v1936 = vld [vmem:[#allocation4 + $0xf8] sm:$0xff]
    %v1937 = vld [vmem:[#allocation4 + $0x100] sm:$0xff]
    %v1938 = vld [vmem:[#allocation4 + $0x108] sm:$0xff]
    %v1939 = vld [vmem:[#allocation4 + $0x110] sm:$0xff]
    %v1940 = vld [vmem:[#allocation4 + $0x118] sm:$0xff]
    %v1941 = vld [vmem:[#allocation4 + $0x120] sm:$0xff]
    %v1942 = vld [vmem:[#allocation4 + $0x128] sm:$0xff]
    %v1943 = vld [vmem:[#allocation4 + $0x130] sm:$0xff]
    %v1944 = vld [vmem:[#allocation4 + $0x138] sm:$0xff]
    %v1945 = vld [vmem:[#allocation4 + $0x140] sm:$0xff]
    %v1946 = vld [vmem:[#allocation4 + $0x148] sm:$0xff]
    %v1947 = vld [vmem:[#allocation4 + $0x150] sm:$0xff]
    %v1948 = vld [vmem:[#allocation4 + $0x158] sm:$0xff]
    %v1949 = vld [vmem:[#allocation4 + $0x160] sm:$0xff]
    %v1950 = vld [vmem:[#allocation4 + $0x168] sm:$0xff]
    %v1951 = vld [vmem:[#allocation4 + $0x170] sm:$0xff]
    %v1952 = vld [vmem:[#allocation4 + $0x178] sm:$0xff]
    %v1953 = vld [vmem:[#allocation4 + $0x180] sm:$0xff]
    %v1954 = vld [vmem:[#allocation4 + $0x188] sm:$0xff]
    %v1955 = vld [vmem:[#allocation4 + $0x190] sm:$0xff]
    %v1956 = vld [vmem:[#allocation4 + $0x198] sm:$0xff]
    %v1957 = vld [vmem:[#allocation4 + $0x1a0] sm:$0xff]
    %v1958 = vld [vmem:[#allocation4 + $0x1a8] sm:$0xff]
    %v1959 = vld [vmem:[#allocation4 + $0x1b0] sm:$0xff]
    %v1960 = vld [vmem:[#allocation4 + $0x1b8] sm:$0xff]
    %v1961 = vld [vmem:[#allocation4 + $0x1c0] sm:$0xff]
    %v1962 = vld [vmem:[#allocation4 + $0x1c8] sm:$0xff]
    %v1963 = vld [vmem:[#allocation4 + $0x1d0] sm:$0xff]
    %v1964 = vld [vmem:[#allocation4 + $0x1d8] sm:$0xff]
    %v1965 = vld [vmem:[#allocation4 + $0x1e0] sm:$0xff]
    %v1966 = vld [vmem:[#allocation4 + $0x1e8] sm:$0xff]
    %v1967 = vld [vmem:[#allocation4 + $0x1f0] sm:$0xff]
    %v1968 = vld [vmem:[#allocation4 + $0x1f8] sm:$0xff]
    %v1969 = vld [vmem:[#allocation4 + $0x200] sm:$0xff]
    %v1970 = vld [vmem:[#allocation4 + $0x208] sm:$0xff]
    %v1971 = vld [vmem:[#allocation4 + $0x210] sm:$0xff]
    %v1972 = vld [vmem:[#allocation4 + $0x218] sm:$0xff]
    %v1973 = vld [vmem:[#allocation4 + $0x220] sm:$0xff]
    %v1974 = vld [vmem:[#allocation4 + $0x228] sm:$0xff]
    %v1975 = vld [vmem:[#allocation4 + $0x230] sm:$0xff]
    %v1976 = vld [vmem:[#allocation4 + $0x238] sm:$0xff]
    %v1977 = vld [vmem:[#allocation4 + $0x240] sm:$0xff]
    %v1978 = vld [vmem:[#allocation4 + $0x248] sm:$0xff]
    %v1979 = vld [vmem:[#allocation4 + $0x250] sm:$0xff]
    %v1980 = vld [vmem:[#allocation4 + $0x258] sm:$0xff]
    %v1981 = vld [vmem:[#allocation4 + $0x260] sm:$0xff]
    %v1982 = vld [vmem:[#allocation4 + $0x268] sm:$0xff]
    %v1983 = vld [vmem:[#allocation4 + $0x270] sm:$0xff]
    %v1984 = vld [vmem:[#allocation4 + $0x278] sm:$0xff]
    %v1985 = vld [vmem:[#allocation4 + $0x280] sm:$0xff]
    %v1986 = vld [vmem:[#allocation4 + $0x288] sm:$0xff]
    %v1987 = vld [vmem:[#allocation4 + $0x290] sm:$0xff]
    %v1988 = vld [vmem:[#allocation4 + $0x298] sm:$0xff]
    %v1989 = vld [vmem:[#allocation4 + $0x2a0] sm:$0xff]
    %v1990 = vld [vmem:[#allocation4 + $0x2a8] sm:$0xff]
    %v1991 = vld [vmem:[#allocation4 + $0x2b0] sm:$0xff]
    %v1992 = vld [vmem:[#allocation4 + $0x2b8] sm:$0xff]
    %v1993 = vld [vmem:[#allocation4 + $0x2c0] sm:$0xff]
    %v1994 = vld [vmem:[#allocation4 + $0x2c8] sm:$0xff]
    %v1995 = vld [vmem:[#allocation4 + $0x2d0] sm:$0xff]
    %v1996 = vld [vmem:[#allocation4 + $0x2d8] sm:$0xff]
    %v1997 = vld [vmem:[#allocation4 + $0x2e0] sm:$0xff]
    %v1998 = vld [vmem:[#allocation4 + $0x2e8] sm:$0xff]
    %v1999 = vld [vmem:[#allocation4 + $0x2f0] sm:$0xff]
    %v2000 = vld [vmem:[#allocation4 + $0x2f8] sm:$0xff]
    %v2001 = vld [vmem:[#allocation4 + $0x300] sm:$0xff]
    %v2002 = vld [vmem:[#allocation4 + $0x308] sm:$0xff]
    %v2003 = vld [vmem:[#allocation4 + $0x310] sm:$0xff]
    %v2004 = vld [vmem:[#allocation4 + $0x318] sm:$0xff]
    %v2005 = vld [vmem:[#allocation4 + $0x320] sm:$0xff]
    %v2006 = vld [vmem:[#allocation4 + $0x328] sm:$0xff]
    %v2007 = vld [vmem:[#allocation4 + $0x330] sm:$0xff]
    %v2008 = vld [vmem:[#allocation4 + $0x338] sm:$0xff]
    %v2009 = vld [vmem:[#allocation4 + $0x340] sm:$0xff]
    %v2010 = vld [vmem:[#allocation4 + $0x348] sm:$0xff]
    %v2011 = vld [vmem:[#allocation4 + $0x350] sm:$0xff]
    %v2012 = vld [vmem:[#allocation4 + $0x358] sm:$0xff]
    %v2013 = vld [vmem:[#allocation4 + $0x360] sm:$0xff]
    %v2014 = vld [vmem:[#allocation4 + $0x368] sm:$0xff]
    %v2015 = vld [vmem:[#allocation4 + $0x370] sm:$0xff]
    %v2016 = vld [vmem:[#allocation4 + $0x378] sm:$0xff]
    %v2017 = vld [vmem:[#allocation4 + $0x380] sm:$0xff]
    %v2018 = vld [vmem:[#allocation4 + $0x388] sm:$0xff]
    %v2019 = vld [vmem:[#allocation4 + $0x390] sm:$0xff]
    %v2020 = vld [vmem:[#allocation4 + $0x398] sm:$0xff]
    %v2021 = vld [vmem:[#allocation4 + $0x3a0] sm:$0xff]
    %v2022 = vld [vmem:[#allocation4 + $0x3a8] sm:$0xff]
    %v2023 = vld [vmem:[#allocation4 + $0x3b0] sm:$0xff]
    %v2024 = vld [vmem:[#allocation4 + $0x3b8] sm:$0xff]
    %v2025 = vld [vmem:[#allocation4 + $0x3c0] sm:$0xff]
    %v2026 = vld [vmem:[#allocation4 + $0x3c8] sm:$0xff]
    %v2027 = vld [vmem:[#allocation4 + $0x3d0] sm:$0xff]
    %v2028 = vld [vmem:[#allocation4 + $0x3d8] sm:$0xff]
    %v2029 = vld [vmem:[#allocation4 + $0x3e0] sm:$0xff]
    %v2030 = vld [vmem:[#allocation4 + $0x3e8] sm:$0xff]
    %v2031 = vld [vmem:[#allocation4 + $0x3f0] sm:$0xff]
    %v2032 = vld [vmem:[#allocation4 + $0x3f8] sm:$0xff]
    %v2161 = vunpack.c.l.b16 %v1905
    %v2162 = vunpack.c.h.b16 %v1905
    %v2163 = vunpack.c.l.b16 %v1906
    %v2164 = vunpack.c.h.b16 %v1906
    %v2165 = vunpack.c.l.b16 %v1907
    %v2166 = vunpack.c.h.b16 %v1907
    %v2167 = vunpack.c.l.b16 %v1908
    %v2168 = vunpack.c.h.b16 %v1908
    %v2169 = vunpack.c.l.b16 %v1909
    %v2170 = vunpack.c.h.b16 %v1909
    %v2171 = vunpack.c.l.b16 %v1910
    %v2172 = vunpack.c.h.b16 %v1910
    %v2173 = vunpack.c.l.b16 %v1911
    %v2174 = vunpack.c.h.b16 %v1911
    %v2175 = vunpack.c.l.b16 %v1912
    %v2176 = vunpack.c.h.b16 %v1912
    %v2177 = vunpack.c.l.b16 %v1913
    %v2178 = vunpack.c.h.b16 %v1913
    %v2179 = vunpack.c.l.b16 %v1914
    %v2180 = vunpack.c.h.b16 %v1914
    %v2181 = vunpack.c.l.b16 %v1915
    %v2182 = vunpack.c.h.b16 %v1915
    %v2183 = vunpack.c.l.b16 %v1916
    %v2184 = vunpack.c.h.b16 %v1916
    %v2185 = vunpack.c.l.b16 %v1917
    %v2186 = vunpack.c.h.b16 %v1917
    %v2187 = vunpack.c.l.b16 %v1918
    %v2188 = vunpack.c.h.b16 %v1918
    %v2189 = vunpack.c.l.b16 %v1919
    %v2190 = vunpack.c.h.b16 %v1919
    %v2191 = vunpack.c.l.b16 %v1920
    %v2192 = vunpack.c.h.b16 %v1920
    %v2193 = vunpack.c.l.b16 %v1921
    %v2194 = vunpack.c.h.b16 %v1921
    %v2195 = vunpack.c.l.b16 %v1922
    %v2196 = vunpack.c.h.b16 %v1922
    %v2197 = vunpack.c.l.b16 %v1923
    %v2198 = vunpack.c.h.b16 %v1923
    %v2199 = vunpack.c.l.b16 %v1924
    %v2200 = vunpack.c.h.b16 %v1924
    %v2201 = vunpack.c.l.b16 %v1925
    %v2202 = vunpack.c.h.b16 %v1925
    %v2203 = vunpack.c.l.b16 %v1926
    %v2204 = vunpack.c.h.b16 %v1926
    %v2205 = vunpack.c.l.b16 %v1927
    %v2206 = vunpack.c.h.b16 %v1927
    %v2207 = vunpack.c.l.b16 %v1928
    %v2208 = vunpack.c.h.b16 %v1928
    %v2209 = vunpack.c.l.b16 %v1929
    %v2210 = vunpack.c.h.b16 %v1929
    %v2211 = vunpack.c.l.b16 %v1930
    %v2212 = vunpack.c.h.b16 %v1930
    %v2213 = vunpack.c.l.b16 %v1931
    %v2214 = vunpack.c.h.b16 %v1931
    %v2215 = vunpack.c.l.b16 %v1932
    %v2216 = vunpack.c.h.b16 %v1932
    %v2217 = vunpack.c.l.b16 %v1933
    %v2218 = vunpack.c.h.b16 %v1933
    %v2219 = vunpack.c.l.b16 %v1934
    %v2220 = vunpack.c.h.b16 %v1934
    %v2221 = vunpack.c.l.b16 %v1935
    %v2222 = vunpack.c.h.b16 %v1935
    %v2223 = vunpack.c.l.b16 %v1936
    %v2224 = vunpack.c.h.b16 %v1936
    %v2225 = vunpack.c.l.b16 %v1937
    %v2226 = vunpack.c.h.b16 %v1937
    %v2227 = vunpack.c.l.b16 %v1938
    %v2228 = vunpack.c.h.b16 %v1938
    %v2229 = vunpack.c.l.b16 %v1939
    %v2230 = vunpack.c.h.b16 %v1939
    %v2231 = vunpack.c.l.b16 %v1940
    %v2232 = vunpack.c.h.b16 %v1940
    %v2233 = vunpack.c.l.b16 %v1941
    %v2234 = vunpack.c.h.b16 %v1941
    %v2235 = vunpack.c.l.b16 %v1942
    %v2236 = vunpack.c.h.b16 %v1942
    %v2237 = vunpack.c.l.b16 %v1943
    %v2238 = vunpack.c.h.b16 %v1943
    %v2239 = vunpack.c.l.b16 %v1944
    %v2240 = vunpack.c.h.b16 %v1944
    %v2241 = vunpack.c.l.b16 %v1945
    %v2242 = vunpack.c.h.b16 %v1945
    %v2243 = vunpack.c.l.b16 %v1946
    %v2244 = vunpack.c.h.b16 %v1946
    %v2245 = vunpack.c.l.b16 %v1947
    %v2246 = vunpack.c.h.b16 %v1947
    %v2247 = vunpack.c.l.b16 %v1948
    %v2248 = vunpack.c.h.b16 %v1948
    %v2249 = vunpack.c.l.b16 %v1949
    %v2250 = vunpack.c.h.b16 %v1949
    %v2251 = vunpack.c.l.b16 %v1950
    %v2252 = vunpack.c.h.b16 %v1950
    %v2253 = vunpack.c.l.b16 %v1951
    %v2254 = vunpack.c.h.b16 %v1951
    %v2255 = vunpack.c.l.b16 %v1952
    %v2256 = vunpack.c.h.b16 %v1952
    %v2257 = vunpack.c.l.b16 %v1953
    %v2258 = vunpack.c.h.b16 %v1953
    %v2259 = vunpack.c.l.b16 %v1954
    %v2260 = vunpack.c.h.b16 %v1954
    %v2261 = vunpack.c.l.b16 %v1955
    %v2262 = vunpack.c.h.b16 %v1955
    %v2263 = vunpack.c.l.b16 %v1956
    %v2264 = vunpack.c.h.b16 %v1956
    %v2265 = vunpack.c.l.b16 %v1957
    %v2266 = vunpack.c.h.b16 %v1957
    %v2267 = vunpack.c.l.b16 %v1958
    %v2268 = vunpack.c.h.b16 %v1958
    %v2269 = vunpack.c.l.b16 %v1959
    %v2270 = vunpack.c.h.b16 %v1959
    %v2271 = vunpack.c.l.b16 %v1960
    %v2272 = vunpack.c.h.b16 %v1960
    %v2273 = vunpack.c.l.b16 %v1961
    %v2274 = vunpack.c.h.b16 %v1961
    %v2275 = vunpack.c.l.b16 %v1962
    %v2276 = vunpack.c.h.b16 %v1962
    %v2277 = vunpack.c.l.b16 %v1963
    %v2278 = vunpack.c.h.b16 %v1963
    %v2279 = vunpack.c.l.b16 %v1964
    %v2280 = vunpack.c.h.b16 %v1964
    %v2281 = vunpack.c.l.b16 %v1965
    %v2282 = vunpack.c.h.b16 %v1965
    %v2283 = vunpack.c.l.b16 %v1966
    %v2284 = vunpack.c.h.b16 %v1966
    %v2285 = vunpack.c.l.b16 %v1967
    %v2286 = vunpack.c.h.b16 %v1967
    %v2287 = vunpack.c.l.b16 %v1968
    %v2288 = vunpack.c.h.b16 %v1968
    %v2289 = vunpack.c.l.b16 %v1969
    %v2290 = vunpack.c.h.b16 %v1969
    %v2291 = vunpack.c.l.b16 %v1970
    %v2292 = vunpack.c.h.b16 %v1970
    %v2293 = vunpack.c.l.b16 %v1971
    %v2294 = vunpack.c.h.b16 %v1971
    %v2295 = vunpack.c.l.b16 %v1972
    %v2296 = vunpack.c.h.b16 %v1972
    %v2297 = vunpack.c.l.b16 %v1973
    %v2298 = vunpack.c.h.b16 %v1973
    %v2299 = vunpack.c.l.b16 %v1974
    %v2300 = vunpack.c.h.b16 %v1974
    %v2301 = vunpack.c.l.b16 %v1975
    %v2302 = vunpack.c.h.b16 %v1975
    %v2303 = vunpack.c.l.b16 %v1976
    %v2304 = vunpack.c.h.b16 %v1976
    %v2305 = vunpack.c.l.b16 %v1977
    %v2306 = vunpack.c.h.b16 %v1977
    %v2307 = vunpack.c.l.b16 %v1978
    %v2308 = vunpack.c.h.b16 %v1978
    %v2309 = vunpack.c.l.b16 %v1979
    %v2310 = vunpack.c.h.b16 %v1979
    %v2311 = vunpack.c.l.b16 %v1980
    %v2312 = vunpack.c.h.b16 %v1980
    %v2313 = vunpack.c.l.b16 %v1981
    %v2314 = vunpack.c.h.b16 %v1981
    %v2315 = vunpack.c.l.b16 %v1982
    %v2316 = vunpack.c.h.b16 %v1982
    %v2317 = vunpack.c.l.b16 %v1983
    %v2318 = vunpack.c.h.b16 %v1983
    %v2319 = vunpack.c.l.b16 %v1984
    %v2320 = vunpack.c.h.b16 %v1984
    %v2321 = vunpack.c.l.b16 %v1985
    %v2322 = vunpack.c.h.b16 %v1985
    %v2323 = vunpack.c.l.b16 %v1986
    %v2324 = vunpack.c.h.b16 %v1986
    %v2325 = vunpack.c.l.b16 %v1987
    %v2326 = vunpack.c.h.b16 %v1987
    %v2327 = vunpack.c.l.b16 %v1988
    %v2328 = vunpack.c.h.b16 %v1988
    %v2329 = vunpack.c.l.b16 %v1989
    %v2330 = vunpack.c.h.b16 %v1989
    %v2331 = vunpack.c.l.b16 %v1990
    %v2332 = vunpack.c.h.b16 %v1990
    %v2333 = vunpack.c.l.b16 %v1991
    %v2334 = vunpack.c.h.b16 %v1991
    %v2335 = vunpack.c.l.b16 %v1992
    %v2336 = vunpack.c.h.b16 %v1992
    %v2337 = vunpack.c.l.b16 %v1993
    %v2338 = vunpack.c.h.b16 %v1993
    %v2339 = vunpack.c.l.b16 %v1994
    %v2340 = vunpack.c.h.b16 %v1994
    %v2341 = vunpack.c.l.b16 %v1995
    %v2342 = vunpack.c.h.b16 %v1995
    %v2343 = vunpack.c.l.b16 %v1996
    %v2344 = vunpack.c.h.b16 %v1996
    %v2345 = vunpack.c.l.b16 %v1997
    %v2346 = vunpack.c.h.b16 %v1997
    %v2347 = vunpack.c.l.b16 %v1998
    %v2348 = vunpack.c.h.b16 %v1998
    %v2349 = vunpack.c.l.b16 %v1999
    %v2350 = vunpack.c.h.b16 %v1999
    %v2351 = vunpack.c.l.b16 %v2000
    %v2352 = vunpack.c.h.b16 %v2000
    %v2353 = vunpack.c.l.b16 %v2001
    %v2354 = vunpack.c.h.b16 %v2001
    %v2355 = vunpack.c.l.b16 %v2002
    %v2356 = vunpack.c.h.b16 %v2002
    %v2357 = vunpack.c.l.b16 %v2003
    %v2358 = vunpack.c.h.b16 %v2003
    %v2359 = vunpack.c.l.b16 %v2004
    %v2360 = vunpack.c.h.b16 %v2004
    %v2361 = vunpack.c.l.b16 %v2005
    %v2362 = vunpack.c.h.b16 %v2005
    %v2363 = vunpack.c.l.b16 %v2006
    %v2364 = vunpack.c.h.b16 %v2006
    %v2365 = vunpack.c.l.b16 %v2007
    %v2366 = vunpack.c.h.b16 %v2007
    %v2367 = vunpack.c.l.b16 %v2008
    %v2368 = vunpack.c.h.b16 %v2008
    %v2369 = vunpack.c.l.b16 %v2009
    %v2370 = vunpack.c.h.b16 %v2009
    %v2371 = vunpack.c.l.b16 %v2010
    %v2372 = vunpack.c.h.b16 %v2010
    %v2373 = vunpack.c.l.b16 %v2011
    %v2374 = vunpack.c.h.b16 %v2011
    %v2375 = vunpack.c.l.b16 %v2012
    %v2376 = vunpack.c.h.b16 %v2012
    %v2377 = vunpack.c.l.b16 %v2013
    %v2378 = vunpack.c.h.b16 %v2013
    %v2379 = vunpack.c.l.b16 %v2014
    %v2380 = vunpack.c.h.b16 %v2014
    %v2381 = vunpack.c.l.b16 %v2015
    %v2382 = vunpack.c.h.b16 %v2015
    %v2383 = vunpack.c.l.b16 %v2016
    %v2384 = vunpack.c.h.b16 %v2016
    %v2385 = vunpack.c.l.b16 %v2017
    %v2386 = vunpack.c.h.b16 %v2017
    %v2387 = vunpack.c.l.b16 %v2018
    %v2388 = vunpack.c.h.b16 %v2018
    %v2389 = vunpack.c.l.b16 %v2019
    %v2390 = vunpack.c.h.b16 %v2019
    %v2391 = vunpack.c.l.b16 %v2020
    %v2392 = vunpack.c.h.b16 %v2020
    %v2393 = vunpack.c.l.b16 %v2021
    %v2394 = vunpack.c.h.b16 %v2021
    %v2395 = vunpack.c.l.b16 %v2022
    %v2396 = vunpack.c.h.b16 %v2022
    %v2397 = vunpack.c.l.b16 %v2023
    %v2398 = vunpack.c.h.b16 %v2023
    %v2399 = vunpack.c.l.b16 %v2024
    %v2400 = vunpack.c.h.b16 %v2024
    %v2401 = vunpack.c.l.b16 %v2025
    %v2402 = vunpack.c.h.b16 %v2025
    %v2403 = vunpack.c.l.b16 %v2026
    %v2404 = vunpack.c.h.b16 %v2026
    %v2405 = vunpack.c.l.b16 %v2027
    %v2406 = vunpack.c.h.b16 %v2027
    %v2407 = vunpack.c.l.b16 %v2028
    %v2408 = vunpack.c.h.b16 %v2028
    %v2409 = vunpack.c.l.b16 %v2029
    %v2410 = vunpack.c.h.b16 %v2029
    %v2411 = vunpack.c.l.b16 %v2030
    %v2412 = vunpack.c.h.b16 %v2030
    %v2413 = vunpack.c.l.b16 %v2031
    %v2414 = vunpack.c.h.b16 %v2031
    %v2415 = vunpack.c.l.b16 %v2032
    %v2416 = vunpack.c.h.b16 %v2032
    %v2417 = vpack.c.b16 %v2165, %v2161
    %v2418 = vpack.c.b16 %v2166, %v2162
    %v2419 = vpack.c.b16 %v2167, %v2163
    %v2420 = vpack.c.b16 %v2168, %v2164
    %v2421 = vpack.c.b16 %v2173, %v2169
    %v2422 = vpack.c.b16 %v2174, %v2170
    %v2423 = vpack.c.b16 %v2175, %v2171
    %v2424 = vpack.c.b16 %v2176, %v2172
    %v2425 = vpack.c.b16 %v2181, %v2177
    %v2426 = vpack.c.b16 %v2182, %v2178
    %v2427 = vpack.c.b16 %v2183, %v2179
    %v2428 = vpack.c.b16 %v2184, %v2180
    %v2429 = vpack.c.b16 %v2189, %v2185
    %v2430 = vpack.c.b16 %v2190, %v2186
    %v2431 = vpack.c.b16 %v2191, %v2187
    %v2432 = vpack.c.b16 %v2192, %v2188
    %v2433 = vpack.c.b16 %v2197, %v2193
    %v2434 = vpack.c.b16 %v2198, %v2194
    %v2435 = vpack.c.b16 %v2199, %v2195
    %v2436 = vpack.c.b16 %v2200, %v2196
    %v2437 = vpack.c.b16 %v2205, %v2201
    %v2438 = vpack.c.b16 %v2206, %v2202
    %v2439 = vpack.c.b16 %v2207, %v2203
    %v2440 = vpack.c.b16 %v2208, %v2204
    %v2441 = vpack.c.b16 %v2213, %v2209
    %v2442 = vpack.c.b16 %v2214, %v2210
    %v2443 = vpack.c.b16 %v2215, %v2211
    %v2444 = vpack.c.b16 %v2216, %v2212
    %v2445 = vpack.c.b16 %v2221, %v2217
    %v2446 = vpack.c.b16 %v2222, %v2218
    %v2447 = vpack.c.b16 %v2223, %v2219
    %v2448 = vpack.c.b16 %v2224, %v2220
    %v2449 = vpack.c.b16 %v2229, %v2225
    %v2450 = vpack.c.b16 %v2230, %v2226
    %v2451 = vpack.c.b16 %v2231, %v2227
    %v2452 = vpack.c.b16 %v2232, %v2228
    %v2453 = vpack.c.b16 %v2237, %v2233
    %v2454 = vpack.c.b16 %v2238, %v2234
    %v2455 = vpack.c.b16 %v2239, %v2235
    %v2456 = vpack.c.b16 %v2240, %v2236
    %v2457 = vpack.c.b16 %v2245, %v2241
    %v2458 = vpack.c.b16 %v2246, %v2242
    %v2459 = vpack.c.b16 %v2247, %v2243
    %v2460 = vpack.c.b16 %v2248, %v2244
    %v2461 = vpack.c.b16 %v2253, %v2249
    %v2462 = vpack.c.b16 %v2254, %v2250
    %v2463 = vpack.c.b16 %v2255, %v2251
    %v2464 = vpack.c.b16 %v2256, %v2252
    %v2465 = vpack.c.b16 %v2261, %v2257
    %v2466 = vpack.c.b16 %v2262, %v2258
    %v2467 = vpack.c.b16 %v2263, %v2259
    %v2468 = vpack.c.b16 %v2264, %v2260
    %v2469 = vpack.c.b16 %v2269, %v2265
    %v2470 = vpack.c.b16 %v2270, %v2266
    %v2471 = vpack.c.b16 %v2271, %v2267
    %v2472 = vpack.c.b16 %v2272, %v2268
    %v2473 = vpack.c.b16 %v2277, %v2273
    %v2474 = vpack.c.b16 %v2278, %v2274
    %v2475 = vpack.c.b16 %v2279, %v2275
    %v2476 = vpack.c.b16 %v2280, %v2276
    %v2477 = vpack.c.b16 %v2285, %v2281
    %v2478 = vpack.c.b16 %v2286, %v2282
    %v2479 = vpack.c.b16 %v2287, %v2283
    %v2480 = vpack.c.b16 %v2288, %v2284
    %v2481 = vpack.c.b16 %v2293, %v2289
    %v2482 = vpack.c.b16 %v2294, %v2290
    %v2483 = vpack.c.b16 %v2295, %v2291
    %v2484 = vpack.c.b16 %v2296, %v2292
    %v2485 = vpack.c.b16 %v2301, %v2297
    %v2486 = vpack.c.b16 %v2302, %v2298
    %v2487 = vpack.c.b16 %v2303, %v2299
    %v2488 = vpack.c.b16 %v2304, %v2300
    %v2489 = vpack.c.b16 %v2309, %v2305
    %v2490 = vpack.c.b16 %v2310, %v2306
    %v2491 = vpack.c.b16 %v2311, %v2307
    %v2492 = vpack.c.b16 %v2312, %v2308
    %v2493 = vpack.c.b16 %v2317, %v2313
    %v2494 = vpack.c.b16 %v2318, %v2314
    %v2495 = vpack.c.b16 %v2319, %v2315
    %v2496 = vpack.c.b16 %v2320, %v2316
    %v2497 = vpack.c.b16 %v2325, %v2321
    %v2498 = vpack.c.b16 %v2326, %v2322
    %v2499 = vpack.c.b16 %v2327, %v2323
    %v2500 = vpack.c.b16 %v2328, %v2324
    %v2501 = vpack.c.b16 %v2333, %v2329
    %v2502 = vpack.c.b16 %v2334, %v2330
    %v2503 = vpack.c.b16 %v2335, %v2331
    %v2504 = vpack.c.b16 %v2336, %v2332
    %v2505 = vpack.c.b16 %v2341, %v2337
    %v2506 = vpack.c.b16 %v2342, %v2338
    %v2507 = vpack.c.b16 %v2343, %v2339
    %v2508 = vpack.c.b16 %v2344, %v2340
    %v2509 = vpack.c.b16 %v2349, %v2345
    %v2510 = vpack.c.b16 %v2350, %v2346
    %v2511 = vpack.c.b16 %v2351, %v2347
    %v2512 = vpack.c.b16 %v2352, %v2348
    %v2513 = vpack.c.b16 %v2357, %v2353
    %v2514 = vpack.c.b16 %v2358, %v2354
    %v2515 = vpack.c.b16 %v2359, %v2355
    %v2516 = vpack.c.b16 %v2360, %v2356
    %v2517 = vpack.c.b16 %v2365, %v2361
    %v2518 = vpack.c.b16 %v2366, %v2362
    %v2519 = vpack.c.b16 %v2367, %v2363
    %v2520 = vpack.c.b16 %v2368, %v2364
    %v2521 = vpack.c.b16 %v2373, %v2369
    %v2522 = vpack.c.b16 %v2374, %v2370
    %v2523 = vpack.c.b16 %v2375, %v2371
    %v2524 = vpack.c.b16 %v2376, %v2372
    %v2525 = vpack.c.b16 %v2381, %v2377
    %v2526 = vpack.c.b16 %v2382, %v2378
    %v2527 = vpack.c.b16 %v2383, %v2379
    %v2528 = vpack.c.b16 %v2384, %v2380
    %v2529 = vpack.c.b16 %v2389, %v2385
    %v2530 = vpack.c.b16 %v2390, %v2386
    %v2531 = vpack.c.b16 %v2391, %v2387
    %v2532 = vpack.c.b16 %v2392, %v2388
    %v2533 = vpack.c.b16 %v2397, %v2393
    %v2534 = vpack.c.b16 %v2398, %v2394
    %v2535 = vpack.c.b16 %v2399, %v2395
    %v2536 = vpack.c.b16 %v2400, %v2396
    %v2537 = vpack.c.b16 %v2405, %v2401
    %v2538 = vpack.c.b16 %v2406, %v2402
    %v2539 = vpack.c.b16 %v2407, %v2403
    %v2540 = vpack.c.b16 %v2408, %v2404
    %v2541 = vpack.c.b16 %v2413, %v2409
    %v2542 = vpack.c.b16 %v2414, %v2410
    %v2543 = vpack.c.b16 %v2415, %v2411
    %v2544 = vpack.c.b16 %v2416, %v2412
    %2673 = vmatpush.bf16.msra.mxu0 %v2445
    %2674 = vmatpush.bf16.msra.mxu0 %v2441
    %2675 = vmatpush.bf16.msra.mxu0 %v2437
    %2676 = vmatpush.bf16.msra.mxu0 %v2433
    %2677 = vmatpush.bf16.msra.mxu0 %v2429
    %2678 = vmatpush.bf16.msra.mxu0 %v2425
    %2679 = vmatpush.bf16.msra.mxu0 %v2421
    %2680 = vmatpush.bf16.msra.mxu0 %v2417
    %2681 = vmatmul.bf16.gmra.mxu0 %v1901
    %v2682 = vpop.f32.mrf.mxu0
    %v2683 = vadd.f32 0.0, %v2682
    %v2684 = vpop.f32.mrf.mxu0
    %v2685 = vadd.f32 0.0, %v2684
    %2686 = vdwg.mxu0
    %2687 = vmatpush.bf16.msra.mxu0 %v2477
    %2688 = vmatpush.bf16.msra.mxu0 %v2473
    %2689 = vmatpush.bf16.msra.mxu0 %v2469
    %2690 = vmatpush.bf16.msra.mxu0 %v2465
    %2691 = vmatpush.bf16.msra.mxu0 %v2461
    %2692 = vmatpush.bf16.msra.mxu0 %v2457
    %2693 = vmatpush.bf16.msra.mxu0 %v2453
    %2694 = vmatpush.bf16.msra.mxu0 %v2449
    %2695 = vmatmul.bf16.gmra.mxu0 %v1902
    %v2696 = vpop.f32.mrf.mxu0
    %v2697 = vadd.f32 %v2683, %v2696
    %v2698 = vpop.f32.mrf.mxu0
    %v2699 = vadd.f32 %v2685, %v2698
    %2700 = vdwg.mxu0
    %2701 = vmatpush.bf16.msra.mxu0 %v2509
    %2702 = vmatpush.bf16.msra.mxu0 %v2505
    %2703 = vmatpush.bf16.msra.mxu0 %v2501
    %2704 = vmatpush.bf16.msra.mxu0 %v2497
    %2705 = vmatpush.bf16.msra.mxu0 %v2493
    %2706 = vmatpush.bf16.msra.mxu0 %v2489
    %2707 = vmatpush.bf16.msra.mxu0 %v2485
    %2708 = vmatpush.bf16.msra.mxu0 %v2481
    %2709 = vmatmul.bf16.gmra.mxu0 %v1903
    %v2710 = vpop.f32.mrf.mxu0
    %v2711 = vadd.f32 %v2697, %v2710
    %v2712 = vpop.f32.mrf.mxu0
    %v2713 = vadd.f32 %v2699, %v2712
    %2714 = vdwg.mxu0
    %2715 = vmatpush.bf16.msra.mxu0 %v2541
    %2716 = vmatpush.bf16.msra.mxu0 %v2537
    %2717 = vmatpush.bf16.msra.mxu0 %v2533
    %2718 = vmatpush.bf16.msra.mxu0 %v2529
    %2719 = vmatpush.bf16.msra.mxu0 %v2525
    %2720 = vmatpush.bf16.msra.mxu0 %v2521
    %2721 = vmatpush.bf16.msra.mxu0 %v2517
    %2722 = vmatpush.bf16.msra.mxu0 %v2513
    %2723 = vmatmul.bf16.gmra.mxu0 %v1904
    %v2724 = vpop.f32.mrf.mxu0
    %v2725 = vadd.f32 %v2711, %v2724
    %v2726 = vpop.f32.mrf.mxu0
    %v2727 = vadd.f32 %v2713, %v2726
    %2728 = vdwg.mxu0
    %2729 = vmatpush.bf16.msra.mxu0 %v2446
    %2730 = vmatpush.bf16.msra.mxu0 %v2442
    %2731 = vmatpush.bf16.msra.mxu0 %v2438
    %2732 = vmatpush.bf16.msra.mxu0 %v2434
    %2733 = vmatpush.bf16.msra.mxu0 %v2430
    %2734 = vmatpush.bf16.msra.mxu0 %v2426
    %2735 = vmatpush.bf16.msra.mxu0 %v2422
    %2736 = vmatpush.bf16.msra.mxu0 %v2418
    %2737 = vmatmul.bf16.gmra.mxu0 %v1901
    %v2738 = vpop.f32.mrf.mxu0
    %v2739 = vadd.f32 0.0, %v2738
    %v2740 = vpop.f32.mrf.mxu0
    %v2741 = vadd.f32 0.0, %v2740
    %2742 = vdwg.mxu0
    %2743 = vmatpush.bf16.msra.mxu0 %v2478
    %2744 = vmatpush.bf16.msra.mxu0 %v2474
    %2745 = vmatpush.bf16.msra.mxu0 %v2470
    %2746 = vmatpush.bf16.msra.mxu0 %v2466
    %2747 = vmatpush.bf16.msra.mxu0 %v2462
    %2748 = vmatpush.bf16.msra.mxu0 %v2458
    %2749 = vmatpush.bf16.msra.mxu0 %v2454
    %2750 = vmatpush.bf16.msra.mxu0 %v2450
    %2751 = vmatmul.bf16.gmra.mxu0 %v1902
    %v2752 = vpop.f32.mrf.mxu0
    %v2753 = vadd.f32 %v2739, %v2752
    %v2754 = vpop.f32.mrf.mxu0
    %v2755 = vadd.f32 %v2741, %v2754
    %2756 = vdwg.mxu0
    %2757 = vmatpush.bf16.msra.mxu0 %v2510
    %2758 = vmatpush.bf16.msra.mxu0 %v2506
    %2759 = vmatpush.bf16.msra.mxu0 %v2502
    %2760 = vmatpush.bf16.msra.mxu0 %v2498
    %2761 = vmatpush.bf16.msra.mxu0 %v2494
    %2762 = vmatpush.bf16.msra.mxu0 %v2490
    %2763 = vmatpush.bf16.msra.mxu0 %v2486
    %2764 = vmatpush.bf16.msra.mxu0 %v2482
    %2765 = vmatmul.bf16.gmra.mxu0 %v1903
    %v2766 = vpop.f32.mrf.mxu0
    %v2767 = vadd.f32 %v2753, %v2766
    %v2768 = vpop.f32.mrf.mxu0
    %v2769 = vadd.f32 %v2755, %v2768
    %2770 = vdwg.mxu0
    %2771 = vmatpush.bf16.msra.mxu0 %v2542
    %2772 = vmatpush.bf16.msra.mxu0 %v2538
    %2773 = vmatpush.bf16.msra.mxu0 %v2534
    %2774 = vmatpush.bf16.msra.mxu0 %v2530
    %2775 = vmatpush.bf16.msra.mxu0 %v2526
    %2776 = vmatpush.bf16.msra.mxu0 %v2522
    %2777 = vmatpush.bf16.msra.mxu0 %v2518
    %2778 = vmatpush.bf16.msra.mxu0 %v2514
    %2779 = vmatmul.bf16.gmra.mxu0 %v1904
    %v2780 = vpop.f32.mrf.mxu0
    %v2781 = vadd.f32 %v2767, %v2780
    %v2782 = vpop.f32.mrf.mxu0
    %v2783 = vadd.f32 %v2769, %v2782
    %2784 = vdwg.mxu0
    %2785 = vmatpush.bf16.msra.mxu0 %v2447
    %2786 = vmatpush.bf16.msra.mxu0 %v2443
    %2787 = vmatpush.bf16.msra.mxu0 %v2439
    %2788 = vmatpush.bf16.msra.mxu0 %v2435
    %2789 = vmatpush.bf16.msra.mxu0 %v2431
    %2790 = vmatpush.bf16.msra.mxu0 %v2427
    %2791 = vmatpush.bf16.msra.mxu0 %v2423
    %2792 = vmatpush.bf16.msra.mxu0 %v2419
    %2793 = vmatmul.bf16.gmra.mxu0 %v1901
    %v2794 = vpop.f32.mrf.mxu0
    %v2795 = vadd.f32 0.0, %v2794
    %v2796 = vpop.f32.mrf.mxu0
    %v2797 = vadd.f32 0.0, %v2796
    %2798 = vdwg.mxu0
    %2799 = vmatpush.bf16.msra.mxu0 %v2479
    %2800 = vmatpush.bf16.msra.mxu0 %v2475
    %2801 = vmatpush.bf16.msra.mxu0 %v2471
    %2802 = vmatpush.bf16.msra.mxu0 %v2467
    %2803 = vmatpush.bf16.msra.mxu0 %v2463
    %2804 = vmatpush.bf16.msra.mxu0 %v2459
    %2805 = vmatpush.bf16.msra.mxu0 %v2455
    %2806 = vmatpush.bf16.msra.mxu0 %v2451
    %2807 = vmatmul.bf16.gmra.mxu0 %v1902
    %v2808 = vpop.f32.mrf.mxu0
    %v2809 = vadd.f32 %v2795, %v2808
    %v2810 = vpop.f32.mrf.mxu0
    %v2811 = vadd.f32 %v2797, %v2810
    %2812 = vdwg.mxu0
    %2813 = vmatpush.bf16.msra.mxu0 %v2511
    %2814 = vmatpush.bf16.msra.mxu0 %v2507
    %2815 = vmatpush.bf16.msra.mxu0 %v2503
    %2816 = vmatpush.bf16.msra.mxu0 %v2499
    %2817 = vmatpush.bf16.msra.mxu0 %v2495
    %2818 = vmatpush.bf16.msra.mxu0 %v2491
    %2819 = vmatpush.bf16.msra.mxu0 %v2487
    %2820 = vmatpush.bf16.msra.mxu0 %v2483
    %2821 = vmatmul.bf16.gmra.mxu0 %v1903
    %v2822 = vpop.f32.mrf.mxu0
    %v2823 = vadd.f32 %v2809, %v2822
    %v2824 = vpop.f32.mrf.mxu0
    %v2825 = vadd.f32 %v2811, %v2824
    %2826 = vdwg.mxu0
    %2827 = vmatpush.bf16.msra.mxu0 %v2543
    %2828 = vmatpush.bf16.msra.mxu0 %v2539
    %2829 = vmatpush.bf16.msra.mxu0 %v2535
    %2830 = vmatpush.bf16.msra.mxu0 %v2531
    %2831 = vmatpush.bf16.msra.mxu0 %v2527
    %2832 = vmatpush.bf16.msra.mxu0 %v2523
    %2833 = vmatpush.bf16.msra.mxu0 %v2519
    %2834 = vmatpush.bf16.msra.mxu0 %v2515
    %2835 = vmatmul.bf16.gmra.mxu0 %v1904
    %v2836 = vpop.f32.mrf.mxu0
    %v2837 = vadd.f32 %v2823, %v2836
    %v2838 = vpop.f32.mrf.mxu0
    %v2839 = vadd.f32 %v2825, %v2838
    %2840 = vdwg.mxu0
    %2841 = vmatpush.bf16.msra.mxu0 %v2448
    %2842 = vmatpush.bf16.msra.mxu0 %v2444
    %2843 = vmatpush.bf16.msra.mxu0 %v2440
    %2844 = vmatpush.bf16.msra.mxu0 %v2436
    %2845 = vmatpush.bf16.msra.mxu0 %v2432
    %2846 = vmatpush.bf16.msra.mxu0 %v2428
    %2847 = vmatpush.bf16.msra.mxu0 %v2424
    %2848 = vmatpush.bf16.msra.mxu0 %v2420
    %2849 = vmatmul.bf16.gmra.mxu0 %v1901
    %v2850 = vpop.f32.mrf.mxu0
    %v2851 = vadd.f32 0.0, %v2850
    %v2852 = vpop.f32.mrf.mxu0
    %v2853 = vadd.f32 0.0, %v2852
    %2854 = vdwg.mxu0
    %2855 = vmatpush.bf16.msra.mxu0 %v2480
    %2856 = vmatpush.bf16.msra.mxu0 %v2476
    %2857 = vmatpush.bf16.msra.mxu0 %v2472
    %2858 = vmatpush.bf16.msra.mxu0 %v2468
    %2859 = vmatpush.bf16.msra.mxu0 %v2464
    %2860 = vmatpush.bf16.msra.mxu0 %v2460
    %2861 = vmatpush.bf16.msra.mxu0 %v2456
    %2862 = vmatpush.bf16.msra.mxu0 %v2452
    %2863 = vmatmul.bf16.gmra.mxu0 %v1902
    %v2864 = vpop.f32.mrf.mxu0
    %v2865 = vadd.f32 %v2851, %v2864
    %v2866 = vpop.f32.mrf.mxu0
    %v2867 = vadd.f32 %v2853, %v2866
    %2868 = vdwg.mxu0
    %2869 = vmatpush.bf16.msra.mxu0 %v2512
    %2870 = vmatpush.bf16.msra.mxu0 %v2508
    %2871 = vmatpush.bf16.msra.mxu0 %v2504
    %2872 = vmatpush.bf16.msra.mxu0 %v2500
    %2873 = vmatpush.bf16.msra.mxu0 %v2496
    %2874 = vmatpush.bf16.msra.mxu0 %v2492
    %2875 = vmatpush.bf16.msra.mxu0 %v2488
    %2876 = vmatpush.bf16.msra.mxu0 %v2484
    %2877 = vmatmul.bf16.gmra.mxu0 %v1903
    %v2878 = vpop.f32.mrf.mxu0
    %v2879 = vadd.f32 %v2865, %v2878
    %v2880 = vpop.f32.mrf.mxu0
    %v2881 = vadd.f32 %v2867, %v2880
    %2882 = vdwg.mxu0
    %2883 = vmatpush.bf16.msra.mxu0 %v2544
    %2884 = vmatpush.bf16.msra.mxu0 %v2540
    %2885 = vmatpush.bf16.msra.mxu0 %v2536
    %2886 = vmatpush.bf16.msra.mxu0 %v2532
    %2887 = vmatpush.bf16.msra.mxu0 %v2528
    %2888 = vmatpush.bf16.msra.mxu0 %v2524
    %2889 = vmatpush.bf16.msra.mxu0 %v2520
    %2890 = vmatpush.bf16.msra.mxu0 %v2516
    %2891 = vmatmul.bf16.gmra.mxu0 %v1904
    %v2892 = vpop.f32.mrf.mxu0
    %v2893 = vadd.f32 %v2879, %v2892
    %v2894 = vpop.f32.mrf.mxu0
    %v2895 = vadd.f32 %v2881, %v2894
    %2896 = vdwg.mxu0
    %v2897 = vpack.c.bf16 %v2781, %v2725
    %v2898 = vpack.c.bf16 %v2893, %v2837
    %v2899 = vpack.c.bf16 %v2783, %v2727
    %v2900 = vpack.c.bf16 %v2895, %v2839
    %v2901 = vld [vmem:[%s4] sm:$0xf]
    %2903 = vst [vmem:[#allocation1] ss:$9 sm:$0xff] %v2901
    %v2904 = vld [vmem:[#allocation1] sm:$0xff]
    %v2905 = vld [vmem:[#allocation1 + $0x9] sm:$0xff]
    %v2906 = vld [vmem:[#allocation1 + $0x12] sm:$0xff]
    %v2907 = vld [vmem:[#allocation1 + $0x1b] sm:$0xff]
    %v2908 = vpack.i.b16 %v2904, %v2904
    %v2910 = vperm.slane %v2908, 0
    %v2911 = vpack.i.b16 %v2905, %v2905
    %v2913 = vperm.slane %v2911, 0
    %v2914 = vpack.i.b16 %v2906, %v2906
    %v2916 = vperm.slane %v2914, 0
    %v2917 = vpack.i.b16 %v2907, %v2907
    %v2919 = vperm.slane %v2917, 0
    %v2920 = vunpack.c.l.bf16 %v2897
    %v2921 = vunpack.c.h.bf16 %v2897
    %v2922 = vunpack.c.l.bf16 %v2898
    %v2923 = vunpack.c.h.bf16 %v2898
    %v2924 = vunpack.c.l.bf16 %v2899
    %v2925 = vunpack.c.h.bf16 %v2899
    %v2926 = vunpack.c.l.bf16 %v2900
    %v2927 = vunpack.c.h.bf16 %v2900
    %v2928 = vunpack.c.l.bf16 %v2910
    %v2929 = vunpack.c.l.bf16 %v2913
    %v2930 = vunpack.c.l.bf16 %v2916
    %v2931 = vunpack.c.l.bf16 %v2919
    %v2932 = vadd.f32 %v2920, %v2928
    %v2933 = vadd.f32 %v2921, %v2929
    %v2934 = vadd.f32 %v2922, %v2930
    %v2935 = vadd.f32 %v2923, %v2931
    %v2936 = vadd.f32 %v2924, %v2928
    %v2937 = vadd.f32 %v2925, %v2929
    %v2938 = vadd.f32 %v2926, %v2930
    %v2939 = vadd.f32 %v2927, %v2931
    %v2940 = vpack.c.bf16 %v2933, %v2932
    %v2941 = vpack.c.bf16 %v2935, %v2934
    %v2942 = vpack.c.bf16 %v2937, %v2936
    %v2943 = vpack.c.bf16 %v2939, %v2938
    %v2944 = vunpack.c.l.bf16 %v2940
    %v2945 = vunpack.c.h.bf16 %v2940
    %v2946 = vunpack.c.l.bf16 %v2941
    %v2947 = vunpack.c.h.bf16 %v2941
    %v2948 = vunpack.c.l.bf16 %v2942
    %v2949 = vunpack.c.h.bf16 %v2942
    %v2950 = vunpack.c.l.bf16 %v2943
    %v2951 = vunpack.c.h.bf16 %v2943
    %v2952 = vmax.f32 %v2944, 0.0
    %v2953 = vmax.f32 %v2945, 0.0
    %v2954 = vmax.f32 %v2946, 0.0
    %v2955 = vmax.f32 %v2947, 0.0
    %v2956 = vmax.f32 %v2948, 0.0
    %v2957 = vmax.f32 %v2949, 0.0
    %v2958 = vmax.f32 %v2950, 0.0
    %v2959 = vmax.f32 %v2951, 0.0
    %v2960 = vpack.c.bf16 %v2956, %v2952
    %v2961 = vpack.c.bf16 %v2957, %v2953
    %v2962 = vpack.c.bf16 %v2958, %v2954
    %v2963 = vpack.c.bf16 %v2959, %v2955
    %v2964 = vld [vmem:[%s5] sm:$0xf]
    %v2965 = vld [vmem:[%s5 + $0x4] sm:$0xf]
    %v2966 = vld [vmem:[%s5 + $0x8] sm:$0xf]
    %v2967 = vld [vmem:[%s5 + $0xc] sm:$0xf]
    %v2968 = vld [vmem:[%s5 + $0x10] sm:$0xf]
    %v2969 = vld [vmem:[%s5 + $0x14] sm:$0xf]
    %v2970 = vld [vmem:[%s5 + $0x18] sm:$0xf]
    %v2971 = vld [vmem:[%s5 + $0x1c] sm:$0xf]
    %v2972 = vld [vmem:[%s5 + $0x20] sm:$0xf]
    %v2973 = vld [vmem:[%s5 + $0x24] sm:$0xf]
    %v2974 = vld [vmem:[%s5 + $0x28] sm:$0xf]
    %v2975 = vld [vmem:[%s5 + $0x2c] sm:$0xf]
    %v2976 = vld [vmem:[%s5 + $0x30] sm:$0xf]
    %v2977 = vld [vmem:[%s5 + $0x34] sm:$0xf]
    %v2978 = vld [vmem:[%s5 + $0x38] sm:$0xf]
    %v2979 = vld [vmem:[%s5 + $0x3c] sm:$0xf]
    %v2980 = vld [vmem:[%s5 + $0x40] sm:$0xf]
    %v2981 = vld [vmem:[%s5 + $0x44] sm:$0xf]
    %v2982 = vld [vmem:[%s5 + $0x48] sm:$0xf]
    %v2983 = vld [vmem:[%s5 + $0x4c] sm:$0xf]
    %v2984 = vld [vmem:[%s5 + $0x50] sm:$0xf]
    %v2985 = vld [vmem:[%s5 + $0x54] sm:$0xf]
    %v2986 = vld [vmem:[%s5 + $0x58] sm:$0xf]
    %v2987 = vld [vmem:[%s5 + $0x5c] sm:$0xf]
    %v2988 = vld [vmem:[%s5 + $0x60] sm:$0xf]
    %v2989 = vld [vmem:[%s5 + $0x64] sm:$0xf]
    %v2990 = vld [vmem:[%s5 + $0x68] sm:$0xf]
    %v2991 = vld [vmem:[%s5 + $0x6c] sm:$0xf]
    %v2992 = vld [vmem:[%s5 + $0x70] sm:$0xf]
    %v2993 = vld [vmem:[%s5 + $0x74] sm:$0xf]
    %v2994 = vld [vmem:[%s5 + $0x78] sm:$0xf]
    %v2995 = vld [vmem:[%s5 + $0x7c] sm:$0xf]
    %v2996 = vld [vmem:[%s5 + $0x80] sm:$0xf]
    %v2997 = vld [vmem:[%s5 + $0x84] sm:$0xf]
    %v2998 = vld [vmem:[%s5 + $0x88] sm:$0xf]
    %v2999 = vld [vmem:[%s5 + $0x8c] sm:$0xf]
    %v3000 = vld [vmem:[%s5 + $0x90] sm:$0xf]
    %v3001 = vld [vmem:[%s5 + $0x94] sm:$0xf]
    %v3002 = vld [vmem:[%s5 + $0x98] sm:$0xf]
    %v3003 = vld [vmem:[%s5 + $0x9c] sm:$0xf]
    %v3004 = vld [vmem:[%s5 + $0xa0] sm:$0xf]
    %v3005 = vld [vmem:[%s5 + $0xa4] sm:$0xf]
    %v3006 = vld [vmem:[%s5 + $0xa8] sm:$0xf]
    %v3007 = vld [vmem:[%s5 + $0xac] sm:$0xf]
    %v3008 = vld [vmem:[%s5 + $0xb0] sm:$0xf]
    %v3009 = vld [vmem:[%s5 + $0xb4] sm:$0xf]
    %v3010 = vld [vmem:[%s5 + $0xb8] sm:$0xf]
    %v3011 = vld [vmem:[%s5 + $0xbc] sm:$0xf]
    %v3012 = vld [vmem:[%s5 + $0xc0] sm:$0xf]
    %v3013 = vld [vmem:[%s5 + $0xc4] sm:$0xf]
    %v3014 = vld [vmem:[%s5 + $0xc8] sm:$0xf]
    %v3015 = vld [vmem:[%s5 + $0xcc] sm:$0xf]
    %v3016 = vld [vmem:[%s5 + $0xd0] sm:$0xf]
    %v3017 = vld [vmem:[%s5 + $0xd4] sm:$0xf]
    %v3018 = vld [vmem:[%s5 + $0xd8] sm:$0xf]
    %v3019 = vld [vmem:[%s5 + $0xdc] sm:$0xf]
    %v3020 = vld [vmem:[%s5 + $0xe0] sm:$0xf]
    %v3021 = vld [vmem:[%s5 + $0xe4] sm:$0xf]
    %v3022 = vld [vmem:[%s5 + $0xe8] sm:$0xf]
    %v3023 = vld [vmem:[%s5 + $0xec] sm:$0xf]
    %v3024 = vld [vmem:[%s5 + $0xf0] sm:$0xf]
    %v3025 = vld [vmem:[%s5 + $0xf4] sm:$0xf]
    %v3026 = vld [vmem:[%s5 + $0xf8] sm:$0xf]
    %v3027 = vld [vmem:[%s5 + $0xfc] sm:$0xf]
    %v3028 = vld [vmem:[%s6] sm:$0x1]
    %v3030 = vperm.slane %v3028, 0
    %v3096 = vunpack.c.l.b16 %v2964
    %v3097 = vunpack.c.l.b16 %v2965
    %v3098 = vunpack.c.l.b16 %v2966
    %v3099 = vunpack.c.l.b16 %v2967
    %v3100 = vunpack.c.l.b16 %v2968
    %v3101 = vunpack.c.l.b16 %v2969
    %v3102 = vunpack.c.l.b16 %v2970
    %v3103 = vunpack.c.l.b16 %v2971
    %v3104 = vunpack.c.l.b16 %v2972
    %v3105 = vunpack.c.l.b16 %v2973
    %v3106 = vunpack.c.l.b16 %v2974
    %v3107 = vunpack.c.l.b16 %v2975
    %v3108 = vunpack.c.l.b16 %v2976
    %v3109 = vunpack.c.l.b16 %v2977
    %v3110 = vunpack.c.l.b16 %v2978
    %v3111 = vunpack.c.l.b16 %v2979
    %v3112 = vunpack.c.l.b16 %v2980
    %v3113 = vunpack.c.l.b16 %v2981
    %v3114 = vunpack.c.l.b16 %v2982
    %v3115 = vunpack.c.l.b16 %v2983
    %v3116 = vunpack.c.l.b16 %v2984
    %v3117 = vunpack.c.l.b16 %v2985
    %v3118 = vunpack.c.l.b16 %v2986
    %v3119 = vunpack.c.l.b16 %v2987
    %v3120 = vunpack.c.l.b16 %v2988
    %v3121 = vunpack.c.l.b16 %v2989
    %v3122 = vunpack.c.l.b16 %v2990
    %v3123 = vunpack.c.l.b16 %v2991
    %v3124 = vunpack.c.l.b16 %v2992
    %v3125 = vunpack.c.l.b16 %v2993
    %v3126 = vunpack.c.l.b16 %v2994
    %v3127 = vunpack.c.l.b16 %v2995
    %v3128 = vunpack.c.l.b16 %v2996
    %v3129 = vunpack.c.l.b16 %v2997
    %v3130 = vunpack.c.l.b16 %v2998
    %v3131 = vunpack.c.l.b16 %v2999
    %v3132 = vunpack.c.l.b16 %v3000
    %v3133 = vunpack.c.l.b16 %v3001
    %v3134 = vunpack.c.l.b16 %v3002
    %v3135 = vunpack.c.l.b16 %v3003
    %v3136 = vunpack.c.l.b16 %v3004
    %v3137 = vunpack.c.l.b16 %v3005
    %v3138 = vunpack.c.l.b16 %v3006
    %v3139 = vunpack.c.l.b16 %v3007
    %v3140 = vunpack.c.l.b16 %v3008
    %v3141 = vunpack.c.l.b16 %v3009
    %v3142 = vunpack.c.l.b16 %v3010
    %v3143 = vunpack.c.l.b16 %v3011
    %v3144 = vunpack.c.l.b16 %v3012
    %v3145 = vunpack.c.l.b16 %v3013
    %v3146 = vunpack.c.l.b16 %v3014
    %v3147 = vunpack.c.l.b16 %v3015
    %v3148 = vunpack.c.l.b16 %v3016
    %v3149 = vunpack.c.l.b16 %v3017
    %v3150 = vunpack.c.l.b16 %v3018
    %v3151 = vunpack.c.l.b16 %v3019
    %v3152 = vunpack.c.l.b16 %v3020
    %v3153 = vunpack.c.l.b16 %v3021
    %v3154 = vunpack.c.l.b16 %v3022
    %v3155 = vunpack.c.l.b16 %v3023
    %v3156 = vunpack.c.l.b16 %v3024
    %v3157 = vunpack.c.l.b16 %v3025
    %v3158 = vunpack.c.l.b16 %v3026
    %v3159 = vunpack.c.l.b16 %v3027
    %v3160 = vpack.c.b16 %v3097, %v3096
    %v3161 = vpack.c.b16 %v3099, %v3098
    %v3162 = vpack.c.b16 %v3101, %v3100
    %v3163 = vpack.c.b16 %v3103, %v3102
    %v3164 = vpack.c.b16 %v3105, %v3104
    %v3165 = vpack.c.b16 %v3107, %v3106
    %v3166 = vpack.c.b16 %v3109, %v3108
    %v3167 = vpack.c.b16 %v3111, %v3110
    %v3168 = vpack.c.b16 %v3113, %v3112
    %v3169 = vpack.c.b16 %v3115, %v3114
    %v3170 = vpack.c.b16 %v3117, %v3116
    %v3171 = vpack.c.b16 %v3119, %v3118
    %v3172 = vpack.c.b16 %v3121, %v3120
    %v3173 = vpack.c.b16 %v3123, %v3122
    %v3174 = vpack.c.b16 %v3125, %v3124
    %v3175 = vpack.c.b16 %v3127, %v3126
    %v3176 = vpack.c.b16 %v3129, %v3128
    %v3177 = vpack.c.b16 %v3131, %v3130
    %v3178 = vpack.c.b16 %v3133, %v3132
    %v3179 = vpack.c.b16 %v3135, %v3134
    %v3180 = vpack.c.b16 %v3137, %v3136
    %v3181 = vpack.c.b16 %v3139, %v3138
    %v3182 = vpack.c.b16 %v3141, %v3140
    %v3183 = vpack.c.b16 %v3143, %v3142
    %v3184 = vpack.c.b16 %v3145, %v3144
    %v3185 = vpack.c.b16 %v3147, %v3146
    %v3186 = vpack.c.b16 %v3149, %v3148
    %v3187 = vpack.c.b16 %v3151, %v3150
    %v3188 = vpack.c.b16 %v3153, %v3152
    %v3189 = vpack.c.b16 %v3155, %v3154
    %v3190 = vpack.c.b16 %v3157, %v3156
    %v3191 = vpack.c.b16 %v3159, %v3158
    %3224 = vmatpush.bf16.msra.mxu0 %v3167
    %3225 = vmatpush.bf16.msra.mxu0 %v3166
    %3226 = vmatpush.bf16.msra.mxu0 %v3165
    %3227 = vmatpush.bf16.msra.mxu0 %v3164
    %3228 = vmatpush.bf16.msra.mxu0 %v3163
    %3229 = vmatpush.bf16.msra.mxu0 %v3162
    %3230 = vmatpush.bf16.msra.mxu0 %v3161
    %3231 = vmatpush.bf16.msra.mxu0 %v3160
    %3232 = vmatmul.bf16.gmra.mxu0 %v2960
    %v3233 = vpop.f32.mrf.mxu0
    %v3234 = vadd.f32 %v3030, %v3233
    %v3235 = vpop.f32.mrf.mxu0
    %v3236 = vadd.f32 %v3030, %v3235
    %3237 = vdwg.mxu0
    %3238 = vmatpush.bf16.msra.mxu0 %v3175
    %3239 = vmatpush.bf16.msra.mxu0 %v3174
    %3240 = vmatpush.bf16.msra.mxu0 %v3173
    %3241 = vmatpush.bf16.msra.mxu0 %v3172
    %3242 = vmatpush.bf16.msra.mxu0 %v3171
    %3243 = vmatpush.bf16.msra.mxu0 %v3170
    %3244 = vmatpush.bf16.msra.mxu0 %v3169
    %3245 = vmatpush.bf16.msra.mxu0 %v3168
    %3246 = vmatmul.bf16.gmra.mxu0 %v2961
    %v3247 = vpop.f32.mrf.mxu0
    %v3248 = vadd.f32 %v3234, %v3247
    %v3249 = vpop.f32.mrf.mxu0
    %v3250 = vadd.f32 %v3236, %v3249
    %3251 = vdwg.mxu0
    %3252 = vmatpush.bf16.msra.mxu0 %v3183
    %3253 = vmatpush.bf16.msra.mxu0 %v3182
    %3254 = vmatpush.bf16.msra.mxu0 %v3181
    %3255 = vmatpush.bf16.msra.mxu0 %v3180
    %3256 = vmatpush.bf16.msra.mxu0 %v3179
    %3257 = vmatpush.bf16.msra.mxu0 %v3178
    %3258 = vmatpush.bf16.msra.mxu0 %v3177
    %3259 = vmatpush.bf16.msra.mxu0 %v3176
    %3260 = vmatmul.bf16.gmra.mxu0 %v2962
    %v3261 = vpop.f32.mrf.mxu0
    %v3262 = vadd.f32 %v3248, %v3261
    %v3263 = vpop.f32.mrf.mxu0
    %v3264 = vadd.f32 %v3250, %v3263
    %3265 = vdwg.mxu0
    %3266 = vmatpush.bf16.msra.mxu0 %v3191
    %3267 = vmatpush.bf16.msra.mxu0 %v3190
    %3268 = vmatpush.bf16.msra.mxu0 %v3189
    %3269 = vmatpush.bf16.msra.mxu0 %v3188
    %3270 = vmatpush.bf16.msra.mxu0 %v3187
    %3271 = vmatpush.bf16.msra.mxu0 %v3186
    %3272 = vmatpush.bf16.msra.mxu0 %v3185
    %3273 = vmatpush.bf16.msra.mxu0 %v3184
    %3274 = vmatmul.bf16.gmra.mxu0 %v2963
    %v3275 = vpop.f32.mrf.mxu0
    %v3276 = vadd.f32 %v3262, %v3275
    %v3277 = vpop.f32.mrf.mxu0
    %v3278 = vadd.f32 %v3264, %v3277
    %3279 = vdwg.mxu0
    %3280 = vst [vmem:[%s7] sm:$0xff] %v3276
    %3281 = vst [vmem:[%s7 + $0x8] sm:$0xff] %v3278
    // Predicated region
    $region38: #{_mlp_forward.1} parent=1 // pred_check
      _
    $region39: #{_mlp_forward.1} parent=1 // pred_check_branch
      %3283 = sbr.rel (0) target = $region41
    $region40: #{_mlp_forward.1} parent=1 // pred_region
      _
    $region41: #{_mlp_forward.1} parent=1 // pred_fallthru
      _
    // Predicated region
    $region42: #{_mlp_forward.1} parent=1 // pred_check
      _
    $region43: #{_mlp_forward.1} parent=1 // pred_check_branch
      %3285 = sbr.rel (0) target = $region45
    $region44: #{_mlp_forward.1} parent=1 // pred_region
      _
    $region45: #{_mlp_forward.1} parent=1 // pred_fallthru
      _
    %3286 = vsyncpa [#allocation3], 1
    %3287 = vsyncpa [#allocation5], 1

// kernel: _mlp_forward.1
$region0: #{_mlp_forward.1}
  #allocation0 [shape = 'u32[]', space=smem, size = 0x4, offset = 0x4, fixed_abs, tag = 'smem constant byte address 0x4 - core index']
  #allocation1 [shape = 'u32[72,128]{1,0:T(1,128)}', space=vmem, size = 0x9000, scoped, tag = 'internal scratch']
  %s0 = inlined_call_operand.vmem [shape: bf16[16,896], index: 0, kind: input, shape index: {}]
  %s1 = inlined_call_operand.hbm [shape: bf16[896,512], index: 1, kind: input, shape index: {}]
  %s2 = inlined_call_operand.vmem [shape: bf16[1,512], index: 2, kind: input, shape index: {}]
  %s3 = inlined_call_operand.hbm [shape: bf16[512,512], index: 3, kind: input, shape index: {}]
  %s4 = inlined_call_operand.vmem [shape: bf16[1,512], index: 4, kind: input, shape index: {}]
  %s5 = inlined_call_operand.vmem [shape: bf16[512,128], index: 5, kind: input, shape index: {}]
  %s6 = inlined_call_operand.vmem [shape: f32[1,128], index: 6, kind: input, shape index: {}]
  %s7 = inlined_call_operand.vmem [shape: f32[16,128], index: 7, kind: output, shape index: {}]
  %s8 = sld [smem:[#allocation0]]
  $region46: #{_mlp_forward.1} parent=0
    _
  %s10 = ssub.s32 1, %s8
  %s11 = scalar_select 0, %s10, %s8
  $region1: #{_mlp_forward.1} parent=0
    #allocation2 [shape = 'u8[917504]{0}', space=vmem, size = 0xe0000, scoped, tag = 'input window, operand 1, single buffered']
    #allocation3 [shape = 's32[1]{0}', space=sflag, size = 0x4, scoped, tag = 'scoped memory for _mlp_forward.1']
    #allocation4 [shape = 'u8[524288]{0}', space=vmem, size = 0x80000, scoped, tag = 'input window, operand 3, single buffered']
    #allocation5 [shape = 's32[1]{0}', space=sflag, size = 0x4, scoped, tag = 'scoped memory for _mlp_forward.1']
    %12 = vsyncpa [#allocation3], 0
    %13 = vsyncpa [#allocation5], 0
    // Predicated region
    $region2: #{_mlp_forward.1} parent=1 // pred_check
      _
    $region3: #{_mlp_forward.1} parent=1 // pred_check_branch
      %15 = sbr.rel (0) target = $region5
    $region4: #{_mlp_forward.1} parent=1 // pred_region
      _
    $region5: #{_mlp_forward.1} parent=1 // pred_fallthru
      _
    // Predicated region
    $region6: #{_mlp_forward.1} parent=1 // pred_check
      _
    $region7: #{_mlp_forward.1} parent=1 // pred_check_branch
      %17 = sbr.rel (0) target = $region9
    $region8: #{_mlp_forward.1} parent=1 // pred_region
      %19 = vsyncadd [#allocation3], 0
      %s20 = sshll.u32 %s1, 4
      %s21 = int_to_ptr.hbm [resolvable:$true] %s20
      %s22 = sshll.u32 [#allocation2], 4
      %s23 = int_to_ptr.vmem [resolvable:$true] %s22
      %28 = dma.hbm_to_vmem [thread:$0]  %s21, 28672, %s23, [#allocation3], 256, 256, 16
    $region9: #{_mlp_forward.1} parent=1 // pred_fallthru
      _
    // Predicated region
    $region10: #{_mlp_forward.1} parent=1 // pred_check
      _
    $region11: #{_mlp_forward.1} parent=1 // pred_check_branch
      %30 = sbr.rel (0) target = $region13
    $region12: #{_mlp_forward.1} parent=1 // pred_region
      _
    $region13: #{_mlp_forward.1} parent=1 // pred_fallthru
      _
    // Predicated region
    $region14: #{_mlp_forward.1} parent=1 // pred_check
      _
    $region15: #{_mlp_forward.1} parent=1 // pred_check_branch
      %32 = sbr.rel (0) target = $region17
    $region16: #{_mlp_forward.1} parent=1 // pred_region
      %34 = vsyncadd [#allocation5], 0
      %s35 = sshll.u32 %s3, 4
      %s36 = int_to_ptr.hbm [resolvable:$true] %s35
      %s37 = sshll.u32 [#allocation4], 4
      %s38 = int_to_ptr.vmem [resolvable:$true] %s37
      %43 = dma.hbm_to_vmem [thread:$0]  %s36, 16384, %s38, [#allocation5], 256, 256, 16
    $region17: #{_mlp_forward.1} parent=1 // pred_fallthru
      _
    // Predicated region
    $region18: #{_mlp_forward.1} parent=1 // pred_check
      _
    $region19: #{_mlp_forward.1} parent=1 // pred_check_branch
      %45 = sbr.rel (0) target = $region21
    $region20: #{_mlp_forward.1} parent=1 // pred_region
      _
    $region21: #{_mlp_forward.1} parent=1 // pred_fallthru
      _
    // Predicated region
    $region22: #{_mlp_forward.1} parent=1 // pred_check
      _
    $region23: #{_mlp_forward.1} parent=1 // pred_check_branch
      %47 = sbr.rel (0) target = $region25
    $region24: #{_mlp_forward.1} parent=1 // pred_region
      _
    $region25: #{_mlp_forward.1} parent=1 // pred_fallthru
      _
    // Predicated region
    $region26: #{_mlp_forward.1} parent=1 // pred_check
      _
    $region27: #{_mlp_forward.1} parent=1 // pred_check_branch
      %49 = sbr.rel (0) target = $region29
    $region28: #{_mlp_forward.1} parent=1 // pred_region
      _
    $region29: #{_mlp_forward.1} parent=1 // pred_fallthru
      _
    // Predicated region
    $region30: #{_mlp_forward.1} parent=1 // pred_check
      _
    $region31: #{_mlp_forward.1} parent=1 // pred_check_branch
      %51 = sbr.rel (0) target = $region33
    $region32: #{_mlp_forward.1} parent=1 // pred_region
      %53 = dma.done [#allocation3], 28672
    $region33: #{_mlp_forward.1} parent=1 // pred_fallthru
      _
    // Predicated region
    $region34: #{_mlp_forward.1} parent=1 // pred_check
      _
    $region35: #{_mlp_forward.1} parent=1 // pred_check_branch
      %55 = sbr.rel (0) target = $region37
    $region36: #{_mlp_forward.1} parent=1 // pred_region
      %57 = dma.done [#allocation5], 16384
    $region37: #{_mlp_forward.1} parent=1 // pred_fallthru
      _
    %v58 = vld [vmem:[%s0] sm:$0xff]
    %v59 = vld [vmem:[%s0 + $0x8] sm:$0xff]
    %v60 = vld [vmem:[%s0 + $0x10] sm:$0xff]
    %v61 = vld [vmem:[%s0 + $0x18] sm:$0xf]
    %v62 = vld [vmem:[%s0 + $0x1c] sm:$0xff]
    %v63 = vld [vmem:[%s0 + $0x24] sm:$0xff]
    %v64 = vld [vmem:[%s0 + $0x2c] sm:$0xff]
    %v65 = vld [vmem:[%s0 + $0x34] sm:$0xf]
    %v66 = vld [vmem:[#allocation2] sm:$0xff]
    %v67 = vld [vmem:[#allocation2 + $0x8] sm:$0xff]
    %v68 = vld [vmem:[#allocation2 + $0x10] sm:$0xff]
    %v69 = vld [vmem:[#allocation2 + $0x18] sm:$0xff]
    %v70 = vld [vmem:[#allocation2 + $0x20] sm:$0xff]
    %v71 = vld [vmem:[#allocation2 + $0x28] sm:$0xff]
    %v72 = vld [vmem:[#allocation2 + $0x30] sm:$0xff]
    %v73 = vld [vmem:[#allocation2 + $0x38] sm:$0xff]
    %v74 = vld [vmem:[#allocation2 + $0x40] sm:$0xff]
    %v75 = vld [vmem:[#allocation2 + $0x48] sm:$0xff]
    %v76 = vld [vmem:[#allocation2 + $0x50] sm:$0xff]
    %v77 = vld [vmem:[#allocation2 + $0x58] sm:$0xff]
    %v78 = vld [vmem:[#allocation2 + $0x60] sm:$0xff]
    %v79 = vld [vmem:[#allocation2 + $0x68] sm:$0xff]
    %v80 = vld [vmem:[#allocation2 + $0x70] sm:$0xff]
    %v81 = vld [vmem:[#allocation2 + $0x78] sm:$0xff]
    %v82 = vld [vmem:[#allocation2 + $0x80] sm:$0xff]
    %v83 = vld [vmem:[#allocation2 + $0x88] sm:$0xff]
    %v84 = vld [vmem:[#allocation2 + $0x90] sm:$0xff]
    %v85 = vld [vmem:[#allocation2 + $0x98] sm:$0xff]
    %v86 = vld [vmem:[#allocation2 + $0xa0] sm:$0xff]
    %v87 = vld [vmem:[#allocation2 + $0xa8] sm:$0xff]
    %v88 = vld [vmem:[#allocation2 + $0xb0] sm:$0xff]
    %v89 = vld [vmem:[#allocation2 + $0xb8] sm:$0xff]
    %v90 = vld [vmem:[#allocation2 + $0xc0] sm:$0xff]
    %v91 = vld [vmem:[#allocation2 + $0xc8] sm:$0xff]
    %v92 = vld [vmem:[#allocation2 + $0xd0] sm:$0xff]
    %v93 = vld [vmem:[#allocation2 + $0xd8] sm:$0xff]
    %v94 = vld [vmem:[#allocation2 + $0xe0] sm:$0xff]
    %v95 = vld [vmem:[#allocation2 + $0xe8] sm:$0xff]
    %v96 = vld [vmem:[#allocation2 + $0xf0] sm:$0xff]
    %v97 = vld [vmem:[#allocation2 + $0xf8] sm:$0xff]
    %v98 = vld [vmem:[#allocation2 + $0x100] sm:$0xff]
    %v99 = vld [vmem:[#allocation2 + $0x108] sm:$0xff]
    %v100 = vld [vmem:[#allocation2 + $0x110] sm:$0xff]
    %v101 = vld [vmem:[#allocation2 + $0x118] sm:$0xff]
    %v102 = vld [vmem:[#allocation2 + $0x120] sm:$0xff]
    %v103 = vld [vmem:[#allocation2 + $0x128] sm:$0xff]
    %v104 = vld [vmem:[#allocation2 + $0x130] sm:$0xff]
    %v105 = vld [vmem:[#allocation2 + $0x138] sm:$0xff]
    %v106 = vld [vmem:[#allocation2 + $0x140] sm:$0xff]
    %v107 = vld [vmem:[#allocation2 + $0x148] sm:$0xff]
    %v108 = vld [vmem:[#allocation2 + $0x150] sm:$0xff]
    %v109 = vld [vmem:[#allocation2 + $0x158] sm:$0xff]
    %v110 = vld [vmem:[#allocation2 + $0x160] sm:$0xff]
    %v111 = vld [vmem:[#allocation2 + $0x168] sm:$0xff]
    %v112 = vld [vmem:[#allocation2 + $0x170] sm:$0xff]
    %v113 = vld [vmem:[#allocation2 + $0x178] sm:$0xff]
    %v114 = vld [vmem:[#allocation2 + $0x180] sm:$0xff]
    %v115 = vld [vmem:[#allocation2 + $0x188] sm:$0xff]
    %v116 = vld [vmem:[#allocation2 + $0x190] sm:$0xff]
    %v117 = vld [vmem:[#allocation2 + $0x198] sm:$0xff]
    %v118 = vld [vmem:[#allocation2 + $0x1a0] sm:$0xff]
    %v119 = vld [vmem:[#allocation2 + $0x1a8] sm:$0xff]
    %v120 = vld [vmem:[#allocation2 + $0x1b0] sm:$0xff]
    %v121 = vld [vmem:[#allocation2 + $0x1b8] sm:$0xff]
    %v122 = vld [vmem:[#allocation2 + $0x1c0] sm:$0xff]
    %v123 = vld [vmem:[#allocation2 + $0x1c8] sm:$0xff]
    %v124 = vld [vmem:[#allocation2 + $0x1d0] sm:$0xff]
    %v125 = vld [vmem:[#allocation2 + $0x1d8] sm:$0xff]
    %v126 = vld [vmem:[#allocation2 + $0x1e0] sm:$0xff]
    %v127 = vld [vmem:[#allocation2 + $0x1e8] sm:$0xff]
    %v128 = vld [vmem:[#allocation2 + $0x1f0] sm:$0xff]
    %v129 = vld [vmem:[#allocation2 + $0x1f8] sm:$0xff]
    %v130 = vld [vmem:[#allocation2 + $0x200] sm:$0xff]
    %v131 = vld [vmem:[#allocation2 + $0x208] sm:$0xff]
    %v132 = vld [vmem:[#allocation2 + $0x210] sm:$0xff]
    %v133 = vld [vmem:[#allocation2 + $0x218] sm:$0xff]
    %v134 = vld [vmem:[#allocation2 + $0x220] sm:$0xff]
    %v135 = vld [vmem:[#allocation2 + $0x228] sm:$0xff]
    %v136 = vld [vmem:[#allocation2 + $0x230] sm:$0xff]
    %v137 = vld [vmem:[#allocation2 + $0x238] sm:$0xff]
    %v138 = vld [vmem:[#allocation2 + $0x240] sm:$0xff]
    %v139 = vld [vmem:[#allocation2 + $0x248] sm:$0xff]
    %v140 = vld [vmem:[#allocation2 + $0x250] sm:$0xff]
    %v141 = vld [vmem:[#allocation2 + $0x258] sm:$0xff]
    %v142 = vld [vmem:[#allocation2 + $0x260] sm:$0xff]
    %v143 = vld [vmem:[#allocation2 + $0x268] sm:$0xff]
    %v144 = vld [vmem:[#allocation2 + $0x270] sm:$0xff]
    %v145 = vld [vmem:[#allocation2 + $0x278] sm:$0xff]
    %v146 = vld [vmem:[#allocation2 + $0x280] sm:$0xff]
    %v147 = vld [vmem:[#allocation2 + $0x288] sm:$0xff]
    %v148 = vld [vmem:[#allocation2 + $0x290] sm:$0xff]
    %v149 = vld [vmem:[#allocation2 + $0x298] sm:$0xff]
    %v150 = vld [vmem:[#allocation2 + $0x2a0] sm:$0xff]
    %v151 = vld [vmem:[#allocation2 + $0x2a8] sm:$0xff]
    %v152 = vld [vmem:[#allocation2 + $0x2b0] sm:$0xff]
    %v153 = vld [vmem:[#allocation2 + $0x2b8] sm:$0xff]
    %v154 = vld [vmem:[#allocation2 + $0x2c0] sm:$0xff]
    %v155 = vld [vmem:[#allocation2 + $0x2c8] sm:$0xff]
    %v156 = vld [vmem:[#allocation2 + $0x2d0] sm:$0xff]
    %v157 = vld [vmem:[#allocation2 + $0x2d8] sm:$0xff]
    %v158 = vld [vmem:[#allocation2 + $0x2e0] sm:$0xff]
    %v159 = vld [vmem:[#allocation2 + $0x2e8] sm:$0xff]
    %v160 = vld [vmem:[#allocation2 + $0x2f0] sm:$0xff]
    %v161 = vld [vmem:[#allocation2 + $0x2f8] sm:$0xff]
    %v162 = vld [vmem:[#allocation2 + $0x300] sm:$0xff]
    %v163 = vld [vmem:[#allocation2 + $0x308] sm:$0xff]
    %v164 = vld [vmem:[#allocation2 + $0x310] sm:$0xff]
    %v165 = vld [vmem:[#allocation2 + $0x318] sm:$0xff]
    %v166 = vld [vmem:[#allocation2 + $0x320] sm:$0xff]
    %v167 = vld [vmem:[#allocation2 + $0x328] sm:$0xff]
    %v168 = vld [vmem:[#allocation2 + $0x330] sm:$0xff]
    %v169 = vld [vmem:[#allocation2 + $0x338] sm:$0xff]
    %v170 = vld [vmem:[#allocation2 + $0x340] sm:$0xff]
    %v171 = vld [vmem:[#allocation2 + $0x348] sm:$0xff]
    %v172 = vld [vmem:[#allocation2 + $0x350] sm:$0xff]
    %v173 = vld [vmem:[#allocation2 + $0x358] sm:$0xff]
    %v174 = vld [vmem:[#allocation2 + $0x360] sm:$0xff]
    %v175 = vld [vmem:[#allocation2 + $0x368] sm:$0xff]
    %v176 = vld [vmem:[#allocation2 + $0x370] sm:$0xff]
    %v177 = vld [vmem:[#allocation2 + $0x378] sm:$0xff]
    %v178 = vld [vmem:[#allocation2 + $0x380] sm:$0xff]
    %v179 = vld [vmem:[#allocation2 + $0x388] sm:$0xff]
    %v180 = vld [vmem:[#allocation2 + $0x390] sm:$0xff]
    %v181 = vld [vmem:[#allocation2 + $0x398] sm:$0xff]
    %v182 = vld [vmem:[#allocation2 + $0x3a0] sm:$0xff]
    %v183 = vld [vmem:[#allocation2 + $0x3a8] sm:$0xff]
    %v184 = vld [vmem:[#allocation2 + $0x3b0] sm:$0xff]
    %v185 = vld [vmem:[#allocation2 + $0x3b8] sm:$0xff]
    %v186 = vld [vmem:[#allocation2 + $0x3c0] sm:$0xff]
    %v187 = vld [vmem:[#allocation2 + $0x3c8] sm:$0xff]
    %v188 = vld [vmem:[#allocation2 + $0x3d0] sm:$0xff]
    %v189 = vld [vmem:[#allocation2 + $0x3d8] sm:$0xff]
    %v190 = vld [vmem:[#allocation2 + $0x3e0] sm:$0xff]
    %v191 = vld [vmem:[#allocation2 + $0x3e8] sm:$0xff]
    %v192 = vld [vmem:[#allocation2 + $0x3f0] sm:$0xff]
    %v193 = vld [vmem:[#allocation2 + $0x3f8] sm:$0xff]
    %v194 = vld [vmem:[#allocation2 + $0x400] sm:$0xff]
    %v195 = vld [vmem:[#allocation2 + $0x408] sm:$0xff]
    %v196 = vld [vmem:[#allocation2 + $0x410] sm:$0xff]
    %v197 = vld [vmem:[#allocation2 + $0x418] sm:$0xff]
    %v198 = vld [vmem:[#allocation2 + $0x420] sm:$0xff]
    %v199 = vld [vmem:[#allocation2 + $0x428] sm:$0xff]
    %v200 = vld [vmem:[#allocation2 + $0x430] sm:$0xff]
    %v201 = vld [vmem:[#allocation2 + $0x438] sm:$0xff]
    %v202 = vld [vmem:[#allocation2 + $0x440] sm:$0xff]
    %v203 = vld [vmem:[#allocation2 + $0x448] sm:$0xff]
    %v204 = vld [vmem:[#allocation2 + $0x450] sm:$0xff]
    %v205 = vld [vmem:[#allocation2 + $0x458] sm:$0xff]
    %v206 = vld [vmem:[#allocation2 + $0x460] sm:$0xff]
    %v207 = vld [vmem:[#allocation2 + $0x468] sm:$0xff]
    %v208 = vld [vmem:[#allocation2 + $0x470] sm:$0xff]
    %v209 = vld [vmem:[#allocation2 + $0x478] sm:$0xff]
    %v210 = vld [vmem:[#allocation2 + $0x480] sm:$0xff]
    %v211 = vld [vmem:[#allocation2 + $0x488] sm:$0xff]
    %v212 = vld [vmem:[#allocation2 + $0x490] sm:$0xff]
    %v213 = vld [vmem:[#allocation2 + $0x498] sm:$0xff]
    %v214 = vld [vmem:[#allocation2 + $0x4a0] sm:$0xff]
    %v215 = vld [vmem:[#allocation2 + $0x4a8] sm:$0xff]
    %v216 = vld [vmem:[#allocation2 + $0x4b0] sm:$0xff]
    %v217 = vld [vmem:[#allocation2 + $0x4b8] sm:$0xff]
    %v218 = vld [vmem:[#allocation2 + $0x4c0] sm:$0xff]
    %v219 = vld [vmem:[#allocation2 + $0x4c8] sm:$0xff]
    %v220 = vld [vmem:[#allocation2 + $0x4d0] sm:$0xff]
    %v221 = vld [vmem:[#allocation2 + $0x4d8] sm:$0xff]
    %v222 = vld [vmem:[#allocation2 + $0x4e0] sm:$0xff]
    %v223 = vld [vmem:[#allocation2 + $0x4e8] sm:$0xff]
    %v224 = vld [vmem:[#allocation2 + $0x4f0] sm:$0xff]
    %v225 = vld [vmem:[#allocation2 + $0x4f8] sm:$0xff]
    %v226 = vld [vmem:[#allocation2 + $0x500] sm:$0xff]
    %v227 = vld [vmem:[#allocation2 + $0x508] sm:$0xff]
    %v228 = vld [vmem:[#allocation2 + $0x510] sm:$0xff]
    %v229 = vld [vmem:[#allocation2 + $0x518] sm:$0xff]
    %v230 = vld [vmem:[#allocation2 + $0x520] sm:$0xff]
    %v231 = vld [vmem:[#allocation2 + $0x528] sm:$0xff]
    %v232 = vld [vmem:[#allocation2 + $0x530] sm:$0xff]
    %v233 = vld [vmem:[#allocation2 + $0x538] sm:$0xff]
    %v234 = vld [vmem:[#allocation2 + $0x540] sm:$0xff]
    %v235 = vld [vmem:[#allocation2 + $0x548] sm:$0xff]
    %v236 = vld [vmem:[#allocation2 + $0x550] sm:$0xff]
    %v237 = vld [vmem:[#allocation2 + $0x558] sm:$0xff]
    %v238 = vld [vmem:[#allocation2 + $0x560] sm:$0xff]
    %v239 = vld [vmem:[#allocation2 + $0x568] sm:$0xff]
    %v240 = vld [vmem:[#allocation2 + $0x570] sm:$0xff]
    %v241 = vld [vmem:[#allocation2 + $0x578] sm:$0xff]
    %v242 = vld [vmem:[#allocation2 + $0x580] sm:$0xff]
    %v243 = vld [vmem:[#allocation2 + $0x588] sm:$0xff]
    %v244 = vld [vmem:[#allocation2 + $0x590] sm:$0xff]
    %v245 = vld [vmem:[#allocation2 + $0x598] sm:$0xff]
    %v246 = vld [vmem:[#allocation2 + $0x5a0] sm:$0xff]
    %v247 = vld [vmem:[#allocation2 + $0x5a8] sm:$0xff]
    %v248 = vld [vmem:[#allocation2 + $0x5b0] sm:$0xff]
    %v249 = vld [vmem:[#allocation2 + $0x5b8] sm:$0xff]
    %v250 = vld [vmem:[#allocation2 + $0x5c0] sm:$0xff]
    %v251 = vld [vmem:[#allocation2 + $0x5c8] sm:$0xff]
    %v252 = vld [vmem:[#allocation2 + $0x5d0] sm:$0xff]
    %v253 = vld [vmem:[#allocation2 + $0x5d8] sm:$0xff]
    %v254 = vld [vmem:[#allocation2 + $0x5e0] sm:$0xff]
    %v255 = vld [vmem:[#allocation2 + $0x5e8] sm:$0xff]
    %v256 = vld [vmem:[#allocation2 + $0x5f0] sm:$0xff]
    %v257 = vld [vmem:[#allocation2 + $0x5f8] sm:$0xff]
    %v258 = vld [vmem:[#allocation2 + $0x600] sm:$0xff]
    %v259 = vld [vmem:[#allocation2 + $0x608] sm:$0xff]
    %v260 = vld [vmem:[#allocation2 + $0x610] sm:$0xff]
    %v261 = vld [vmem:[#allocation2 + $0x618] sm:$0xff]
    %v262 = vld [vmem:[#allocation2 + $0x620] sm:$0xff]
    %v263 = vld [vmem:[#allocation2 + $0x628] sm:$0xff]
    %v264 = vld [vmem:[#allocation2 + $0x630] sm:$0xff]
    %v265 = vld [vmem:[#allocation2 + $0x638] sm:$0xff]
    %v266 = vld [vmem:[#allocation2 + $0x640] sm:$0xff]
    %v267 = vld [vmem:[#allocation2 + $0x648] sm:$0xff]
    %v268 = vld [vmem:[#allocation2 + $0x650] sm:$0xff]
    %v269 = vld [vmem:[#allocation2 + $0x658] sm:$0xff]
    %v270 = vld [vmem:[#allocation2 + $0x660] sm:$0xff]
    %v271 = vld [vmem:[#allocation2 + $0x668] sm:$0xff]
    %v272 = vld [vmem:[#allocation2 + $0x670] sm:$0xff]
    %v273 = vld [vmem:[#allocation2 + $0x678] sm:$0xff]
    %v274 = vld [vmem:[#allocation2 + $0x680] sm:$0xff]
    %v275 = vld [vmem:[#allocation2 + $0x688] sm:$0xff]
    %v276 = vld [vmem:[#allocation2 + $0x690] sm:$0xff]
    %v277 = vld [vmem:[#allocation2 + $0x698] sm:$0xff]
    %v278 = vld [vmem:[#allocation2 + $0x6a0] sm:$0xff]
    %v279 = vld [vmem:[#allocation2 + $0x6a8] sm:$0xff]
    %v280 = vld [vmem:[#allocation2 + $0x6b0] sm:$0xff]
    %v281 = vld [vmem:[#allocation2 + $0x6b8] sm:$0xff]
    %v282 = vld [vmem:[#allocation2 + $0x6c0] sm:$0xff]
    %v283 = vld [vmem:[#allocation2 + $0x6c8] sm:$0xff]
    %v284 = vld [vmem:[#allocation2 + $0x6d0] sm:$0xff]
    %v285 = vld [vmem:[#allocation2 + $0x6d8] sm:$0xff]
    %v286 = vld [vmem:[#allocation2 + $0x6e0] sm:$0xff]
    %v287 = vld [vmem:[#allocation2 + $0x6e8] sm:$0xff]
    %v288 = vld [vmem:[#allocation2 + $0x6f0] sm:$0xff]
    %v289 = vld [vmem:[#allocation2 + $0x6f8] sm:$0xff]
    %v298 = vunpack.c.l.b16 %v58
    %v299 = vunpack.c.h.b16 %v58
    %v300 = vunpack.c.l.b16 %v59
    %v301 = vunpack.c.h.b16 %v59
    %v302 = vunpack.c.l.b16 %v60
    %v303 = vunpack.c.h.b16 %v60
    %v304 = vunpack.c.l.b16 %v61
    %v305 = vunpack.c.l.b16 %v62
    %v306 = vunpack.c.h.b16 %v62
    %v307 = vunpack.c.l.b16 %v63
    %v308 = vunpack.c.h.b16 %v63
    %v309 = vunpack.c.l.b16 %v64
    %v310 = vunpack.c.h.b16 %v64
    %v311 = vunpack.c.l.b16 %v65
    %v312 = vpack.c.b16 %v305, %v298
    %v313 = vpack.c.b16 %v306, %v299
    %v314 = vpack.c.b16 %v307, %v300
    %v315 = vpack.c.b16 %v308, %v301
    %v316 = vpack.c.b16 %v309, %v302
    %v317 = vpack.c.b16 %v310, %v303
    %v318 = vpack.c.b16 %v311, %v304
    %v550 = vunpack.c.l.b16 %v66
    %v551 = vunpack.c.h.b16 %v66
    %v552 = vunpack.c.l.b16 %v67
    %v553 = vunpack.c.h.b16 %v67
    %v554 = vunpack.c.l.b16 %v68
    %v555 = vunpack.c.h.b16 %v68
    %v556 = vunpack.c.l.b16 %v69
    %v557 = vunpack.c.h.b16 %v69
    %v558 = vunpack.c.l.b16 %v70
    %v559 = vunpack.c.h.b16 %v70
    %v560 = vunpack.c.l.b16 %v71
    %v561 = vunpack.c.h.b16 %v71
    %v562 = vunpack.c.l.b16 %v72
    %v563 = vunpack.c.h.b16 %v72
    %v564 = vunpack.c.l.b16 %v73
    %v565 = vunpack.c.h.b16 %v73
    %v566 = vunpack.c.l.b16 %v74
    %v567 = vunpack.c.h.b16 %v74
    %v568 = vunpack.c.l.b16 %v75
    %v569 = vunpack.c.h.b16 %v75
    %v570 = vunpack.c.l.b16 %v76
    %v571 = vunpack.c.h.b16 %v76
    %v572 = vunpack.c.l.b16 %v77
    %v573 = vunpack.c.h.b16 %v77
    %v574 = vunpack.c.l.b16 %v78
    %v575 = vunpack.c.h.b16 %v78
    %v576 = vunpack.c.l.b16 %v79
    %v577 = vunpack.c.h.b16 %v79
    %v578 = vunpack.c.l.b16 %v80
    %v579 = vunpack.c.h.b16 %v80
    %v580 = vunpack.c.l.b16 %v81
    %v581 = vunpack.c.h.b16 %v81
    %v582 = vunpack.c.l.b16 %v82
    %v583 = vunpack.c.h.b16 %v82
    %v584 = vunpack.c.l.b16 %v83
    %v585 = vunpack.c.h.b16 %v83
    %v586 = vunpack.c.l.b16 %v84
    %v587 = vunpack.c.h.b16 %v84
    %v588 = vunpack.c.l.b16 %v85
    %v589 = vunpack.c.h.b16 %v85
    %v590 = vunpack.c.l.b16 %v86
    %v591 = vunpack.c.h.b16 %v86
    %v592 = vunpack.c.l.b16 %v87
    %v593 = vunpack.c.h.b16 %v87
    %v594 = vunpack.c.l.b16 %v88
    %v595 = vunpack.c.h.b16 %v88
    %v596 = vunpack.c.l.b16 %v89
    %v597 = vunpack.c.h.b16 %v89
    %v598 = vunpack.c.l.b16 %v90
    %v599 = vunpack.c.h.b16 %v90
    %v600 = vunpack.c.l.b16 %v91
    %v601 = vunpack.c.h.b16 %v91
    %v602 = vunpack.c.l.b16 %v92
    %v603 = vunpack.c.h.b16 %v92
    %v604 = vunpack.c.l.b16 %v93
    %v605 = vunpack.c.h.b16 %v93
    %v606 = vunpack.c.l.b16 %v94
    %v607 = vunpack.c.h.b16 %v94
    %v608 = vunpack.c.l.b16 %v95
    %v609 = vunpack.c.h.b16 %v95
    %v610 = vunpack.c.l.b16 %v96
    %v611 = vunpack.c.h.b16 %v96
    %v612 = vunpack.c.l.b16 %v97
    %v613 = vunpack.c.h.b16 %v97
    %v614 = vunpack.c.l.b16 %v98
    %v615 = vunpack.c.h.b16 %v98
    %v616 = vunpack.c.l.b16 %v99
    %v617 = vunpack.c.h.b16 %v99
    %v618 = vunpack.c.l.b16 %v100
    %v619 = vunpack.c.h.b16 %v100
    %v620 = vunpack.c.l.b16 %v101
    %v621 = vunpack.c.h.b16 %v101
    %v622 = vunpack.c.l.b16 %v102
    %v623 = vunpack.c.h.b16 %v102
    %v624 = vunpack.c.l.b16 %v103
    %v625 = vunpack.c.h.b16 %v103
    %v626 = vunpack.c.l.b16 %v104
    %v627 = vunpack.c.h.b16 %v104
    %v628 = vunpack.c.l.b16 %v105
    %v629 = vunpack.c.h.b16 %v105
    %v630 = vunpack.c.l.b16 %v106
    %v631 = vunpack.c.h.b16 %v106
    %v632 = vunpack.c.l.b16 %v107
    %v633 = vunpack.c.h.b16 %v107
    %v634 = vunpack.c.l.b16 %v108
    %v635 = vunpack.c.h.b16 %v108
    %v636 = vunpack.c.l.b16 %v109
    %v637 = vunpack.c.h.b16 %v109
    %v638 = vunpack.c.l.b16 %v110
    %v639 = vunpack.c.h.b16 %v110
    %v640 = vunpack.c.l.b16 %v111
    %v641 = vunpack.c.h.b16 %v111
    %v642 = vunpack.c.l.b16 %v112
    %v643 = vunpack.c.h.b16 %v112
    %v644 = vunpack.c.l.b16 %v113
    %v645 = vunpack.c.h.b16 %v113
    %v646 = vunpack.c.l.b16 %v114
    %v647 = vunpack.c.h.b16 %v114
    %v648 = vunpack.c.l.b16 %v115
    %v649 = vunpack.c.h.b16 %v115
    %v650 = vunpack.c.l.b16 %v116
    %v651 = vunpack.c.h.b16 %v116
    %v652 = vunpack.c.l.b16 %v117
    %v653 = vunpack.c.h.b16 %v117
    %v654 = vunpack.c.l.b16 %v118
    %v655 = vunpack.c.h.b16 %v118
    %v656 = vunpack.c.l.b16 %v119
    %v657 = vunpack.c.h.b16 %v119
    %v658 = vunpack.c.l.b16 %v120
    %v659 = vunpack.c.h.b16 %v120
    %v660 = vunpack.c.l.b16 %v121
    %v661 = vunpack.c.h.b16 %v121
    %v662 = vunpack.c.l.b16 %v122
    %v663 = vunpack.c.h.b16 %v122
    %v664 = vunpack.c.l.b16 %v123
    %v665 = vunpack.c.h.b16 %v123
    %v666 = vunpack.c.l.b16 %v124
    %v667 = vunpack.c.h.b16 %v124
    %v668 = vunpack.c.l.b16 %v125
    %v669 = vunpack.c.h.b16 %v125
    %v670 = vunpack.c.l.b16 %v126
    %v671 = vunpack.c.h.b16 %v126
    %v672 = vunpack.c.l.b16 %v127
    %v673 = vunpack.c.h.b16 %v127
    %v674 = vunpack.c.l.b16 %v128
    %v675 = vunpack.c.h.b16 %v128
    %v676 = vunpack.c.l.b16 %v129
    %v677 = vunpack.c.h.b16 %v129
    %v678 = vunpack.c.l.b16 %v130
    %v679 = vunpack.c.h.b16 %v130
    %v680 = vunpack.c.l.b16 %v131
    %v681 = vunpack.c.h.b16 %v131
    %v682 = vunpack.c.l.b16 %v132
    %v683 = vunpack.c.h.b16 %v132
    %v684 = vunpack.c.l.b16 %v133
    %v685 = vunpack.c.h.b16 %v133
    %v686 = vunpack.c.l.b16 %v134
    %v687 = vunpack.c.h.b16 %v134
    %v688 = vunpack.c.l.b16 %v135
    %v689 = vunpack.c.h.b16 %v135
    %v690 = vunpack.c.l.b16 %v136
    %v691 = vunpack.c.h.b16 %v136
    %v692 = vunpack.c.l.b16 %v137
    %v693 = vunpack.c.h.b16 %v137
    %v694 = vunpack.c.l.b16 %v138
    %v695 = vunpack.c.h.b16 %v138
    %v696 = vunpack.c.l.b16 %v139
    %v697 = vunpack.c.h.b16 %v139
    %v698 = vunpack.c.l.b16 %v140
    %v699 = vunpack.c.h.b16 %v140
    %v700 = vunpack.c.l.b16 %v141
    %v701 = vunpack.c.h.b16 %v141
    %v702 = vunpack.c.l.b16 %v142
    %v703 = vunpack.c.h.b16 %v142
    %v704 = vunpack.c.l.b16 %v143
    %v705 = vunpack.c.h.b16 %v143
    %v706 = vunpack.c.l.b16 %v144
    %v707 = vunpack.c.h.b16 %v144
    %v708 = vunpack.c.l.b16 %v145
    %v709 = vunpack.c.h.b16 %v145
    %v710 = vunpack.c.l.b16 %v146
    %v711 = vunpack.c.h.b16 %v146
    %v712 = vunpack.c.l.b16 %v147
    %v713 = vunpack.c.h.b16 %v147
    %v714 = vunpack.c.l.b16 %v148
    %v715 = vunpack.c.h.b16 %v148
    %v716 = vunpack.c.l.b16 %v149
    %v717 = vunpack.c.h.b16 %v149
    %v718 = vunpack.c.l.b16 %v150
    %v719 = vunpack.c.h.b16 %v150
    %v720 = vunpack.c.l.b16 %v151
    %v721 = vunpack.c.h.b16 %v151
    %v722 = vunpack.c.l.b16 %v152
    %v723 = vunpack.c.h.b16 %v152
    %v724 = vunpack.c.l.b16 %v153
    %v725 = vunpack.c.h.b16 %v153
    %v726 = vunpack.c.l.b16 %v154
    %v727 = vunpack.c.h.b16 %v154
    %v728 = vunpack.c.l.b16 %v155
    %v729 = vunpack.c.h.b16 %v155
    %v730 = vunpack.c.l.b16 %v156
    %v731 = vunpack.c.h.b16 %v156
    %v732 = vunpack.c.l.b16 %v157
    %v733 = vunpack.c.h.b16 %v157
    %v734 = vunpack.c.l.b16 %v158
    %v735 = vunpack.c.h.b16 %v158
    %v736 = vunpack.c.l.b16 %v159
    %v737 = vunpack.c.h.b16 %v159
    %v738 = vunpack.c.l.b16 %v160
    %v739 = vunpack.c.h.b16 %v160
    %v740 = vunpack.c.l.b16 %v161
    %v741 = vunpack.c.h.b16 %v161
    %v742 = vunpack.c.l.b16 %v162
    %v743 = vunpack.c.h.b16 %v162
    %v744 = vunpack.c.l.b16 %v163
    %v745 = vunpack.c.h.b16 %v163
    %v746 = vunpack.c.l.b16 %v164
    %v747 = vunpack.c.h.b16 %v164
    %v748 = vunpack.c.l.b16 %v165
    %v749 = vunpack.c.h.b16 %v165
    %v750 = vunpack.c.l.b16 %v166
    %v751 = vunpack.c.h.b16 %v166
    %v752 = vunpack.c.l.b16 %v167
    %v753 = vunpack.c.h.b16 %v167
    %v754 = vunpack.c.l.b16 %v168
    %v755 = vunpack.c.h.b16 %v168
    %v756 = vunpack.c.l.b16 %v169
    %v757 = vunpack.c.h.b16 %v169
    %v758 = vunpack.c.l.b16 %v170
    %v759 = vunpack.c.h.b16 %v170
    %v760 = vunpack.c.l.b16 %v171
    %v761 = vunpack.c.h.b16 %v171
    %v762 = vunpack.c.l.b16 %v172
    %v763 = vunpack.c.h.b16 %v172
    %v764 = vunpack.c.l.b16 %v173
    %v765 = vunpack.c.h.b16 %v173
    %v766 = vunpack.c.l.b16 %v174
    %v767 = vunpack.c.h.b16 %v174
    %v768 = vunpack.c.l.b16 %v175
    %v769 = vunpack.c.h.b16 %v175
    %v770 = vunpack.c.l.b16 %v176
    %v771 = vunpack.c.h.b16 %v176
    %v772 = vunpack.c.l.b16 %v177
    %v773 = vunpack.c.h.b16 %v177
    %v774 = vunpack.c.l.b16 %v178
    %v775 = vunpack.c.h.b16 %v178
    %v776 = vunpack.c.l.b16 %v179
    %v777 = vunpack.c.h.b16 %v179
    %v778 = vunpack.c.l.b16 %v180
    %v779 = vunpack.c.h.b16 %v180
    %v780 = vunpack.c.l.b16 %v181
    %v781 = vunpack.c.h.b16 %v181
    %v782 = vunpack.c.l.b16 %v182
    %v783 = vunpack.c.h.b16 %v182
    %v784 = vunpack.c.l.b16 %v183
    %v785 = vunpack.c.h.b16 %v183
    %v786 = vunpack.c.l.b16 %v184
    %v787 = vunpack.c.h.b16 %v184
    %v788 = vunpack.c.l.b16 %v185
    %v789 = vunpack.c.h.b16 %v185
    %v790 = vunpack.c.l.b16 %v186
    %v791 = vunpack.c.h.b16 %v186
    %v792 = vunpack.c.l.b16 %v187
    %v793 = vunpack.c.h.b16 %v187
    %v794 = vunpack.c.l.b16 %v188
    %v795 = vunpack.c.h.b16 %v188
    %v796 = vunpack.c.l.b16 %v189
    %v797 = vunpack.c.h.b16 %v189
    %v798 = vunpack.c.l.b16 %v190
    %v799 = vunpack.c.h.b16 %v190
    %v800 = vunpack.c.l.b16 %v191
    %v801 = vunpack.c.h.b16 %v191
    %v802 = vunpack.c.l.b16 %v192
    %v803 = vunpack.c.h.b16 %v192
    %v804 = vunpack.c.l.b16 %v193
    %v805 = vunpack.c.h.b16 %v193
    %v806 = vunpack.c.l.b16 %v194
    %v807 = vunpack.c.h.b16 %v194
    %v808 = vunpack.c.l.b16 %v195
    %v809 = vunpack.c.h.b16 %v195
    %v810 = vunpack.c.l.b16 %v196
    %v811 = vunpack.c.h.b16 %v196
    %v812 = vunpack.c.l.b16 %v197
    %v813 = vunpack.c.h.b16 %v197
    %v814 = vunpack.c.l.b16 %v198
    %v815 = vunpack.c.h.b16 %v198
    %v816 = vunpack.c.l.b16 %v199
    %v817 = vunpack.c.h.b16 %v199
    %v818 = vunpack.c.l.b16 %v200
    %v819 = vunpack.c.h.b16 %v200
    %v820 = vunpack.c.l.b16 %v201
    %v821 = vunpack.c.h.b16 %v201
    %v822 = vunpack.c.l.b16 %v202
    %v823 = vunpack.c.h.b16 %v202
    %v824 = vunpack.c.l.b16 %v203
    %v825 = vunpack.c.h.b16 %v203
    %v826 = vunpack.c.l.b16 %v204
    %v827 = vunpack.c.h.b16 %v204
    %v828 = vunpack.c.l.b16 %v205
    %v829 = vunpack.c.h.b16 %v205
    %v830 = vunpack.c.l.b16 %v206
    %v831 = vunpack.c.h.b16 %v206
    %v832 = vunpack.c.l.b16 %v207
    %v833 = vunpack.c.h.b16 %v207
    %v834 = vunpack.c.l.b16 %v208
    %v835 = vunpack.c.h.b16 %v208
    %v836 = vunpack.c.l.b16 %v209
    %v837 = vunpack.c.h.b16 %v209
    %v838 = vunpack.c.l.b16 %v210
    %v839 = vunpack.c.h.b16 %v210
    %v840 = vunpack.c.l.b16 %v211
    %v841 = vunpack.c.h.b16 %v211
    %v842 = vunpack.c.l.b16 %v212
    %v843 = vunpack.c.h.b16 %v212
    %v844 = vunpack.c.l.b16 %v213
    %v845 = vunpack.c.h.b16 %v213
    %v846 = vunpack.c.l.b16 %v214
    %v847 = vunpack.c.h.b16 %v214
    %v848 = vunpack.c.l.b16 %v215
    %v849 = vunpack.c.h.b16 %v215
    %v850 = vunpack.c.l.b16 %v216
    %v851 = vunpack.c.h.b16 %v216
    %v852 = vunpack.c.l.b16 %v217
    %v853 = vunpack.c.h.b16 %v217
    %v854 = vunpack.c.l.b16 %v218
    %v855 = vunpack.c.h.b16 %v218
    %v856 = vunpack.c.l.b16 %v219
    %v857 = vunpack.c.h.b16 %v219
    %v858 = vunpack.c.l.b16 %v220
    %v859 = vunpack.c.h.b16 %v220
    %v860 = vunpack.c.l.b16 %v221
    %v861 = vunpack.c.h.b16 %v221
    %v862 = vunpack.c.l.b16 %v222
    %v863 = vunpack.c.h.b16 %v222
    %v864 = vunpack.c.l.b16 %v223
    %v865 = vunpack.c.h.b16 %v223
    %v866 = vunpack.c.l.b16 %v224
    %v867 = vunpack.c.h.b16 %v224
    %v868 = vunpack.c.l.b16 %v225
    %v869 = vunpack.c.h.b16 %v225
    %v870 = vunpack.c.l.b16 %v226
    %v871 = vunpack.c.h.b16 %v226
    %v872 = vunpack.c.l.b16 %v227
    %v873 = vunpack.c.h.b16 %v227
    %v874 = vunpack.c.l.b16 %v228
    %v875 = vunpack.c.h.b16 %v228
    %v876 = vunpack.c.l.b16 %v229
    %v877 = vunpack.c.h.b16 %v229
    %v878 = vunpack.c.l.b16 %v230
    %v879 = vunpack.c.h.b16 %v230
    %v880 = vunpack.c.l.b16 %v231
    %v881 = vunpack.c.h.b16 %v231
    %v882 = vunpack.c.l.b16 %v232
    %v883 = vunpack.c.h.b16 %v232
    %v884 = vunpack.c.l.b16 %v233
    %v885 = vunpack.c.h.b16 %v233
    %v886 = vunpack.c.l.b16 %v234
    %v887 = vunpack.c.h.b16 %v234
    %v888 = vunpack.c.l.b16 %v235
    %v889 = vunpack.c.h.b16 %v235
    %v890 = vunpack.c.l.b16 %v236
    %v891 = vunpack.c.h.b16 %v236
    %v892 = vunpack.c.l.b16 %v237
    %v893 = vunpack.c.h.b16 %v237
    %v894 = vunpack.c.l.b16 %v238
    %v895 = vunpack.c.h.b16 %v238
    %v896 = vunpack.c.l.b16 %v239
    %v897 = vunpack.c.h.b16 %v239
    %v898 = vunpack.c.l.b16 %v240
    %v899 = vunpack.c.h.b16 %v240
    %v900 = vunpack.c.l.b16 %v241
    %v901 = vunpack.c.h.b16 %v241
    %v902 = vunpack.c.l.b16 %v242
    %v903 = vunpack.c.h.b16 %v242
    %v904 = vunpack.c.l.b16 %v243
    %v905 = vunpack.c.h.b16 %v243
    %v906 = vunpack.c.l.b16 %v244
    %v907 = vunpack.c.h.b16 %v244
    %v908 = vunpack.c.l.b16 %v245
    %v909 = vunpack.c.h.b16 %v245
    %v910 = vunpack.c.l.b16 %v246
    %v911 = vunpack.c.h.b16 %v246
    %v912 = vunpack.c.l.b16 %v247
    %v913 = vunpack.c.h.b16 %v247
    %v914 = vunpack.c.l.b16 %v248
    %v915 = vunpack.c.h.b16 %v248
    %v916 = vunpack.c.l.b16 %v249
    %v917 = vunpack.c.h.b16 %v249
    %v918 = vunpack.c.l.b16 %v250
    %v919 = vunpack.c.h.b16 %v250
    %v920 = vunpack.c.l.b16 %v251
    %v921 = vunpack.c.h.b16 %v251
    %v922 = vunpack.c.l.b16 %v252
    %v923 = vunpack.c.h.b16 %v252
    %v924 = vunpack.c.l.b16 %v253
    %v925 = vunpack.c.h.b16 %v253
    %v926 = vunpack.c.l.b16 %v254
    %v927 = vunpack.c.h.b16 %v254
    %v928 = vunpack.c.l.b16 %v255
    %v929 = vunpack.c.h.b16 %v255
    %v930 = vunpack.c.l.b16 %v256
    %v931 = vunpack.c.h.b16 %v256
    %v932 = vunpack.c.l.b16 %v257
    %v933 = vunpack.c.h.b16 %v257
    %v934 = vunpack.c.l.b16 %v258
    %v935 = vunpack.c.h.b16 %v258
    %v936 = vunpack.c.l.b16 %v259
    %v937 = vunpack.c.h.b16 %v259
    %v938 = vunpack.c.l.b16 %v260
    %v939 = vunpack.c.h.b16 %v260
    %v940 = vunpack.c.l.b16 %v261
    %v941 = vunpack.c.h.b16 %v261
    %v942 = vunpack.c.l.b16 %v262
    %v943 = vunpack.c.h.b16 %v262
    %v944 = vunpack.c.l.b16 %v263
    %v945 = vunpack.c.h.b16 %v263
    %v946 = vunpack.c.l.b16 %v264
    %v947 = vunpack.c.h.b16 %v264
    %v948 = vunpack.c.l.b16 %v265
    %v949 = vunpack.c.h.b16 %v265
    %v950 = vunpack.c.l.b16 %v266
    %v951 = vunpack.c.h.b16 %v266
    %v952 = vunpack.c.l.b16 %v267
    %v953 = vunpack.c.h.b16 %v267
    %v954 = vunpack.c.l.b16 %v268
    %v955 = vunpack.c.h.b16 %v268
    %v956 = vunpack.c.l.b16 %v269
    %v957 = vunpack.c.h.b16 %v269
    %v958 = vunpack.c.l.b16 %v270
    %v959 = vunpack.c.h.b16 %v270
    %v960 = vunpack.c.l.b16 %v271
    %v961 = vunpack.c.h.b16 %v271
    %v962 = vunpack.c.l.b16 %v272
    %v963 = vunpack.c.h.b16 %v272
    %v964 = vunpack.c.l.b16 %v273
    %v965 = vunpack.c.h.b16 %v273
    %v966 = vunpack.c.l.b16 %v274
    %v967 = vunpack.c.h.b16 %v274
    %v968 = vunpack.c.l.b16 %v275
    %v969 = vunpack.c.h.b16 %v275
    %v970 = vunpack.c.l.b16 %v276
    %v971 = vunpack.c.h.b16 %v276
    %v972 = vunpack.c.l.b16 %v277
    %v973 = vunpack.c.h.b16 %v277
    %v974 = vunpack.c.l.b16 %v278
    %v975 = vunpack.c.h.b16 %v278
    %v976 = vunpack.c.l.b16 %v279
    %v977 = vunpack.c.h.b16 %v279
    %v978 = vunpack.c.l.b16 %v280
    %v979 = vunpack.c.h.b16 %v280
    %v980 = vunpack.c.l.b16 %v281
    %v981 = vunpack.c.h.b16 %v281
    %v982 = vunpack.c.l.b16 %v282
    %v983 = vunpack.c.h.b16 %v282
    %v984 = vunpack.c.l.b16 %v283
    %v985 = vunpack.c.h.b16 %v283
    %v986 = vunpack.c.l.b16 %v284
    %v987 = vunpack.c.h.b16 %v284
    %v988 = vunpack.c.l.b16 %v285
    %v989 = vunpack.c.h.b16 %v285
    %v990 = vunpack.c.l.b16 %v286
    %v991 = vunpack.c.h.b16 %v286
    %v992 = vunpack.c.l.b16 %v287
    %v993 = vunpack.c.h.b16 %v287
    %v994 = vunpack.c.l.b16 %v288
    %v995 = vunpack.c.h.b16 %v288
    %v996 = vunpack.c.l.b16 %v289
    %v997 = vunpack.c.h.b16 %v289
    %v998 = vpack.c.b16 %v554, %v550
    %v999 = vpack.c.b16 %v555, %v551
    %v1000 = vpack.c.b16 %v556, %v552
    %v1001 = vpack.c.b16 %v557, %v553
    %v1002 = vpack.c.b16 %v562, %v558
    %v1003 = vpack.c.b16 %v563, %v559
    %v1004 = vpack.c.b16 %v564, %v560
    %v1005 = vpack.c.b16 %v565, %v561
    %v1006 = vpack.c.b16 %v570, %v566
    %v1007 = vpack.c.b16 %v571, %v567
    %v1008 = vpack.c.b16 %v572, %v568
    %v1009 = vpack.c.b16 %v573, %v569
    %v1010 = vpack.c.b16 %v578, %v574
    %v1011 = vpack.c.b16 %v579, %v575
    %v1012 = vpack.c.b16 %v580, %v576
    %v1013 = vpack.c.b16 %v581, %v577
    %v1014 = vpack.c.b16 %v586, %v582
    %v1015 = vpack.c.b16 %v587, %v583
    %v1016 = vpack.c.b16 %v588, %v584
    %v1017 = vpack.c.b16 %v589, %v585
    %v1018 = vpack.c.b16 %v594, %v590
    %v1019 = vpack.c.b16 %v595, %v591
    %v1020 = vpack.c.b16 %v596, %v592
    %v1021 = vpack.c.b16 %v597, %v593
    %v1022 = vpack.c.b16 %v602, %v598
    %v1023 = vpack.c.b16 %v603, %v599
    %v1024 = vpack.c.b16 %v604, %v600
    %v1025 = vpack.c.b16 %v605, %v601
    %v1026 = vpack.c.b16 %v610, %v606
    %v1027 = vpack.c.b16 %v611, %v607
    %v1028 = vpack.c.b16 %v612, %v608
    %v1029 = vpack.c.b16 %v613, %v609
    %v1030 = vpack.c.b16 %v618, %v614
    %v1031 = vpack.c.b16 %v619, %v615
    %v1032 = vpack.c.b16 %v620, %v616
    %v1033 = vpack.c.b16 %v621, %v617
    %v1034 = vpack.c.b16 %v626, %v622
    %v1035 = vpack.c.b16 %v627, %v623
    %v1036 = vpack.c.b16 %v628, %v624
    %v1037 = vpack.c.b16 %v629, %v625
    %v1038 = vpack.c.b16 %v634, %v630
    %v1039 = vpack.c.b16 %v635, %v631
    %v1040 = vpack.c.b16 %v636, %v632
    %v1041 = vpack.c.b16 %v637, %v633
    %v1042 = vpack.c.b16 %v642, %v638
    %v1043 = vpack.c.b16 %v643, %v639
    %v1044 = vpack.c.b16 %v644, %v640
    %v1045 = vpack.c.b16 %v645, %v641
    %v1046 = vpack.c.b16 %v650, %v646
    %v1047 = vpack.c.b16 %v651, %v647
    %v1048 = vpack.c.b16 %v652, %v648
    %v1049 = vpack.c.b16 %v653, %v649
    %v1050 = vpack.c.b16 %v658, %v654
    %v1051 = vpack.c.b16 %v659, %v655
    %v1052 = vpack.c.b16 %v660, %v656
    %v1053 = vpack.c.b16 %v661, %v657
    %v1054 = vpack.c.b16 %v666, %v662
    %v1055 = vpack.c.b16 %v667, %v663
    %v1056 = vpack.c.b16 %v668, %v664
    %v1057 = vpack.c.b16 %v669, %v665
    %v1058 = vpack.c.b16 %v674, %v670
    %v1059 = vpack.c.b16 %v675, %v671
    %v1060 = vpack.c.b16 %v676, %v672
    %v1061 = vpack.c.b16 %v677, %v673
    %v1062 = vpack.c.b16 %v682, %v678
    %v1063 = vpack.c.b16 %v683, %v679
    %v1064 = vpack.c.b16 %v684, %v680
    %v1065 = vpack.c.b16 %v685, %v681
    %v1066 = vpack.c.b16 %v690, %v686
    %v1067 = vpack.c.b16 %v691, %v687
    %v1068 = vpack.c.b16 %v692, %v688
    %v1069 = vpack.c.b16 %v693, %v689
    %v1070 = vpack.c.b16 %v698, %v694
    %v1071 = vpack.c.b16 %v699, %v695
    %v1072 = vpack.c.b16 %v700, %v696
    %v1073 = vpack.c.b16 %v701, %v697
    %v1074 = vpack.c.b16 %v706, %v702
    %v1075 = vpack.c.b16 %v707, %v703
    %v1076 = vpack.c.b16 %v708, %v704
    %v1077 = vpack.c.b16 %v709, %v705
    %v1078 = vpack.c.b16 %v714, %v710
    %v1079 = vpack.c.b16 %v715, %v711
    %v1080 = vpack.c.b16 %v716, %v712
    %v1081 = vpack.c.b16 %v717, %v713
    %v1082 = vpack.c.b16 %v722, %v718
    %v1083 = vpack.c.b16 %v723, %v719
    %v1084 = vpack.c.b16 %v724, %v720
    %v1085 = vpack.c.b16 %v725, %v721
    %v1086 = vpack.c.b16 %v730, %v726
    %v1087 = vpack.c.b16 %v731, %v727
    %v1088 = vpack.c.b16 %v732, %v728
    %v1089 = vpack.c.b16 %v733, %v729
    %v1090 = vpack.c.b16 %v738, %v734
    %v1091 = vpack.c.b16 %v739, %v735
    %v1092 = vpack.c.b16 %v740, %v736
    %v1093 = vpack.c.b16 %v741, %v737
    %v1094 = vpack.c.b16 %v746, %v742
    %v1095 = vpack.c.b16 %v747, %v743
    %v1096 = vpack.c.b16 %v748, %v744
    %v1097 = vpack.c.b16 %v749, %v745
    %v1098 = vpack.c.b16 %v754, %v750
    %v1099 = vpack.c.b16 %v755, %v751
    %v1100 = vpack.c.b16 %v756, %v752
    %v1101 = vpack.c.b16 %v757, %v753
    %v1102 = vpack.c.b16 %v762, %v758
    %v1103 = vpack.c.b16 %v763, %v759
    %v1104 = vpack.c.b16 %v764, %v760
    %v1105 = vpack.c.b16 %v765, %v761
    %v1106 = vpack.c.b16 %v770, %v766
    %v1107 = vpack.c.b16 %v771, %v767
    %v1108 = vpack.c.b16 %v772, %v768
    %v1109 = vpack.c.b16 %v773, %v769
    %v1110 = vpack.c.b16 %v778, %v774
    %v1111 = vpack.c.b16 %v779, %v775
    %v1112 = vpack.c.b16 %v780, %v776
    %v1113 = vpack.c.b16 %v781, %v777
    %v1114 = vpack.c.b16 %v786, %v782
    %v1115 = vpack.c.b16 %v787, %v783
    %v1116 = vpack.c.b16 %v788, %v784
    %v1117 = vpack.c.b16 %v789, %v785
    %v1118 = vpack.c.b16 %v794, %v790
    %v1119 = vpack.c.b16 %v795, %v791
    %v1120 = vpack.c.b16 %v796, %v792
    %v1121 = vpack.c.b16 %v797, %v793
    %v1122 = vpack.c.b16 %v802, %v798
    %v1123 = vpack.c.b16 %v803, %v799
    %v1124 = vpack.c.b16 %v804, %v800
    %v1125 = vpack.c.b16 %v805, %v801
    %v1126 = vpack.c.b16 %v810, %v806
    %v1127 = vpack.c.b16 %v811, %v807
    %v1128 = vpack.c.b16 %v812, %v808
    %v1129 = vpack.c.b16 %v813, %v809
    %v1130 = vpack.c.b16 %v818, %v814
    %v1131 = vpack.c.b16 %v819, %v815
    %v1132 = vpack.c.b16 %v820, %v816
    %v1133 = vpack.c.b16 %v821, %v817
    %v1134 = vpack.c.b16 %v826, %v822
    %v1135 = vpack.c.b16 %v827, %v823
    %v1136 = vpack.c.b16 %v828, %v824
    %v1137 = vpack.c.b16 %v829, %v825
    %v1138 = vpack.c.b16 %v834, %v830
    %v1139 = vpack.c.b16 %v835, %v831
    %v1140 = vpack.c.b16 %v836, %v832
    %v1141 = vpack.c.b16 %v837, %v833
    %v1142 = vpack.c.b16 %v842, %v838
    %v1143 = vpack.c.b16 %v843, %v839
    %v1144 = vpack.c.b16 %v844, %v840
    %v1145 = vpack.c.b16 %v845, %v841
    %v1146 = vpack.c.b16 %v850, %v846
    %v1147 = vpack.c.b16 %v851, %v847
    %v1148 = vpack.c.b16 %v852, %v848
    %v1149 = vpack.c.b16 %v853, %v849
    %v1150 = vpack.c.b16 %v858, %v854
    %v1151 = vpack.c.b16 %v859, %v855
    %v1152 = vpack.c.b16 %v860, %v856
    %v1153 = vpack.c.b16 %v861, %v857
    %v1154 = vpack.c.b16 %v866, %v862
    %v1155 = vpack.c.b16 %v867, %v863
    %v1156 = vpack.c.b16 %v868, %v864
    %v1157 = vpack.c.b16 %v869, %v865
    %v1158 = vpack.c.b16 %v874, %v870
    %v1159 = vpack.c.b16 %v875, %v871
    %v1160 = vpack.c.b16 %v876, %v872
    %v1161 = vpack.c.b16 %v877, %v873
    %v1162 = vpack.c.b16 %v882, %v878
    %v1163 = vpack.c.b16 %v883, %v879
    %v1164 = vpack.c.b16 %v884, %v880
    %v1165 = vpack.c.b16 %v885, %v881
    %v1166 = vpack.c.b16 %v890, %v886
    %v1167 = vpack.c.b16 %v891, %v887
    %v1168 = vpack.c.b16 %v892, %v888
    %v1169 = vpack.c.b16 %v893, %v889
    %v1170 = vpack.c.b16 %v898, %v894
    %v1171 = vpack.c.b16 %v899, %v895
    %v1172 = vpack.c.b16 %v900, %v896
    %v1173 = vpack.c.b16 %v901, %v897
    %v1174 = vpack.c.b16 %v906, %v902
    %v1175 = vpack.c.b16 %v907, %v903
    %v1176 = vpack.c.b16 %v908, %v904
    %v1177 = vpack.c.b16 %v909, %v905
    %v1178 = vpack.c.b16 %v914, %v910
    %v1179 = vpack.c.b16 %v915, %v911
    %v1180 = vpack.c.b16 %v916, %v912
    %v1181 = vpack.c.b16 %v917, %v913
    %v1182 = vpack.c.b16 %v922, %v918
    %v1183 = vpack.c.b16 %v923, %v919
    %v1184 = vpack.c.b16 %v924, %v920
    %v1185 = vpack.c.b16 %v925, %v921
    %v1186 = vpack.c.b16 %v930, %v926
    %v1187 = vpack.c.b16 %v931, %v927
    %v1188 = vpack.c.b16 %v932, %v928
    %v1189 = vpack.c.b16 %v933, %v929
    %v1190 = vpack.c.b16 %v938, %v934
    %v1191 = vpack.c.b16 %v939, %v935
    %v1192 = vpack.c.b16 %v940, %v936
    %v1193 = vpack.c.b16 %v941, %v937
    %v1194 = vpack.c.b16 %v946, %v942
    %v1195 = vpack.c.b16 %v947, %v943
    %v1196 = vpack.c.b16 %v948, %v944
    %v1197 = vpack.c.b16 %v949, %v945
    %v1198 = vpack.c.b16 %v954, %v950
    %v1199 = vpack.c.b16 %v955, %v951
    %v1200 = vpack.c.b16 %v956, %v952
    %v1201 = vpack.c.b16 %v957, %v953
    %v1202 = vpack.c.b16 %v962, %v958
    %v1203 = vpack.c.b16 %v963, %v959
    %v1204 = vpack.c.b16 %v964, %v960
    %v1205 = vpack.c.b16 %v965, %v961
    %v1206 = vpack.c.b16 %v970, %v966
    %v1207 = vpack.c.b16 %v971, %v967
    %v1208 = vpack.c.b16 %v972, %v968
    %v1209 = vpack.c.b16 %v973, %v969
    %v1210 = vpack.c.b16 %v978, %v974
    %v1211 = vpack.c.b16 %v979, %v975
    %v1212 = vpack.c.b16 %v980, %v976
    %v1213 = vpack.c.b16 %v981, %v977
    %v1214 = vpack.c.b16 %v986, %v982
    %v1215 = vpack.c.b16 %v987, %v983
    %v1216 = vpack.c.b16 %v988, %v984
    %v1217 = vpack.c.b16 %v989, %v985
    %v1218 = vpack.c.b16 %v994, %v990
    %v1219 = vpack.c.b16 %v995, %v991
    %v1220 = vpack.c.b16 %v996, %v992
    %v1221 = vpack.c.b16 %v997, %v993
    %1446 = vmatpush.bf16.msra.mxu0 %v1026
    %1447 = vmatpush.bf16.msra.mxu0 %v1022
    %1448 = vmatpush.bf16.msra.mxu0 %v1018
    %1449 = vmatpush.bf16.msra.mxu0 %v1014
    %1450 = vmatpush.bf16.msra.mxu0 %v1010
    %1451 = vmatpush.bf16.msra.mxu0 %v1006
    %1452 = vmatpush.bf16.msra.mxu0 %v1002
    %1453 = vmatpush.bf16.msra.mxu0 %v998
    %1454 = vmatmul.bf16.gmra.mxu0 %v312
    %v1455 = vpop.f32.mrf.mxu0
    %v1456 = vadd.f32 0.0, %v1455
    %v1457 = vpop.f32.mrf.mxu0
    %v1458 = vadd.f32 0.0, %v1457
    %1459 = vdwg.mxu0
    %1460 = vmatpush.bf16.msra.mxu0 %v1058
    %1461 = vmatpush.bf16.msra.mxu0 %v1054
    %1462 = vmatpush.bf16.msra.mxu0 %v1050
    %1463 = vmatpush.bf16.msra.mxu0 %v1046
    %1464 = vmatpush.bf16.msra.mxu0 %v1042
    %1465 = vmatpush.bf16.msra.mxu0 %v1038
    %1466 = vmatpush.bf16.msra.mxu0 %v1034
    %1467 = vmatpush.bf16.msra.mxu0 %v1030
    %1468 = vmatmul.bf16.gmra.mxu0 %v313
    %v1469 = vpop.f32.mrf.mxu0
    %v1470 = vadd.f32 %v1456, %v1469
    %v1471 = vpop.f32.mrf.mxu0
    %v1472 = vadd.f32 %v1458, %v1471
    %1473 = vdwg.mxu0
    %1474 = vmatpush.bf16.msra.mxu0 %v1090
    %1475 = vmatpush.bf16.msra.mxu0 %v1086
    %1476 = vmatpush.bf16.msra.mxu0 %v1082
    %1477 = vmatpush.bf16.msra.mxu0 %v1078
    %1478 = vmatpush.bf16.msra.mxu0 %v1074
    %1479 = vmatpush.bf16.msra.mxu0 %v1070
    %1480 = vmatpush.bf16.msra.mxu0 %v1066
    %1481 = vmatpush.bf16.msra.mxu0 %v1062
    %1482 = vmatmul.bf16.gmra.mxu0 %v314
    %v1483 = vpop.f32.mrf.mxu0
    %v1484 = vadd.f32 %v1470, %v1483
    %v1485 = vpop.f32.mrf.mxu0
    %v1486 = vadd.f32 %v1472, %v1485
    %1487 = vdwg.mxu0
    %1488 = vmatpush.bf16.msra.mxu0 %v1122
    %1489 = vmatpush.bf16.msra.mxu0 %v1118
    %1490 = vmatpush.bf16.msra.mxu0 %v1114
    %1491 = vmatpush.bf16.msra.mxu0 %v1110
    %1492 = vmatpush.bf16.msra.mxu0 %v1106
    %1493 = vmatpush.bf16.msra.mxu0 %v1102
    %1494 = vmatpush.bf16.msra.mxu0 %v1098
    %1495 = vmatpush.bf16.msra.mxu0 %v1094
    %1496 = vmatmul.bf16.gmra.mxu0 %v315
    %v1497 = vpop.f32.mrf.mxu0
    %v1498 = vadd.f32 %v1484, %v1497
    %v1499 = vpop.f32.mrf.mxu0
    %v1500 = vadd.f32 %v1486, %v1499
    %1501 = vdwg.mxu0
    %1502 = vmatpush.bf16.msra.mxu0 %v1154
    %1503 = vmatpush.bf16.msra.mxu0 %v1150
    %1504 = vmatpush.bf16.msra.mxu0 %v1146
    %1505 = vmatpush.bf16.msra.mxu0 %v1142
    %1506 = vmatpush.bf16.msra.mxu0 %v1138
    %1507 = vmatpush.bf16.msra.mxu0 %v1134
    %1508 = vmatpush.bf16.msra.mxu0 %v1130
    %1509 = vmatpush.bf16.msra.mxu0 %v1126
    %1510 = vmatmul.bf16.gmra.mxu0 %v316
    %v1511 = vpop.f32.mrf.mxu0
    %v1512 = vadd.f32 %v1498, %v1511
    %v1513 = vpop.f32.mrf.mxu0
    %v1514 = vadd.f32 %v1500, %v1513
    %1515 = vdwg.mxu0
    %1516 = vmatpush.bf16.msra.mxu0 %v1186
    %1517 = vmatpush.bf16.msra.mxu0 %v1182
    %1518 = vmatpush.bf16.msra.mxu0 %v1178
    %1519 = vmatpush.bf16.msra.mxu0 %v1174
    %1520 = vmatpush.bf16.msra.mxu0 %v1170
    %1521 = vmatpush.bf16.msra.mxu0 %v1166
    %1522 = vmatpush.bf16.msra.mxu0 %v1162
    %1523 = vmatpush.bf16.msra.mxu0 %v1158
    %1524 = vmatmul.bf16.gmra.mxu0 %v317
    %v1525 = vpop.f32.mrf.mxu0
    %v1526 = vadd.f32 %v1512, %v1525
    %v1527 = vpop.f32.mrf.mxu0
    %v1528 = vadd.f32 %v1514, %v1527
    %1529 = vdwg.mxu0
    %1530 = vmatpush.bf16.msra.mxu0 %v1218
    %1531 = vmatpush.bf16.msra.mxu0 %v1214
    %1532 = vmatpush.bf16.msra.mxu0 %v1210
    %1533 = vmatpush.bf16.msra.mxu0 %v1206
    %1534 = vmatpush.bf16.msra.mxu0 %v1202
    %1535 = vmatpush.bf16.msra.mxu0 %v1198
    %1536 = vmatpush.bf16.msra.mxu0 %v1194
    %1537 = vmatpush.bf16.msra.mxu0 %v1190
    %1538 = vmatmul.bf16.gmra.mxu0 %v318
    %v1539 = vpop.f32.mrf.mxu0
    %v1540 = vadd.f32 %v1526, %v1539
    %v1541 = vpop.f32.mrf.mxu0
    %v1542 = vadd.f32 %v1528, %v1541
    %1543 = vdwg.mxu0
    %1544 = vmatpush.bf16.msra.mxu0 %v1027
    %1545 = vmatpush.bf16.msra.mxu0 %v1023
    %1546 = vmatpush.bf16.msra.mxu0 %v1019
    %1547 = vmatpush.bf16.msra.mxu0 %v1015
    %1548 = vmatpush.bf16.msra.mxu0 %v1011
    %1549 = vmatpush.bf16.msra.mxu0 %v1007
    %1550 = vmatpush.bf16.msra.mxu0 %v1003
    %1551 = vmatpush.bf16.msra.mxu0 %v999
    %1552 = vmatmul.bf16.gmra.mxu0 %v312
    %v1553 = vpop.f32.mrf.mxu0
    %v1554 = vadd.f32 0.0, %v1553
    %v1555 = vpop.f32.mrf.mxu0
    %v1556 = vadd.f32 0.0, %v1555
    %1557 = vdwg.mxu0
    %1558 = vmatpush.bf16.msra.mxu0 %v1059
    %1559 = vmatpush.bf16.msra.mxu0 %v1055
    %1560 = vmatpush.bf16.msra.mxu0 %v1051
    %1561 = vmatpush.bf16.msra.mxu0 %v1047
    %1562 = vmatpush.bf16.msra.mxu0 %v1043
    %1563 = vmatpush.bf16.msra.mxu0 %v1039
    %1564 = vmatpush.bf16.msra.mxu0 %v1035
    %1565 = vmatpush.bf16.msra.mxu0 %v1031
    %1566 = vmatmul.bf16.gmra.mxu0 %v313
    %v1567 = vpop.f32.mrf.mxu0
    %v1568 = vadd.f32 %v1554, %v1567
    %v1569 = vpop.f32.mrf.mxu0
    %v1570 = vadd.f32 %v1556, %v1569
    %1571 = vdwg.mxu0
    %1572 = vmatpush.bf16.msra.mxu0 %v1091
    %1573 = vmatpush.bf16.msra.mxu0 %v1087
    %1574 = vmatpush.bf16.msra.mxu0 %v1083
    %1575 = vmatpush.bf16.msra.mxu0 %v1079
    %1576 = vmatpush.bf16.msra.mxu0 %v1075
    %1577 = vmatpush.bf16.msra.mxu0 %v1071
    %1578 = vmatpush.bf16.msra.mxu0 %v1067
    %1579 = vmatpush.bf16.msra.mxu0 %v1063
    %1580 = vmatmul.bf16.gmra.mxu0 %v314
    %v1581 = vpop.f32.mrf.mxu0
    %v1582 = vadd.f32 %v1568, %v1581
    %v1583 = vpop.f32.mrf.mxu0
    %v1584 = vadd.f32 %v1570, %v1583
    %1585 = vdwg.mxu0
    %1586 = vmatpush.bf16.msra.mxu0 %v1123
    %1587 = vmatpush.bf16.msra.mxu0 %v1119
    %1588 = vmatpush.bf16.msra.mxu0 %v1115
    %1589 = vmatpush.bf16.msra.mxu0 %v1111
    %1590 = vmatpush.bf16.msra.mxu0 %v1107
    %1591 = vmatpush.bf16.msra.mxu0 %v1103
    %1592 = vmatpush.bf16.msra.mxu0 %v1099
    %1593 = vmatpush.bf16.msra.mxu0 %v1095
    %1594 = vmatmul.bf16.gmra.mxu0 %v315
    %v1595 = vpop.f32.mrf.mxu0
    %v1596 = vadd.f32 %v1582, %v1595
    %v1597 = vpop.f32.mrf.mxu0
    %v1598 = vadd.f32 %v1584, %v1597
    %1599 = vdwg.mxu0
    %1600 = vmatpush.bf16.msra.mxu0 %v1155
    %1601 = vmatpush.bf16.msra.mxu0 %v1151
    %1602 = vmatpush.bf16.msra.mxu0 %v1147
    %1603 = vmatpush.bf16.msra.mxu0 %v1143
    %1604 = vmatpush.bf16.msra.mxu0 %v1139
    %1605 = vmatpush.bf16.msra.mxu0 %v1135
    %1606 = vmatpush.bf16.msra.mxu0 %v1131
    %1607 = vmatpush.bf16.msra.mxu0 %v1127
    %1608 = vmatmul.bf16.gmra.mxu0 %v316
    %v1609 = vpop.f32.mrf.mxu0
    %v1610 = vadd.f32 %v1596, %v1609
    %v1611 = vpop.f32.mrf.mxu0
    %v1612 = vadd.f32 %v1598, %v1611
    %1613 = vdwg.mxu0
    %1614 = vmatpush.bf16.msra.mxu0 %v1187
    %1615 = vmatpush.bf16.msra.mxu0 %v1183
    %1616 = vmatpush.bf16.msra.mxu0 %v1179
    %1617 = vmatpush.bf16.msra.mxu0 %v1175
    %1618 = vmatpush.bf16.msra.mxu0 %v1171
    %1619 = vmatpush.bf16.msra.mxu0 %v1167
    %1620 = vmatpush.bf16.msra.mxu0 %v1163
    %1621 = vmatpush.bf16.msra.mxu0 %v1159
    %1622 = vmatmul.bf16.gmra.mxu0 %v317
    %v1623 = vpop.f32.mrf.mxu0
    %v1624 = vadd.f32 %v1610, %v1623
    %v1625 = vpop.f32.mrf.mxu0
    %v1626 = vadd.f32 %v1612, %v1625
    %1627 = vdwg.mxu0
    %1628 = vmatpush.bf16.msra.mxu0 %v1219
    %1629 = vmatpush.bf16.msra.mxu0 %v1215
    %1630 = vmatpush.bf16.msra.mxu0 %v1211
    %1631 = vmatpush.bf16.msra.mxu0 %v1207
    %1632 = vmatpush.bf16.msra.mxu0 %v1203
    %1633 = vmatpush.bf16.msra.mxu0 %v1199
    %1634 = vmatpush.bf16.msra.mxu0 %v1195
    %1635 = vmatpush.bf16.msra.mxu0 %v1191
    %1636 = vmatmul.bf16.gmra.mxu0 %v318
    %v1637 = vpop.f32.mrf.mxu0
    %v1638 = vadd.f32 %v1624, %v1637
    %v1639 = vpop.f32.mrf.mxu0
    %v1640 = vadd.f32 %v1626, %v1639
    %1641 = vdwg.mxu0
    %1642 = vmatpush.bf16.msra.mxu0 %v1028
    %1643 = vmatpush.bf16.msra.mxu0 %v1024
    %1644 = vmatpush.bf16.msra.mxu0 %v1020
    %1645 = vmatpush.bf16.msra.mxu0 %v1016
    %1646 = vmatpush.bf16.msra.mxu0 %v1012
    %1647 = vmatpush.bf16.msra.mxu0 %v1008
    %1648 = vmatpush.bf16.msra.mxu0 %v1004
    %1649 = vmatpush.bf16.msra.mxu0 %v1000
    %1650 = vmatmul.bf16.gmra.mxu0 %v312
    %v1651 = vpop.f32.mrf.mxu0
    %v1652 = vadd.f32 0.0, %v1651
    %v1653 = vpop.f32.mrf.mxu0
    %v1654 = vadd.f32 0.0, %v1653
    %1655 = vdwg.mxu0
    %1656 = vmatpush.bf16.msra.mxu0 %v1060
    %1657 = vmatpush.bf16.msra.mxu0 %v1056
    %1658 = vmatpush.bf16.msra.mxu0 %v1052
    %1659 = vmatpush.bf16.msra.mxu0 %v1048
    %1660 = vmatpush.bf16.msra.mxu0 %v1044
    %1661 = vmatpush.bf16.msra.mxu0 %v1040
    %1662 = vmatpush.bf16.msra.mxu0 %v1036
    %1663 = vmatpush.bf16.msra.mxu0 %v1032
    %1664 = vmatmul.bf16.gmra.mxu0 %v313
    %v1665 = vpop.f32.mrf.mxu0
    %v1666 = vadd.f32 %v1652, %v1665
    %v1667 = vpop.f32.mrf.mxu0
    %v1668 = vadd.f32 %v1654, %v1667
    %1669 = vdwg.mxu0
    %1670 = vmatpush.bf16.msra.mxu0 %v1092
    %1671 = vmatpush.bf16.msra.mxu0 %v1088
    %1672 = vmatpush.bf16.msra.mxu0 %v1084
    %1673 = vmatpush.bf16.msra.mxu0 %v1080
    %1674 = vmatpush.bf16.msra.mxu0 %v1076
    %1675 = vmatpush.bf16.msra.mxu0 %v1072
    %1676 = vmatpush.bf16.msra.mxu0 %v1068
    %1677 = vmatpush.bf16.msra.mxu0 %v1064
    %1678 = vmatmul.bf16.gmra.mxu0 %v314
    %v1679 = vpop.f32.mrf.mxu0
    %v1680 = vadd.f32 %v1666, %v1679
    %v1681 = vpop.f32.mrf.mxu0
    %v1682 = vadd.f32 %v1668, %v1681
    %1683 = vdwg.mxu0
    %1684 = vmatpush.bf16.msra.mxu0 %v1124
    %1685 = vmatpush.bf16.msra.mxu0 %v1120
    %1686 = vmatpush.bf16.msra.mxu0 %v1116
    %1687 = vmatpush.bf16.msra.mxu0 %v1112
    %1688 = vmatpush.bf16.msra.mxu0 %v1108
    %1689 = vmatpush.bf16.msra.mxu0 %v1104
    %1690 = vmatpush.bf16.msra.mxu0 %v1100
    %1691 = vmatpush.bf16.msra.mxu0 %v1096
    %1692 = vmatmul.bf16.gmra.mxu0 %v315
    %v1693 = vpop.f32.mrf.mxu0
    %v1694 = vadd.f32 %v1680, %v1693
    %v1695 = vpop.f32.mrf.mxu0
    %v1696 = vadd.f32 %v1682, %v1695
    %1697 = vdwg.mxu0
    %1698 = vmatpush.bf16.msra.mxu0 %v1156
    %1699 = vmatpush.bf16.msra.mxu0 %v1152
    %1700 = vmatpush.bf16.msra.mxu0 %v1148
    %1701 = vmatpush.bf16.msra.mxu0 %v1144
    %1702 = vmatpush.bf16.msra.mxu0 %v1140
    %1703 = vmatpush.bf16.msra.mxu0 %v1136
    %1704 = vmatpush.bf16.msra.mxu0 %v1132
    %1705 = vmatpush.bf16.msra.mxu0 %v1128
    %1706 = vmatmul.bf16.gmra.mxu0 %v316
    %v1707 = vpop.f32.mrf.mxu0
    %v1708 = vadd.f32 %v1694, %v1707
    %v1709 = vpop.f32.mrf.mxu0
    %v1710 = vadd.f32 %v1696, %v1709
    %1711 = vdwg.mxu0
    %1712 = vmatpush.bf16.msra.mxu0 %v1188
    %1713 = vmatpush.bf16.msra.mxu0 %v1184
    %1714 = vmatpush.bf16.msra.mxu0 %v1180
    %1715 = vmatpush.bf16.msra.mxu0 %v1176
    %1716 = vmatpush.bf16.msra.mxu0 %v1172
    %1717 = vmatpush.bf16.msra.mxu0 %v1168
    %1718 = vmatpush.bf16.msra.mxu0 %v1164
    %1719 = vmatpush.bf16.msra.mxu0 %v1160
    %1720 = vmatmul.bf16.gmra.mxu0 %v317
    %v1721 = vpop.f32.mrf.mxu0
    %v1722 = vadd.f32 %v1708, %v1721
    %v1723 = vpop.f32.mrf.mxu0
    %v1724 = vadd.f32 %v1710, %v1723
    %1725 = vdwg.mxu0
    %1726 = vmatpush.bf16.msra.mxu0 %v1220
    %1727 = vmatpush.bf16.msra.mxu0 %v1216
    %1728 = vmatpush.bf16.msra.mxu0 %v1212
    %1729 = vmatpush.bf16.msra.mxu0 %v1208
    %1730 = vmatpush.bf16.msra.mxu0 %v1204
    %1731 = vmatpush.bf16.msra.mxu0 %v1200
    %1732 = vmatpush.bf16.msra.mxu0 %v1196
    %1733 = vmatpush.bf16.msra.mxu0 %v1192
    %1734 = vmatmul.bf16.gmra.mxu0 %v318
    %v1735 = vpop.f32.mrf.mxu0
    %v1736 = vadd.f32 %v1722, %v1735
    %v1737 = vpop.f32.mrf.mxu0
    %v1738 = vadd.f32 %v1724, %v1737
    %1739 = vdwg.mxu0
    %1740 = vmatpush.bf16.msra.mxu0 %v1029
    %1741 = vmatpush.bf16.msra.mxu0 %v1025
    %1742 = vmatpush.bf16.msra.mxu0 %v1021
    %1743 = vmatpush.bf16.msra.mxu0 %v1017
    %1744 = vmatpush.bf16.msra.mxu0 %v1013
    %1745 = vmatpush.bf16.msra.mxu0 %v1009
    %1746 = vmatpush.bf16.msra.mxu0 %v1005
    %1747 = vmatpush.bf16.msra.mxu0 %v1001
    %1748 = vmatmul.bf16.gmra.mxu0 %v312
    %v1749 = vpop.f32.mrf.mxu0
    %v1750 = vadd.f32 0.0, %v1749
    %v1751 = vpop.f32.mrf.mxu0
    %v1752 = vadd.f32 0.0, %v1751
    %1753 = vdwg.mxu0
    %1754 = vmatpush.bf16.msra.mxu0 %v1061
    %1755 = vmatpush.bf16.msra.mxu0 %v1057
    %1756 = vmatpush.bf16.msra.mxu0 %v1053
    %1757 = vmatpush.bf16.msra.mxu0 %v1049
    %1758 = vmatpush.bf16.msra.mxu0 %v1045
    %1759 = vmatpush.bf16.msra.mxu0 %v1041
    %1760 = vmatpush.bf16.msra.mxu0 %v1037
    %1761 = vmatpush.bf16.msra.mxu0 %v1033
    %1762 = vmatmul.bf16.gmra.mxu0 %v313
    %v1763 = vpop.f32.mrf.mxu0
    %v1764 = vadd.f32 %v1750, %v1763
    %v1765 = vpop.f32.mrf.mxu0
    %v1766 = vadd.f32 %v1752, %v1765
    %1767 = vdwg.mxu0
    %1768 = vmatpush.bf16.msra.mxu0 %v1093
    %1769 = vmatpush.bf16.msra.mxu0 %v1089
    %1770 = vmatpush.bf16.msra.mxu0 %v1085
    %1771 = vmatpush.bf16.msra.mxu0 %v1081
    %1772 = vmatpush.bf16.msra.mxu0 %v1077
    %1773 = vmatpush.bf16.msra.mxu0 %v1073
    %1774 = vmatpush.bf16.msra.mxu0 %v1069
    %1775 = vmatpush.bf16.msra.mxu0 %v1065
    %1776 = vmatmul.bf16.gmra.mxu0 %v314
    %v1777 = vpop.f32.mrf.mxu0
    %v1778 = vadd.f32 %v1764, %v1777
    %v1779 = vpop.f32.mrf.mxu0
    %v1780 = vadd.f32 %v1766, %v1779
    %1781 = vdwg.mxu0
    %1782 = vmatpush.bf16.msra.mxu0 %v1125
    %1783 = vmatpush.bf16.msra.mxu0 %v1121
    %1784 = vmatpush.bf16.msra.mxu0 %v1117
    %1785 = vmatpush.bf16.msra.mxu0 %v1113
    %1786 = vmatpush.bf16.msra.mxu0 %v1109
    %1787 = vmatpush.bf16.msra.mxu0 %v1105
    %1788 = vmatpush.bf16.msra.mxu0 %v1101
    %1789 = vmatpush.bf16.msra.mxu0 %v1097
    %1790 = vmatmul.bf16.gmra.mxu0 %v315
    %v1791 = vpop.f32.mrf.mxu0
    %v1792 = vadd.f32 %v1778, %v1791
    %v1793 = vpop.f32.mrf.mxu0
    %v1794 = vadd.f32 %v1780, %v1793
    %1795 = vdwg.mxu0
    %1796 = vmatpush.bf16.msra.mxu0 %v1157
    %1797 = vmatpush.bf16.msra.mxu0 %v1153
    %1798 = vmatpush.bf16.msra.mxu0 %v1149
    %1799 = vmatpush.bf16.msra.mxu0 %v1145
    %1800 = vmatpush.bf16.msra.mxu0 %v1141
    %1801 = vmatpush.bf16.msra.mxu0 %v1137
    %1802 = vmatpush.bf16.msra.mxu0 %v1133
    %1803 = vmatpush.bf16.msra.mxu0 %v1129
    %1804 = vmatmul.bf16.gmra.mxu0 %v316
    %v1805 = vpop.f32.mrf.mxu0
    %v1806 = vadd.f32 %v1792, %v1805
    %v1807 = vpop.f32.mrf.mxu0
    %v1808 = vadd.f32 %v1794, %v1807
    %1809 = vdwg.mxu0
    %1810 = vmatpush.bf16.msra.mxu0 %v1189
    %1811 = vmatpush.bf16.msra.mxu0 %v1185
    %1812 = vmatpush.bf16.msra.mxu0 %v1181
    %1813 = vmatpush.bf16.msra.mxu0 %v1177
    %1814 = vmatpush.bf16.msra.mxu0 %v1173
    %1815 = vmatpush.bf16.msra.mxu0 %v1169
    %1816 = vmatpush.bf16.msra.mxu0 %v1165
    %1817 = vmatpush.bf16.msra.mxu0 %v1161
    %1818 = vmatmul.bf16.gmra.mxu0 %v317
    %v1819 = vpop.f32.mrf.mxu0
    %v1820 = vadd.f32 %v1806, %v1819
    %v1821 = vpop.f32.mrf.mxu0
    %v1822 = vadd.f32 %v1808, %v1821
    %1823 = vdwg.mxu0
    %1824 = vmatpush.bf16.msra.mxu0 %v1221
    %1825 = vmatpush.bf16.msra.mxu0 %v1217
    %1826 = vmatpush.bf16.msra.mxu0 %v1213
    %1827 = vmatpush.bf16.msra.mxu0 %v1209
    %1828 = vmatpush.bf16.msra.mxu0 %v1205
    %1829 = vmatpush.bf16.msra.mxu0 %v1201
    %1830 = vmatpush.bf16.msra.mxu0 %v1197
    %1831 = vmatpush.bf16.msra.mxu0 %v1193
    %1832 = vmatmul.bf16.gmra.mxu0 %v318
    %v1833 = vpop.f32.mrf.mxu0
    %v1834 = vadd.f32 %v1820, %v1833
    %v1835 = vpop.f32.mrf.mxu0
    %v1836 = vadd.f32 %v1822, %v1835
    %1837 = vdwg.mxu0
    %v1838 = vpack.c.bf16 %v1638, %v1540
    %v1839 = vpack.c.bf16 %v1834, %v1736
    %v1840 = vpack.c.bf16 %v1640, %v1542
    %v1841 = vpack.c.bf16 %v1836, %v1738
    %v1842 = vld [vmem:[%s2] sm:$0xf]
    %1844 = vst [vmem:[#allocation1] ss:$9 sm:$0xff] %v1842
    %v1845 = vld [vmem:[#allocation1] sm:$0xff]
    %v1846 = vld [vmem:[#allocation1 + $0x9] sm:$0xff]
    %v1847 = vld [vmem:[#allocation1 + $0x12] sm:$0xff]
    %v1848 = vld [vmem:[#allocation1 + $0x1b] sm:$0xff]
    %v1849 = vpack.i.b16 %v1845, %v1845
    %v1851 = vperm.slane %v1849, 0
    %v1852 = vpack.i.b16 %v1846, %v1846
    %v1854 = vperm.slane %v1852, 0
    %v1855 = vpack.i.b16 %v1847, %v1847
    %v1857 = vperm.slane %v1855, 0
    %v1858 = vpack.i.b16 %v1848, %v1848
    %v1860 = vperm.slane %v1858, 0
    %v1861 = vunpack.c.l.bf16 %v1838
    %v1862 = vunpack.c.h.bf16 %v1838
    %v1863 = vunpack.c.l.bf16 %v1839
    %v1864 = vunpack.c.h.bf16 %v1839
    %v1865 = vunpack.c.l.bf16 %v1840
    %v1866 = vunpack.c.h.bf16 %v1840
    %v1867 = vunpack.c.l.bf16 %v1841
    %v1868 = vunpack.c.h.bf16 %v1841
    %v1869 = vunpack.c.l.bf16 %v1851
    %v1870 = vunpack.c.l.bf16 %v1854
    %v1871 = vunpack.c.l.bf16 %v1857
    %v1872 = vunpack.c.l.bf16 %v1860
    %v1873 = vadd.f32 %v1861, %v1869
    %v1874 = vadd.f32 %v1862, %v1870
    %v1875 = vadd.f32 %v1863, %v1871
    %v1876 = vadd.f32 %v1864, %v1872
    %v1877 = vadd.f32 %v1865, %v1869
    %v1878 = vadd.f32 %v1866, %v1870
    %v1879 = vadd.f32 %v1867, %v1871
    %v1880 = vadd.f32 %v1868, %v1872
    %v1881 = vpack.c.bf16 %v1874, %v1873
    %v1882 = vpack.c.bf16 %v1876, %v1875
    %v1883 = vpack.c.bf16 %v1878, %v1877
    %v1884 = vpack.c.bf16 %v1880, %v1879
    %v1885 = vunpack.c.l.bf16 %v1881
    %v1886 = vunpack.c.h.bf16 %v1881
    %v1887 = vunpack.c.l.bf16 %v1882
    %v1888 = vunpack.c.h.bf16 %v1882
    %v1889 = vunpack.c.l.bf16 %v1883
    %v1890 = vunpack.c.h.bf16 %v1883
    %v1891 = vunpack.c.l.bf16 %v1884
    %v1892 = vunpack.c.h.bf16 %v1884
    %v1893 = vmax.f32 %v1885, 0.0
    %v1894 = vmax.f32 %v1886, 0.0
    %v1895 = vmax.f32 %v1887, 0.0
    %v1896 = vmax.f32 %v1888, 0.0
    %v1897 = vmax.f32 %v1889, 0.0
    %v1898 = vmax.f32 %v1890, 0.0
    %v1899 = vmax.f32 %v1891, 0.0
    %v1900 = vmax.f32 %v1892, 0.0
    %v1901 = vpack.c.bf16 %v1897, %v1893
    %v1902 = vpack.c.bf16 %v1898, %v1894
    %v1903 = vpack.c.bf16 %v1899, %v1895
    %v1904 = vpack.c.bf16 %v1900, %v1896
    %v1905 = vld [vmem:[#allocation4] sm:$0xff]
    %v1906 = vld [vmem:[#allocation4 + $0x8] sm:$0xff]
    %v1907 = vld [vmem:[#allocation4 + $0x10] sm:$0xff]
    %v1908 = vld [vmem:[#allocation4 + $0x18] sm:$0xff]
    %v1909 = vld [vmem:[#allocation4 + $0x20] sm:$0xff]
    %v1910 = vld [vmem:[#allocation4 + $0x28] sm:$0xff]
    %v1911 = vld [vmem:[#allocation4 + $0x30] sm:$0xff]
    %v1912 = vld [vmem:[#allocation4 + $0x38] sm:$0xff]
    %v1913 = vld [vmem:[#allocation4 + $0x40] sm:$0xff]
    %v1914 = vld [vmem:[#allocation4 + $0x48] sm:$0xff]
    %v1915 = vld [vmem:[#allocation4 + $0x50] sm:$0xff]
    %v1916 = vld [vmem:[#allocation4 + $0x58] sm:$0xff]
    %v1917 = vld [vmem:[#allocation4 + $0x60] sm:$0xff]
    %v1918 = vld [vmem:[#allocation4 + $0x68] sm:$0xff]
    %v1919 = vld [vmem:[#allocation4 + $0x70] sm:$0xff]
    %v1920 = vld [vmem:[#allocation4 + $0x78] sm:$0xff]
    %v1921 = vld [vmem:[#allocation4 + $0x80] sm:$0xff]
    %v1922 = vld [vmem:[#allocation4 + $0x88] sm:$0xff]
    %v1923 = vld [vmem:[#allocation4 + $0x90] sm:$0xff]
    %v1924 = vld [vmem:[#allocation4 + $0x98] sm:$0xff]
    %v1925 = vld [vmem:[#allocation4 + $0xa0] sm:$0xff]
    %v1926 = vld [vmem:[#allocation4 + $0xa8] sm:$0xff]
    %v1927 = vld [vmem:[#allocation4 + $0xb0] sm:$0xff]
    %v1928 = vld [vmem:[#allocation4 + $0xb8] sm:$0xff]
    %v1929 = vld [vmem:[#allocation4 + $0xc0] sm:$0xff]
    %v1930 = vld [vmem:[#allocation4 + $0xc8] sm:$0xff]
    %v1931 = vld [vmem:[#allocation4 + $0xd0] sm:$0xff]
    %v1932 = vld [vmem:[#allocation4 + $0xd8] sm:$0xff]
    %v1933 = vld [vmem:[#allocation4 + $0xe0] sm:$0xff]
    %v1934 = vld [vmem:[#allocation4 + $0xe8] sm:$0xff]
    %v1935 = vld [vmem:[#allocation4 + $0xf0] sm:$0xff]
    %v1936 = vld [vmem:[#allocation4 + $0xf8] sm:$0xff]
    %v1937 = vld [vmem:[#allocation4 + $0x100] sm:$0xff]
    %v1938 = vld [vmem:[#allocation4 + $0x108] sm:$0xff]
    %v1939 = vld [vmem:[#allocation4 + $0x110] sm:$0xff]
    %v1940 = vld [vmem:[#allocation4 + $0x118] sm:$0xff]
    %v1941 = vld [vmem:[#allocation4 + $0x120] sm:$0xff]
    %v1942 = vld [vmem:[#allocation4 + $0x128] sm:$0xff]
    %v1943 = vld [vmem:[#allocation4 + $0x130] sm:$0xff]
    %v1944 = vld [vmem:[#allocation4 + $0x138] sm:$0xff]
    %v1945 = vld [vmem:[#allocation4 + $0x140] sm:$0xff]
    %v1946 = vld [vmem:[#allocation4 + $0x148] sm:$0xff]
    %v1947 = vld [vmem:[#allocation4 + $0x150] sm:$0xff]
    %v1948 = vld [vmem:[#allocation4 + $0x158] sm:$0xff]
    %v1949 = vld [vmem:[#allocation4 + $0x160] sm:$0xff]
    %v1950 = vld [vmem:[#allocation4 + $0x168] sm:$0xff]
    %v1951 = vld [vmem:[#allocation4 + $0x170] sm:$0xff]
    %v1952 = vld [vmem:[#allocation4 + $0x178] sm:$0xff]
    %v1953 = vld [vmem:[#allocation4 + $0x180] sm:$0xff]
    %v1954 = vld [vmem:[#allocation4 + $0x188] sm:$0xff]
    %v1955 = vld [vmem:[#allocation4 + $0x190] sm:$0xff]
    %v1956 = vld [vmem:[#allocation4 + $0x198] sm:$0xff]
    %v1957 = vld [vmem:[#allocation4 + $0x1a0] sm:$0xff]
    %v1958 = vld [vmem:[#allocation4 + $0x1a8] sm:$0xff]
    %v1959 = vld [vmem:[#allocation4 + $0x1b0] sm:$0xff]
    %v1960 = vld [vmem:[#allocation4 + $0x1b8] sm:$0xff]
    %v1961 = vld [vmem:[#allocation4 + $0x1c0] sm:$0xff]
    %v1962 = vld [vmem:[#allocation4 + $0x1c8] sm:$0xff]
    %v1963 = vld [vmem:[#allocation4 + $0x1d0] sm:$0xff]
    %v1964 = vld [vmem:[#allocation4 + $0x1d8] sm:$0xff]
    %v1965 = vld [vmem:[#allocation4 + $0x1e0] sm:$0xff]
    %v1966 = vld [vmem:[#allocation4 + $0x1e8] sm:$0xff]
    %v1967 = vld [vmem:[#allocation4 + $0x1f0] sm:$0xff]
    %v1968 = vld [vmem:[#allocation4 + $0x1f8] sm:$0xff]
    %v1969 = vld [vmem:[#allocation4 + $0x200] sm:$0xff]
    %v1970 = vld [vmem:[#allocation4 + $0x208] sm:$0xff]
    %v1971 = vld [vmem:[#allocation4 + $0x210] sm:$0xff]
    %v1972 = vld [vmem:[#allocation4 + $0x218] sm:$0xff]
    %v1973 = vld [vmem:[#allocation4 + $0x220] sm:$0xff]
    %v1974 = vld [vmem:[#allocation4 + $0x228] sm:$0xff]
    %v1975 = vld [vmem:[#allocation4 + $0x230] sm:$0xff]
    %v1976 = vld [vmem:[#allocation4 + $0x238] sm:$0xff]
    %v1977 = vld [vmem:[#allocation4 + $0x240] sm:$0xff]
    %v1978 = vld [vmem:[#allocation4 + $0x248] sm:$0xff]
    %v1979 = vld [vmem:[#allocation4 + $0x250] sm:$0xff]
    %v1980 = vld [vmem:[#allocation4 + $0x258] sm:$0xff]
    %v1981 = vld [vmem:[#allocation4 + $0x260] sm:$0xff]
    %v1982 = vld [vmem:[#allocation4 + $0x268] sm:$0xff]
    %v1983 = vld [vmem:[#allocation4 + $0x270] sm:$0xff]
    %v1984 = vld [vmem:[#allocation4 + $0x278] sm:$0xff]
    %v1985 = vld [vmem:[#allocation4 + $0x280] sm:$0xff]
    %v1986 = vld [vmem:[#allocation4 + $0x288] sm:$0xff]
    %v1987 = vld [vmem:[#allocation4 + $0x290] sm:$0xff]
    %v1988 = vld [vmem:[#allocation4 + $0x298] sm:$0xff]
    %v1989 = vld [vmem:[#allocation4 + $0x2a0] sm:$0xff]
    %v1990 = vld [vmem:[#allocation4 + $0x2a8] sm:$0xff]
    %v1991 = vld [vmem:[#allocation4 + $0x2b0] sm:$0xff]
    %v1992 = vld [vmem:[#allocation4 + $0x2b8] sm:$0xff]
    %v1993 = vld [vmem:[#allocation4 + $0x2c0] sm:$0xff]
    %v1994 = vld [vmem:[#allocation4 + $0x2c8] sm:$0xff]
    %v1995 = vld [vmem:[#allocation4 + $0x2d0] sm:$0xff]
    %v1996 = vld [vmem:[#allocation4 + $0x2d8] sm:$0xff]
    %v1997 = vld [vmem:[#allocation4 + $0x2e0] sm:$0xff]
    %v1998 = vld [vmem:[#allocation4 + $0x2e8] sm:$0xff]
    %v1999 = vld [vmem:[#allocation4 + $0x2f0] sm:$0xff]
    %v2000 = vld [vmem:[#allocation4 + $0x2f8] sm:$0xff]
    %v2001 = vld [vmem:[#allocation4 + $0x300] sm:$0xff]
    %v2002 = vld [vmem:[#allocation4 + $0x308] sm:$0xff]
    %v2003 = vld [vmem:[#allocation4 + $0x310] sm:$0xff]
    %v2004 = vld [vmem:[#allocation4 + $0x318] sm:$0xff]
    %v2005 = vld [vmem:[#allocation4 + $0x320] sm:$0xff]
    %v2006 = vld [vmem:[#allocation4 + $0x328] sm:$0xff]
    %v2007 = vld [vmem:[#allocation4 + $0x330] sm:$0xff]
    %v2008 = vld [vmem:[#allocation4 + $0x338] sm:$0xff]
    %v2009 = vld [vmem:[#allocation4 + $0x340] sm:$0xff]
    %v2010 = vld [vmem:[#allocation4 + $0x348] sm:$0xff]
    %v2011 = vld [vmem:[#allocation4 + $0x350] sm:$0xff]
    %v2012 = vld [vmem:[#allocation4 + $0x358] sm:$0xff]
    %v2013 = vld [vmem:[#allocation4 + $0x360] sm:$0xff]
    %v2014 = vld [vmem:[#allocation4 + $0x368] sm:$0xff]
    %v2015 = vld [vmem:[#allocation4 + $0x370] sm:$0xff]
    %v2016 = vld [vmem:[#allocation4 + $0x378] sm:$0xff]
    %v2017 = vld [vmem:[#allocation4 + $0x380] sm:$0xff]
    %v2018 = vld [vmem:[#allocation4 + $0x388] sm:$0xff]
    %v2019 = vld [vmem:[#allocation4 + $0x390] sm:$0xff]
    %v2020 = vld [vmem:[#allocation4 + $0x398] sm:$0xff]
    %v2021 = vld [vmem:[#allocation4 + $0x3a0] sm:$0xff]
    %v2022 = vld [vmem:[#allocation4 + $0x3a8] sm:$0xff]
    %v2023 = vld [vmem:[#allocation4 + $0x3b0] sm:$0xff]
    %v2024 = vld [vmem:[#allocation4 + $0x3b8] sm:$0xff]
    %v2025 = vld [vmem:[#allocation4 + $0x3c0] sm:$0xff]
    %v2026 = vld [vmem:[#allocation4 + $0x3c8] sm:$0xff]
    %v2027 = vld [vmem:[#allocation4 + $0x3d0] sm:$0xff]
    %v2028 = vld [vmem:[#allocation4 + $0x3d8] sm:$0xff]
    %v2029 = vld [vmem:[#allocation4 + $0x3e0] sm:$0xff]
    %v2030 = vld [vmem:[#allocation4 + $0x3e8] sm:$0xff]
    %v2031 = vld [vmem:[#allocation4 + $0x3f0] sm:$0xff]
    %v2032 = vld [vmem:[#allocation4 + $0x3f8] sm:$0xff]
    %v2161 = vunpack.c.l.b16 %v1905
    %v2162 = vunpack.c.h.b16 %v1905
    %v2163 = vunpack.c.l.b16 %v1906
    %v2164 = vunpack.c.h.b16 %v1906
    %v2165 = vunpack.c.l.b16 %v1907
    %v2166 = vunpack.c.h.b16 %v1907
    %v2167 = vunpack.c.l.b16 %v1908
    %v2168 = vunpack.c.h.b16 %v1908
    %v2169 = vunpack.c.l.b16 %v1909
    %v2170 = vunpack.c.h.b16 %v1909
    %v2171 = vunpack.c.l.b16 %v1910
    %v2172 = vunpack.c.h.b16 %v1910
    %v2173 = vunpack.c.l.b16 %v1911
    %v2174 = vunpack.c.h.b16 %v1911
    %v2175 = vunpack.c.l.b16 %v1912
    %v2176 = vunpack.c.h.b16 %v1912
    %v2177 = vunpack.c.l.b16 %v1913
    %v2178 = vunpack.c.h.b16 %v1913
    %v2179 = vunpack.c.l.b16 %v1914
    %v2180 = vunpack.c.h.b16 %v1914
    %v2181 = vunpack.c.l.b16 %v1915
    %v2182 = vunpack.c.h.b16 %v1915
    %v2183 = vunpack.c.l.b16 %v1916
    %v2184 = vunpack.c.h.b16 %v1916
    %v2185 = vunpack.c.l.b16 %v1917
    %v2186 = vunpack.c.h.b16 %v1917
    %v2187 = vunpack.c.l.b16 %v1918
    %v2188 = vunpack.c.h.b16 %v1918
    %v2189 = vunpack.c.l.b16 %v1919
    %v2190 = vunpack.c.h.b16 %v1919
    %v2191 = vunpack.c.l.b16 %v1920
    %v2192 = vunpack.c.h.b16 %v1920
    %v2193 = vunpack.c.l.b16 %v1921
    %v2194 = vunpack.c.h.b16 %v1921
    %v2195 = vunpack.c.l.b16 %v1922
    %v2196 = vunpack.c.h.b16 %v1922
    %v2197 = vunpack.c.l.b16 %v1923
    %v2198 = vunpack.c.h.b16 %v1923
    %v2199 = vunpack.c.l.b16 %v1924
    %v2200 = vunpack.c.h.b16 %v1924
    %v2201 = vunpack.c.l.b16 %v1925
    %v2202 = vunpack.c.h.b16 %v1925
    %v2203 = vunpack.c.l.b16 %v1926
    %v2204 = vunpack.c.h.b16 %v1926
    %v2205 = vunpack.c.l.b16 %v1927
    %v2206 = vunpack.c.h.b16 %v1927
    %v2207 = vunpack.c.l.b16 %v1928
    %v2208 = vunpack.c.h.b16 %v1928
    %v2209 = vunpack.c.l.b16 %v1929
    %v2210 = vunpack.c.h.b16 %v1929
    %v2211 = vunpack.c.l.b16 %v1930
    %v2212 = vunpack.c.h.b16 %v1930
    %v2213 = vunpack.c.l.b16 %v1931
    %v2214 = vunpack.c.h.b16 %v1931
    %v2215 = vunpack.c.l.b16 %v1932
    %v2216 = vunpack.c.h.b16 %v1932
    %v2217 = vunpack.c.l.b16 %v1933
    %v2218 = vunpack.c.h.b16 %v1933
    %v2219 = vunpack.c.l.b16 %v1934
    %v2220 = vunpack.c.h.b16 %v1934
    %v2221 = vunpack.c.l.b16 %v1935
    %v2222 = vunpack.c.h.b16 %v1935
    %v2223 = vunpack.c.l.b16 %v1936
    %v2224 = vunpack.c.h.b16 %v1936
    %v2225 = vunpack.c.l.b16 %v1937
    %v2226 = vunpack.c.h.b16 %v1937
    %v2227 = vunpack.c.l.b16 %v1938
    %v2228 = vunpack.c.h.b16 %v1938
    %v2229 = vunpack.c.l.b16 %v1939
    %v2230 = vunpack.c.h.b16 %v1939
    %v2231 = vunpack.c.l.b16 %v1940
    %v2232 = vunpack.c.h.b16 %v1940
    %v2233 = vunpack.c.l.b16 %v1941
    %v2234 = vunpack.c.h.b16 %v1941
    %v2235 = vunpack.c.l.b16 %v1942
    %v2236 = vunpack.c.h.b16 %v1942
    %v2237 = vunpack.c.l.b16 %v1943
    %v2238 = vunpack.c.h.b16 %v1943
    %v2239 = vunpack.c.l.b16 %v1944
    %v2240 = vunpack.c.h.b16 %v1944
    %v2241 = vunpack.c.l.b16 %v1945
    %v2242 = vunpack.c.h.b16 %v1945
    %v2243 = vunpack.c.l.b16 %v1946
    %v2244 = vunpack.c.h.b16 %v1946
    %v2245 = vunpack.c.l.b16 %v1947
    %v2246 = vunpack.c.h.b16 %v1947
    %v2247 = vunpack.c.l.b16 %v1948
    %v2248 = vunpack.c.h.b16 %v1948
    %v2249 = vunpack.c.l.b16 %v1949
    %v2250 = vunpack.c.h.b16 %v1949
    %v2251 = vunpack.c.l.b16 %v1950
    %v2252 = vunpack.c.h.b16 %v1950
    %v2253 = vunpack.c.l.b16 %v1951
    %v2254 = vunpack.c.h.b16 %v1951
    %v2255 = vunpack.c.l.b16 %v1952
    %v2256 = vunpack.c.h.b16 %v1952
    %v2257 = vunpack.c.l.b16 %v1953
    %v2258 = vunpack.c.h.b16 %v1953
    %v2259 = vunpack.c.l.b16 %v1954
    %v2260 = vunpack.c.h.b16 %v1954
    %v2261 = vunpack.c.l.b16 %v1955
    %v2262 = vunpack.c.h.b16 %v1955
    %v2263 = vunpack.c.l.b16 %v1956
    %v2264 = vunpack.c.h.b16 %v1956
    %v2265 = vunpack.c.l.b16 %v1957
    %v2266 = vunpack.c.h.b16 %v1957
    %v2267 = vunpack.c.l.b16 %v1958
    %v2268 = vunpack.c.h.b16 %v1958
    %v2269 = vunpack.c.l.b16 %v1959
    %v2270 = vunpack.c.h.b16 %v1959
    %v2271 = vunpack.c.l.b16 %v1960
    %v2272 = vunpack.c.h.b16 %v1960
    %v2273 = vunpack.c.l.b16 %v1961
    %v2274 = vunpack.c.h.b16 %v1961
    %v2275 = vunpack.c.l.b16 %v1962
    %v2276 = vunpack.c.h.b16 %v1962
    %v2277 = vunpack.c.l.b16 %v1963
    %v2278 = vunpack.c.h.b16 %v1963
    %v2279 = vunpack.c.l.b16 %v1964
    %v2280 = vunpack.c.h.b16 %v1964
    %v2281 = vunpack.c.l.b16 %v1965
    %v2282 = vunpack.c.h.b16 %v1965
    %v2283 = vunpack.c.l.b16 %v1966
    %v2284 = vunpack.c.h.b16 %v1966
    %v2285 = vunpack.c.l.b16 %v1967
    %v2286 = vunpack.c.h.b16 %v1967
    %v2287 = vunpack.c.l.b16 %v1968
    %v2288 = vunpack.c.h.b16 %v1968
    %v2289 = vunpack.c.l.b16 %v1969
    %v2290 = vunpack.c.h.b16 %v1969
    %v2291 = vunpack.c.l.b16 %v1970
    %v2292 = vunpack.c.h.b16 %v1970
    %v2293 = vunpack.c.l.b16 %v1971
    %v2294 = vunpack.c.h.b16 %v1971
    %v2295 = vunpack.c.l.b16 %v1972
    %v2296 = vunpack.c.h.b16 %v1972
    %v2297 = vunpack.c.l.b16 %v1973
    %v2298 = vunpack.c.h.b16 %v1973
    %v2299 = vunpack.c.l.b16 %v1974
    %v2300 = vunpack.c.h.b16 %v1974
    %v2301 = vunpack.c.l.b16 %v1975
    %v2302 = vunpack.c.h.b16 %v1975
    %v2303 = vunpack.c.l.b16 %v1976
    %v2304 = vunpack.c.h.b16 %v1976
    %v2305 = vunpack.c.l.b16 %v1977
    %v2306 = vunpack.c.h.b16 %v1977
    %v2307 = vunpack.c.l.b16 %v1978
    %v2308 = vunpack.c.h.b16 %v1978
    %v2309 = vunpack.c.l.b16 %v1979
    %v2310 = vunpack.c.h.b16 %v1979
    %v2311 = vunpack.c.l.b16 %v1980
    %v2312 = vunpack.c.h.b16 %v1980
    %v2313 = vunpack.c.l.b16 %v1981
    %v2314 = vunpack.c.h.b16 %v1981
    %v2315 = vunpack.c.l.b16 %v1982
    %v2316 = vunpack.c.h.b16 %v1982
    %v2317 = vunpack.c.l.b16 %v1983
    %v2318 = vunpack.c.h.b16 %v1983
    %v2319 = vunpack.c.l.b16 %v1984
    %v2320 = vunpack.c.h.b16 %v1984
    %v2321 = vunpack.c.l.b16 %v1985
    %v2322 = vunpack.c.h.b16 %v1985
    %v2323 = vunpack.c.l.b16 %v1986
    %v2324 = vunpack.c.h.b16 %v1986
    %v2325 = vunpack.c.l.b16 %v1987
    %v2326 = vunpack.c.h.b16 %v1987
    %v2327 = vunpack.c.l.b16 %v1988
    %v2328 = vunpack.c.h.b16 %v1988
    %v2329 = vunpack.c.l.b16 %v1989
    %v2330 = vunpack.c.h.b16 %v1989
    %v2331 = vunpack.c.l.b16 %v1990
    %v2332 = vunpack.c.h.b16 %v1990
    %v2333 = vunpack.c.l.b16 %v1991
    %v2334 = vunpack.c.h.b16 %v1991
    %v2335 = vunpack.c.l.b16 %v1992
    %v2336 = vunpack.c.h.b16 %v1992
    %v2337 = vunpack.c.l.b16 %v1993
    %v2338 = vunpack.c.h.b16 %v1993
    %v2339 = vunpack.c.l.b16 %v1994
    %v2340 = vunpack.c.h.b16 %v1994
    %v2341 = vunpack.c.l.b16 %v1995
    %v2342 = vunpack.c.h.b16 %v1995
    %v2343 = vunpack.c.l.b16 %v1996
    %v2344 = vunpack.c.h.b16 %v1996
    %v2345 = vunpack.c.l.b16 %v1997
    %v2346 = vunpack.c.h.b16 %v1997
    %v2347 = vunpack.c.l.b16 %v1998
    %v2348 = vunpack.c.h.b16 %v1998
    %v2349 = vunpack.c.l.b16 %v1999
    %v2350 = vunpack.c.h.b16 %v1999
    %v2351 = vunpack.c.l.b16 %v2000
    %v2352 = vunpack.c.h.b16 %v2000
    %v2353 = vunpack.c.l.b16 %v2001
    %v2354 = vunpack.c.h.b16 %v2001
    %v2355 = vunpack.c.l.b16 %v2002
    %v2356 = vunpack.c.h.b16 %v2002
    %v2357 = vunpack.c.l.b16 %v2003
    %v2358 = vunpack.c.h.b16 %v2003
    %v2359 = vunpack.c.l.b16 %v2004
    %v2360 = vunpack.c.h.b16 %v2004
    %v2361 = vunpack.c.l.b16 %v2005
    %v2362 = vunpack.c.h.b16 %v2005
    %v2363 = vunpack.c.l.b16 %v2006
    %v2364 = vunpack.c.h.b16 %v2006
    %v2365 = vunpack.c.l.b16 %v2007
    %v2366 = vunpack.c.h.b16 %v2007
    %v2367 = vunpack.c.l.b16 %v2008
    %v2368 = vunpack.c.h.b16 %v2008
    %v2369 = vunpack.c.l.b16 %v2009
    %v2370 = vunpack.c.h.b16 %v2009
    %v2371 = vunpack.c.l.b16 %v2010
    %v2372 = vunpack.c.h.b16 %v2010
    %v2373 = vunpack.c.l.b16 %v2011
    %v2374 = vunpack.c.h.b16 %v2011
    %v2375 = vunpack.c.l.b16 %v2012
    %v2376 = vunpack.c.h.b16 %v2012
    %v2377 = vunpack.c.l.b16 %v2013
    %v2378 = vunpack.c.h.b16 %v2013
    %v2379 = vunpack.c.l.b16 %v2014
    %v2380 = vunpack.c.h.b16 %v2014
    %v2381 = vunpack.c.l.b16 %v2015
    %v2382 = vunpack.c.h.b16 %v2015
    %v2383 = vunpack.c.l.b16 %v2016
    %v2384 = vunpack.c.h.b16 %v2016
    %v2385 = vunpack.c.l.b16 %v2017
    %v2386 = vunpack.c.h.b16 %v2017
    %v2387 = vunpack.c.l.b16 %v2018
    %v2388 = vunpack.c.h.b16 %v2018
    %v2389 = vunpack.c.l.b16 %v2019
    %v2390 = vunpack.c.h.b16 %v2019
    %v2391 = vunpack.c.l.b16 %v2020
    %v2392 = vunpack.c.h.b16 %v2020
    %v2393 = vunpack.c.l.b16 %v2021
    %v2394 = vunpack.c.h.b16 %v2021
    %v2395 = vunpack.c.l.b16 %v2022
    %v2396 = vunpack.c.h.b16 %v2022
    %v2397 = vunpack.c.l.b16 %v2023
    %v2398 = vunpack.c.h.b16 %v2023
    %v2399 = vunpack.c.l.b16 %v2024
    %v2400 = vunpack.c.h.b16 %v2024
    %v2401 = vunpack.c.l.b16 %v2025
    %v2402 = vunpack.c.h.b16 %v2025
    %v2403 = vunpack.c.l.b16 %v2026
    %v2404 = vunpack.c.h.b16 %v2026
    %v2405 = vunpack.c.l.b16 %v2027
    %v2406 = vunpack.c.h.b16 %v2027
    %v2407 = vunpack.c.l.b16 %v2028
    %v2408 = vunpack.c.h.b16 %v2028
    %v2409 = vunpack.c.l.b16 %v2029
    %v2410 = vunpack.c.h.b16 %v2029
    %v2411 = vunpack.c.l.b16 %v2030
    %v2412 = vunpack.c.h.b16 %v2030
    %v2413 = vunpack.c.l.b16 %v2031
    %v2414 = vunpack.c.h.b16 %v2031
    %v2415 = vunpack.c.l.b16 %v2032
    %v2416 = vunpack.c.h.b16 %v2032
    %v2417 = vpack.c.b16 %v2165, %v2161
    %v2418 = vpack.c.b16 %v2166, %v2162
    %v2419 = vpack.c.b16 %v2167, %v2163
    %v2420 = vpack.c.b16 %v2168, %v2164
    %v2421 = vpack.c.b16 %v2173, %v2169
    %v2422 = vpack.c.b16 %v2174, %v2170
    %v2423 = vpack.c.b16 %v2175, %v2171
    %v2424 = vpack.c.b16 %v2176, %v2172
    %v2425 = vpack.c.b16 %v2181, %v2177
    %v2426 = vpack.c.b16 %v2182, %v2178
    %v2427 = vpack.c.b16 %v2183, %v2179
    %v2428 = vpack.c.b16 %v2184, %v2180
    %v2429 = vpack.c.b16 %v2189, %v2185
    %v2430 = vpack.c.b16 %v2190, %v2186
    %v2431 = vpack.c.b16 %v2191, %v2187
    %v2432 = vpack.c.b16 %v2192, %v2188
    %v2433 = vpack.c.b16 %v2197, %v2193
    %v2434 = vpack.c.b16 %v2198, %v2194
    %v2435 = vpack.c.b16 %v2199, %v2195
    %v2436 = vpack.c.b16 %v2200, %v2196
    %v2437 = vpack.c.b16 %v2205, %v2201
    %v2438 = vpack.c.b16 %v2206, %v2202
    %v2439 = vpack.c.b16 %v2207, %v2203
    %v2440 = vpack.c.b16 %v2208, %v2204
    %v2441 = vpack.c.b16 %v2213, %v2209
    %v2442 = vpack.c.b16 %v2214, %v2210
    %v2443 = vpack.c.b16 %v2215, %v2211
    %v2444 = vpack.c.b16 %v2216, %v2212
    %v2445 = vpack.c.b16 %v2221, %v2217
    %v2446 = vpack.c.b16 %v2222, %v2218
    %v2447 = vpack.c.b16 %v2223, %v2219
    %v2448 = vpack.c.b16 %v2224, %v2220
    %v2449 = vpack.c.b16 %v2229, %v2225
    %v2450 = vpack.c.b16 %v2230, %v2226
    %v2451 = vpack.c.b16 %v2231, %v2227
    %v2452 = vpack.c.b16 %v2232, %v2228
    %v2453 = vpack.c.b16 %v2237, %v2233
    %v2454 = vpack.c.b16 %v2238, %v2234
    %v2455 = vpack.c.b16 %v2239, %v2235
    %v2456 = vpack.c.b16 %v2240, %v2236
    %v2457 = vpack.c.b16 %v2245, %v2241
    %v2458 = vpack.c.b16 %v2246, %v2242
    %v2459 = vpack.c.b16 %v2247, %v2243
    %v2460 = vpack.c.b16 %v2248, %v2244
    %v2461 = vpack.c.b16 %v2253, %v2249
    %v2462 = vpack.c.b16 %v2254, %v2250
    %v2463 = vpack.c.b16 %v2255, %v2251
    %v2464 = vpack.c.b16 %v2256, %v2252
    %v2465 = vpack.c.b16 %v2261, %v2257
    %v2466 = vpack.c.b16 %v2262, %v2258
    %v2467 = vpack.c.b16 %v2263, %v2259
    %v2468 = vpack.c.b16 %v2264, %v2260
    %v2469 = vpack.c.b16 %v2269, %v2265
    %v2470 = vpack.c.b16 %v2270, %v2266
    %v2471 = vpack.c.b16 %v2271, %v2267
    %v2472 = vpack.c.b16 %v2272, %v2268
    %v2473 = vpack.c.b16 %v2277, %v2273
    %v2474 = vpack.c.b16 %v2278, %v2274
    %v2475 = vpack.c.b16 %v2279, %v2275
    %v2476 = vpack.c.b16 %v2280, %v2276
    %v2477 = vpack.c.b16 %v2285, %v2281
    %v2478 = vpack.c.b16 %v2286, %v2282
    %v2479 = vpack.c.b16 %v2287, %v2283
    %v2480 = vpack.c.b16 %v2288, %v2284
    %v2481 = vpack.c.b16 %v2293, %v2289
    %v2482 = vpack.c.b16 %v2294, %v2290
    %v2483 = vpack.c.b16 %v2295, %v2291
    %v2484 = vpack.c.b16 %v2296, %v2292
    %v2485 = vpack.c.b16 %v2301, %v2297
    %v2486 = vpack.c.b16 %v2302, %v2298
    %v2487 = vpack.c.b16 %v2303, %v2299
    %v2488 = vpack.c.b16 %v2304, %v2300
    %v2489 = vpack.c.b16 %v2309, %v2305
    %v2490 = vpack.c.b16 %v2310, %v2306
    %v2491 = vpack.c.b16 %v2311, %v2307
    %v2492 = vpack.c.b16 %v2312, %v2308
    %v2493 = vpack.c.b16 %v2317, %v2313
    %v2494 = vpack.c.b16 %v2318, %v2314
    %v2495 = vpack.c.b16 %v2319, %v2315
    %v2496 = vpack.c.b16 %v2320, %v2316
    %v2497 = vpack.c.b16 %v2325, %v2321
    %v2498 = vpack.c.b16 %v2326, %v2322
    %v2499 = vpack.c.b16 %v2327, %v2323
    %v2500 = vpack.c.b16 %v2328, %v2324
    %v2501 = vpack.c.b16 %v2333, %v2329
    %v2502 = vpack.c.b16 %v2334, %v2330
    %v2503 = vpack.c.b16 %v2335, %v2331
    %v2504 = vpack.c.b16 %v2336, %v2332
    %v2505 = vpack.c.b16 %v2341, %v2337
    %v2506 = vpack.c.b16 %v2342, %v2338
    %v2507 = vpack.c.b16 %v2343, %v2339
    %v2508 = vpack.c.b16 %v2344, %v2340
    %v2509 = vpack.c.b16 %v2349, %v2345
    %v2510 = vpack.c.b16 %v2350, %v2346
    %v2511 = vpack.c.b16 %v2351, %v2347
    %v2512 = vpack.c.b16 %v2352, %v2348
    %v2513 = vpack.c.b16 %v2357, %v2353
    %v2514 = vpack.c.b16 %v2358, %v2354
    %v2515 = vpack.c.b16 %v2359, %v2355
    %v2516 = vpack.c.b16 %v2360, %v2356
    %v2517 = vpack.c.b16 %v2365, %v2361
    %v2518 = vpack.c.b16 %v2366, %v2362
    %v2519 = vpack.c.b16 %v2367, %v2363
    %v2520 = vpack.c.b16 %v2368, %v2364
    %v2521 = vpack.c.b16 %v2373, %v2369
    %v2522 = vpack.c.b16 %v2374, %v2370
    %v2523 = vpack.c.b16 %v2375, %v2371
    %v2524 = vpack.c.b16 %v2376, %v2372
    %v2525 = vpack.c.b16 %v2381, %v2377
    %v2526 = vpack.c.b16 %v2382, %v2378
    %v2527 = vpack.c.b16 %v2383, %v2379
    %v2528 = vpack.c.b16 %v2384, %v2380
    %v2529 = vpack.c.b16 %v2389, %v2385
    %v2530 = vpack.c.b16 %v2390, %v2386
    %v2531 = vpack.c.b16 %v2391, %v2387
    %v2532 = vpack.c.b16 %v2392, %v2388
    %v2533 = vpack.c.b16 %v2397, %v2393
    %v2534 = vpack.c.b16 %v2398, %v2394
    %v2535 = vpack.c.b16 %v2399, %v2395
    %v2536 = vpack.c.b16 %v2400, %v2396
    %v2537 = vpack.c.b16 %v2405, %v2401
    %v2538 = vpack.c.b16 %v2406, %v2402
    %v2539 = vpack.c.b16 %v2407, %v2403
    %v2540 = vpack.c.b16 %v2408, %v2404
    %v2541 = vpack.c.b16 %v2413, %v2409
    %v2542 = vpack.c.b16 %v2414, %v2410
    %v2543 = vpack.c.b16 %v2415, %v2411
    %v2544 = vpack.c.b16 %v2416, %v2412
    %2673 = vmatpush.bf16.msra.mxu0 %v2445
    %2674 = vmatpush.bf16.msra.mxu0 %v2441
    %2675 = vmatpush.bf16.msra.mxu0 %v2437
    %2676 = vmatpush.bf16.msra.mxu0 %v2433
    %2677 = vmatpush.bf16.msra.mxu0 %v2429
    %2678 = vmatpush.bf16.msra.mxu0 %v2425
    %2679 = vmatpush.bf16.msra.mxu0 %v2421
    %2680 = vmatpush.bf16.msra.mxu0 %v2417
    %2681 = vmatmul.bf16.gmra.mxu0 %v1901
    %v2682 = vpop.f32.mrf.mxu0
    %v2683 = vadd.f32 0.0, %v2682
    %v2684 = vpop.f32.mrf.mxu0
    %v2685 = vadd.f32 0.0, %v2684
    %2686 = vdwg.mxu0
    %2687 = vmatpush.bf16.msra.mxu0 %v2477
    %2688 = vmatpush.bf16.msra.mxu0 %v2473
    %2689 = vmatpush.bf16.msra.mxu0 %v2469
    %2690 = vmatpush.bf16.msra.mxu0 %v2465
    %2691 = vmatpush.bf16.msra.mxu0 %v2461
    %2692 = vmatpush.bf16.msra.mxu0 %v2457
    %2693 = vmatpush.bf16.msra.mxu0 %v2453
    %2694 = vmatpush.bf16.msra.mxu0 %v2449
    %2695 = vmatmul.bf16.gmra.mxu0 %v1902
    %v2696 = vpop.f32.mrf.mxu0
    %v2697 = vadd.f32 %v2683, %v2696
    %v2698 = vpop.f32.mrf.mxu0
    %v2699 = vadd.f32 %v2685, %v2698
    %2700 = vdwg.mxu0
    %2701 = vmatpush.bf16.msra.mxu0 %v2509
    %2702 = vmatpush.bf16.msra.mxu0 %v2505
    %2703 = vmatpush.bf16.msra.mxu0 %v2501
    %2704 = vmatpush.bf16.msra.mxu0 %v2497
    %2705 = vmatpush.bf16.msra.mxu0 %v2493
    %2706 = vmatpush.bf16.msra.mxu0 %v2489
    %2707 = vmatpush.bf16.msra.mxu0 %v2485
    %2708 = vmatpush.bf16.msra.mxu0 %v2481
    %2709 = vmatmul.bf16.gmra.mxu0 %v1903
    %v2710 = vpop.f32.mrf.mxu0
    %v2711 = vadd.f32 %v2697, %v2710
    %v2712 = vpop.f32.mrf.mxu0
    %v2713 = vadd.f32 %v2699, %v2712
    %2714 = vdwg.mxu0
    %2715 = vmatpush.bf16.msra.mxu0 %v2541
    %2716 = vmatpush.bf16.msra.mxu0 %v2537
    %2717 = vmatpush.bf16.msra.mxu0 %v2533
    %2718 = vmatpush.bf16.msra.mxu0 %v2529
    %2719 = vmatpush.bf16.msra.mxu0 %v2525
    %2720 = vmatpush.bf16.msra.mxu0 %v2521
    %2721 = vmatpush.bf16.msra.mxu0 %v2517
    %2722 = vmatpush.bf16.msra.mxu0 %v2513
    %2723 = vmatmul.bf16.gmra.mxu0 %v1904
    %v2724 = vpop.f32.mrf.mxu0
    %v2725 = vadd.f32 %v2711, %v2724
    %v2726 = vpop.f32.mrf.mxu0
    %v2727 = vadd.f32 %v2713, %v2726
    %2728 = vdwg.mxu0
    %2729 = vmatpush.bf16.msra.mxu0 %v2446
    %2730 = vmatpush.bf16.msra.mxu0 %v2442
    %2731 = vmatpush.bf16.msra.mxu0 %v2438
    %2732 = vmatpush.bf16.msra.mxu0 %v2434
    %2733 = vmatpush.bf16.msra.mxu0 %v2430
    %2734 = vmatpush.bf16.msra.mxu0 %v2426
    %2735 = vmatpush.bf16.msra.mxu0 %v2422
    %2736 = vmatpush.bf16.msra.mxu0 %v2418
    %2737 = vmatmul.bf16.gmra.mxu0 %v1901
    %v2738 = vpop.f32.mrf.mxu0
    %v2739 = vadd.f32 0.0, %v2738
    %v2740 = vpop.f32.mrf.mxu0
    %v2741 = vadd.f32 0.0, %v2740
    %2742 = vdwg.mxu0
    %2743 = vmatpush.bf16.msra.mxu0 %v2478
    %2744 = vmatpush.bf16.msra.mxu0 %v2474
    %2745 = vmatpush.bf16.msra.mxu0 %v2470
    %2746 = vmatpush.bf16.msra.mxu0 %v2466
    %2747 = vmatpush.bf16.msra.mxu0 %v2462
    %2748 = vmatpush.bf16.msra.mxu0 %v2458
    %2749 = vmatpush.bf16.msra.mxu0 %v2454
    %2750 = vmatpush.bf16.msra.mxu0 %v2450
    %2751 = vmatmul.bf16.gmra.mxu0 %v1902
    %v2752 = vpop.f32.mrf.mxu0
    %v2753 = vadd.f32 %v2739, %v2752
    %v2754 = vpop.f32.mrf.mxu0
    %v2755 = vadd.f32 %v2741, %v2754
    %2756 = vdwg.mxu0
    %2757 = vmatpush.bf16.msra.mxu0 %v2510
    %2758 = vmatpush.bf16.msra.mxu0 %v2506
    %2759 = vmatpush.bf16.msra.mxu0 %v2502
    %2760 = vmatpush.bf16.msra.mxu0 %v2498
    %2761 = vmatpush.bf16.msra.mxu0 %v2494
    %2762 = vmatpush.bf16.msra.mxu0 %v2490
    %2763 = vmatpush.bf16.msra.mxu0 %v2486
    %2764 = vmatpush.bf16.msra.mxu0 %v2482
    %2765 = vmatmul.bf16.gmra.mxu0 %v1903
    %v2766 = vpop.f32.mrf.mxu0
    %v2767 = vadd.f32 %v2753, %v2766
    %v2768 = vpop.f32.mrf.mxu0
    %v2769 = vadd.f32 %v2755, %v2768
    %2770 = vdwg.mxu0
    %2771 = vmatpush.bf16.msra.mxu0 %v2542
    %2772 = vmatpush.bf16.msra.mxu0 %v2538
    %2773 = vmatpush.bf16.msra.mxu0 %v2534
    %2774 = vmatpush.bf16.msra.mxu0 %v2530
    %2775 = vmatpush.bf16.msra.mxu0 %v2526
    %2776 = vmatpush.bf16.msra.mxu0 %v2522
    %2777 = vmatpush.bf16.msra.mxu0 %v2518
    %2778 = vmatpush.bf16.msra.mxu0 %v2514
    %2779 = vmatmul.bf16.gmra.mxu0 %v1904
    %v2780 = vpop.f32.mrf.mxu0
    %v2781 = vadd.f32 %v2767, %v2780
    %v2782 = vpop.f32.mrf.mxu0
    %v2783 = vadd.f32 %v2769, %v2782
    %2784 = vdwg.mxu0
    %2785 = vmatpush.bf16.msra.mxu0 %v2447
    %2786 = vmatpush.bf16.msra.mxu0 %v2443
    %2787 = vmatpush.bf16.msra.mxu0 %v2439
    %2788 = vmatpush.bf16.msra.mxu0 %v2435
    %2789 = vmatpush.bf16.msra.mxu0 %v2431
    %2790 = vmatpush.bf16.msra.mxu0 %v2427
    %2791 = vmatpush.bf16.msra.mxu0 %v2423
    %2792 = vmatpush.bf16.msra.mxu0 %v2419
    %2793 = vmatmul.bf16.gmra.mxu0 %v1901
    %v2794 = vpop.f32.mrf.mxu0
    %v2795 = vadd.f32 0.0, %v2794
    %v2796 = vpop.f32.mrf.mxu0
    %v2797 = vadd.f32 0.0, %v2796
    %2798 = vdwg.mxu0
    %2799 = vmatpush.bf16.msra.mxu0 %v2479
    %2800 = vmatpush.bf16.msra.mxu0 %v2475
    %2801 = vmatpush.bf16.msra.mxu0 %v2471
    %2802 = vmatpush.bf16.msra.mxu0 %v2467
    %2803 = vmatpush.bf16.msra.mxu0 %v2463
    %2804 = vmatpush.bf16.msra.mxu0 %v2459
    %2805 = vmatpush.bf16.msra.mxu0 %v2455
    %2806 = vmatpush.bf16.msra.mxu0 %v2451
    %2807 = vmatmul.bf16.gmra.mxu0 %v1902
    %v2808 = vpop.f32.mrf.mxu0
    %v2809 = vadd.f32 %v2795, %v2808
    %v2810 = vpop.f32.mrf.mxu0
    %v2811 = vadd.f32 %v2797, %v2810
    %2812 = vdwg.mxu0
    %2813 = vmatpush.bf16.msra.mxu0 %v2511
    %2814 = vmatpush.bf16.msra.mxu0 %v2507
    %2815 = vmatpush.bf16.msra.mxu0 %v2503
    %2816 = vmatpush.bf16.msra.mxu0 %v2499
    %2817 = vmatpush.bf16.msra.mxu0 %v2495
    %2818 = vmatpush.bf16.msra.mxu0 %v2491
    %2819 = vmatpush.bf16.msra.mxu0 %v2487
    %2820 = vmatpush.bf16.msra.mxu0 %v2483
    %2821 = vmatmul.bf16.gmra.mxu0 %v1903
    %v2822 = vpop.f32.mrf.mxu0
    %v2823 = vadd.f32 %v2809, %v2822
    %v2824 = vpop.f32.mrf.mxu0
    %v2825 = vadd.f32 %v2811, %v2824
    %2826 = vdwg.mxu0
    %2827 = vmatpush.bf16.msra.mxu0 %v2543
    %2828 = vmatpush.bf16.msra.mxu0 %v2539
    %2829 = vmatpush.bf16.msra.mxu0 %v2535
    %2830 = vmatpush.bf16.msra.mxu0 %v2531
    %2831 = vmatpush.bf16.msra.mxu0 %v2527
    %2832 = vmatpush.bf16.msra.mxu0 %v2523
    %2833 = vmatpush.bf16.msra.mxu0 %v2519
    %2834 = vmatpush.bf16.msra.mxu0 %v2515
    %2835 = vmatmul.bf16.gmra.mxu0 %v1904
    %v2836 = vpop.f32.mrf.mxu0
    %v2837 = vadd.f32 %v2823, %v2836
    %v2838 = vpop.f32.mrf.mxu0
    %v2839 = vadd.f32 %v2825, %v2838
    %2840 = vdwg.mxu0
    %2841 = vmatpush.bf16.msra.mxu0 %v2448
    %2842 = vmatpush.bf16.msra.mxu0 %v2444
    %2843 = vmatpush.bf16.msra.mxu0 %v2440
    %2844 = vmatpush.bf16.msra.mxu0 %v2436
    %2845 = vmatpush.bf16.msra.mxu0 %v2432
    %2846 = vmatpush.bf16.msra.mxu0 %v2428
    %2847 = vmatpush.bf16.msra.mxu0 %v2424
    %2848 = vmatpush.bf16.msra.mxu0 %v2420
    %2849 = vmatmul.bf16.gmra.mxu0 %v1901
    %v2850 = vpop.f32.mrf.mxu0
    %v2851 = vadd.f32 0.0, %v2850
    %v2852 = vpop.f32.mrf.mxu0
    %v2853 = vadd.f32 0.0, %v2852
    %2854 = vdwg.mxu0
    %2855 = vmatpush.bf16.msra.mxu0 %v2480
    %2856 = vmatpush.bf16.msra.mxu0 %v2476
    %2857 = vmatpush.bf16.msra.mxu0 %v2472
    %2858 = vmatpush.bf16.msra.mxu0 %v2468
    %2859 = vmatpush.bf16.msra.mxu0 %v2464
    %2860 = vmatpush.bf16.msra.mxu0 %v2460
    %2861 = vmatpush.bf16.msra.mxu0 %v2456
    %2862 = vmatpush.bf16.msra.mxu0 %v2452
    %2863 = vmatmul.bf16.gmra.mxu0 %v1902
    %v2864 = vpop.f32.mrf.mxu0
    %v2865 = vadd.f32 %v2851, %v2864
    %v2866 = vpop.f32.mrf.mxu0
    %v2867 = vadd.f32 %v2853, %v2866
    %2868 = vdwg.mxu0
    %2869 = vmatpush.bf16.msra.mxu0 %v2512
    %2870 = vmatpush.bf16.msra.mxu0 %v2508
    %2871 = vmatpush.bf16.msra.mxu0 %v2504
    %2872 = vmatpush.bf16.msra.mxu0 %v2500
    %2873 = vmatpush.bf16.msra.mxu0 %v2496
    %2874 = vmatpush.bf16.msra.mxu0 %v2492
    %2875 = vmatpush.bf16.msra.mxu0 %v2488
    %2876 = vmatpush.bf16.msra.mxu0 %v2484
    %2877 = vmatmul.bf16.gmra.mxu0 %v1903
    %v2878 = vpop.f32.mrf.mxu0
    %v2879 = vadd.f32 %v2865, %v2878
    %v2880 = vpop.f32.mrf.mxu0
    %v2881 = vadd.f32 %v2867, %v2880
    %2882 = vdwg.mxu0
    %2883 = vmatpush.bf16.msra.mxu0 %v2544
    %2884 = vmatpush.bf16.msra.mxu0 %v2540
    %2885 = vmatpush.bf16.msra.mxu0 %v2536
    %2886 = vmatpush.bf16.msra.mxu0 %v2532
    %2887 = vmatpush.bf16.msra.mxu0 %v2528
    %2888 = vmatpush.bf16.msra.mxu0 %v2524
    %2889 = vmatpush.bf16.msra.mxu0 %v2520
    %2890 = vmatpush.bf16.msra.mxu0 %v2516
    %2891 = vmatmul.bf16.gmra.mxu0 %v1904
    %v2892 = vpop.f32.mrf.mxu0
    %v2893 = vadd.f32 %v2879, %v2892
    %v2894 = vpop.f32.mrf.mxu0
    %v2895 = vadd.f32 %v2881, %v2894
    %2896 = vdwg.mxu0
    %v2897 = vpack.c.bf16 %v2781, %v2725
    %v2898 = vpack.c.bf16 %v2893, %v2837
    %v2899 = vpack.c.bf16 %v2783, %v2727
    %v2900 = vpack.c.bf16 %v2895, %v2839
    %v2901 = vld [vmem:[%s4] sm:$0xf]
    %2903 = vst [vmem:[#allocation1] ss:$9 sm:$0xff] %v2901
    %v2904 = vld [vmem:[#allocation1] sm:$0xff]
    %v2905 = vld [vmem:[#allocation1 + $0x9] sm:$0xff]
    %v2906 = vld [vmem:[#allocation1 + $0x12] sm:$0xff]
    %v2907 = vld [vmem:[#allocation1 + $0x1b] sm:$0xff]
    %v2908 = vpack.i.b16 %v2904, %v2904
    %v2910 = vperm.slane %v2908, 0
    %v2911 = vpack.i.b16 %v2905, %v2905
    %v2913 = vperm.slane %v2911, 0
    %v2914 = vpack.i.b16 %v2906, %v2906
    %v2916 = vperm.slane %v2914, 0
    %v2917 = vpack.i.b16 %v2907, %v2907
    %v2919 = vperm.slane %v2917, 0
    %v2920 = vunpack.c.l.bf16 %v2897
    %v2921 = vunpack.c.h.bf16 %v2897
    %v2922 = vunpack.c.l.bf16 %v2898
    %v2923 = vunpack.c.h.bf16 %v2898
    %v2924 = vunpack.c.l.bf16 %v2899
    %v2925 = vunpack.c.h.bf16 %v2899
    %v2926 = vunpack.c.l.bf16 %v2900
    %v2927 = vunpack.c.h.bf16 %v2900
    %v2928 = vunpack.c.l.bf16 %v2910
    %v2929 = vunpack.c.l.bf16 %v2913
    %v2930 = vunpack.c.l.bf16 %v2916
    %v2931 = vunpack.c.l.bf16 %v2919
    %v2932 = vadd.f32 %v2920, %v2928
    %v2933 = vadd.f32 %v2921, %v2929
    %v2934 = vadd.f32 %v2922, %v2930
    %v2935 = vadd.f32 %v2923, %v2931
    %v2936 = vadd.f32 %v2924, %v2928
    %v2937 = vadd.f32 %v2925, %v2929
    %v2938 = vadd.f32 %v2926, %v2930
    %v2939 = vadd.f32 %v2927, %v2931
    %v2940 = vpack.c.bf16 %v2933, %v2932
    %v2941 = vpack.c.bf16 %v2935, %v2934
    %v2942 = vpack.c.bf16 %v2937, %v2936
    %v2943 = vpack.c.bf16 %v2939, %v2938
    %v2944 = vunpack.c.l.bf16 %v2940
    %v2945 = vunpack.c.h.bf16 %v2940
    %v2946 = vunpack.c.l.bf16 %v2941
    %v2947 = vunpack.c.h.bf16 %v2941
    %v2948 = vunpack.c.l.bf16 %v2942
    %v2949 = vunpack.c.h.bf16 %v2942
    %v2950 = vunpack.c.l.bf16 %v2943
    %v2951 = vunpack.c.h.bf16 %v2943
    %v2952 = vmax.f32 %v2944, 0.0
    %v2953 = vmax.f32 %v2945, 0.0
    %v2954 = vmax.f32 %v2946, 0.0
    %v2955 = vmax.f32 %v2947, 0.0
    %v2956 = vmax.f32 %v2948, 0.0
    %v2957 = vmax.f32 %v2949, 0.0
    %v2958 = vmax.f32 %v2950, 0.0
    %v2959 = vmax.f32 %v2951, 0.0
    %v2960 = vpack.c.bf16 %v2956, %v2952
    %v2961 = vpack.c.bf16 %v2957, %v2953
    %v2962 = vpack.c.bf16 %v2958, %v2954
    %v2963 = vpack.c.bf16 %v2959, %v2955
    %v2964 = vld [vmem:[%s5] sm:$0xf]
    %v2965 = vld [vmem:[%s5 + $0x4] sm:$0xf]
    %v2966 = vld [vmem:[%s5 + $0x8] sm:$0xf]
    %v2967 = vld [vmem:[%s5 + $0xc] sm:$0xf]
    %v2968 = vld [vmem:[%s5 + $0x10] sm:$0xf]
    %v2969 = vld [vmem:[%s5 + $0x14] sm:$0xf]
    %v2970 = vld [vmem:[%s5 + $0x18] sm:$0xf]
    %v2971 = vld [vmem:[%s5 + $0x1c] sm:$0xf]
    %v2972 = vld [vmem:[%s5 + $0x20] sm:$0xf]
    %v2973 = vld [vmem:[%s5 + $0x24] sm:$0xf]
    %v2974 = vld [vmem:[%s5 + $0x28] sm:$0xf]
    %v2975 = vld [vmem:[%s5 + $0x2c] sm:$0xf]
    %v2976 = vld [vmem:[%s5 + $0x30] sm:$0xf]
    %v2977 = vld [vmem:[%s5 + $0x34] sm:$0xf]
    %v2978 = vld [vmem:[%s5 + $0x38] sm:$0xf]
    %v2979 = vld [vmem:[%s5 + $0x3c] sm:$0xf]
    %v2980 = vld [vmem:[%s5 + $0x40] sm:$0xf]
    %v2981 = vld [vmem:[%s5 + $0x44] sm:$0xf]
    %v2982 = vld [vmem:[%s5 + $0x48] sm:$0xf]
    %v2983 = vld [vmem:[%s5 + $0x4c] sm:$0xf]
    %v2984 = vld [vmem:[%s5 + $0x50] sm:$0xf]
    %v2985 = vld [vmem:[%s5 + $0x54] sm:$0xf]
    %v2986 = vld [vmem:[%s5 + $0x58] sm:$0xf]
    %v2987 = vld [vmem:[%s5 + $0x5c] sm:$0xf]
    %v2988 = vld [vmem:[%s5 + $0x60] sm:$0xf]
    %v2989 = vld [vmem:[%s5 + $0x64] sm:$0xf]
    %v2990 = vld [vmem:[%s5 + $0x68] sm:$0xf]
    %v2991 = vld [vmem:[%s5 + $0x6c] sm:$0xf]
    %v2992 = vld [vmem:[%s5 + $0x70] sm:$0xf]
    %v2993 = vld [vmem:[%s5 + $0x74] sm:$0xf]
    %v2994 = vld [vmem:[%s5 + $0x78] sm:$0xf]
    %v2995 = vld [vmem:[%s5 + $0x7c] sm:$0xf]
    %v2996 = vld [vmem:[%s5 + $0x80] sm:$0xf]
    %v2997 = vld [vmem:[%s5 + $0x84] sm:$0xf]
    %v2998 = vld [vmem:[%s5 + $0x88] sm:$0xf]
    %v2999 = vld [vmem:[%s5 + $0x8c] sm:$0xf]
    %v3000 = vld [vmem:[%s5 + $0x90] sm:$0xf]
    %v3001 = vld [vmem:[%s5 + $0x94] sm:$0xf]
    %v3002 = vld [vmem:[%s5 + $0x98] sm:$0xf]
    %v3003 = vld [vmem:[%s5 + $0x9c] sm:$0xf]
    %v3004 = vld [vmem:[%s5 + $0xa0] sm:$0xf]
    %v3005 = vld [vmem:[%s5 + $0xa4] sm:$0xf]
    %v3006 = vld [vmem:[%s5 + $0xa8] sm:$0xf]
    %v3007 = vld [vmem:[%s5 + $0xac] sm:$0xf]
    %v3008 = vld [vmem:[%s5 + $0xb0] sm:$0xf]
    %v3009 = vld [vmem:[%s5 + $0xb4] sm:$0xf]
    %v3010 = vld [vmem:[%s5 + $0xb8] sm:$0xf]
    %v3011 = vld [vmem:[%s5 + $0xbc] sm:$0xf]
    %v3012 = vld [vmem:[%s5 + $0xc0] sm:$0xf]
    %v3013 = vld [vmem:[%s5 + $0xc4] sm:$0xf]
    %v3014 = vld [vmem:[%s5 + $0xc8] sm:$0xf]
    %v3015 = vld [vmem:[%s5 + $0xcc] sm:$0xf]
    %v3016 = vld [vmem:[%s5 + $0xd0] sm:$0xf]
    %v3017 = vld [vmem:[%s5 + $0xd4] sm:$0xf]
    %v3018 = vld [vmem:[%s5 + $0xd8] sm:$0xf]
    %v3019 = vld [vmem:[%s5 + $0xdc] sm:$0xf]
    %v3020 = vld [vmem:[%s5 + $0xe0] sm:$0xf]
    %v3021 = vld [vmem:[%s5 + $0xe4] sm:$0xf]
    %v3022 = vld [vmem:[%s5 + $0xe8] sm:$0xf]
    %v3023 = vld [vmem:[%s5 + $0xec] sm:$0xf]
    %v3024 = vld [vmem:[%s5 + $0xf0] sm:$0xf]
    %v3025 = vld [vmem:[%s5 + $0xf4] sm:$0xf]
    %v3026 = vld [vmem:[%s5 + $0xf8] sm:$0xf]
    %v3027 = vld [vmem:[%s5 + $0xfc] sm:$0xf]
    %v3028 = vld [vmem:[%s6] sm:$0x1]
    %v3030 = vperm.slane %v3028, 0
    %v3096 = vunpack.c.l.b16 %v2964
    %v3097 = vunpack.c.l.b16 %v2965
    %v3098 = vunpack.c.l.b16 %v2966
    %v3099 = vunpack.c.l.b16 %v2967
    %v3100 = vunpack.c.l.b16 %v2968
    %v3101 = vunpack.c.l.b16 %v2969
    %v3102 = vunpack.c.l.b16 %v2970
    %v3103 = vunpack.c.l.b16 %v2971
    %v3104 = vunpack.c.l.b16 %v2972
    %v3105 = vunpack.c.l.b16 %v2973
    %v3106 = vunpack.c.l.b16 %v2974
    %v3107 = vunpack.c.l.b16 %v2975
    %v3108 = vunpack.c.l.b16 %v2976
    %v3109 = vunpack.c.l.b16 %v2977
    %v3110 = vunpack.c.l.b16 %v2978
    %v3111 = vunpack.c.l.b16 %v2979
    %v3112 = vunpack.c.l.b16 %v2980
    %v3113 = vunpack.c.l.b16 %v2981
    %v3114 = vunpack.c.l.b16 %v2982
    %v3115 = vunpack.c.l.b16 %v2983
    %v3116 = vunpack.c.l.b16 %v2984
    %v3117 = vunpack.c.l.b16 %v2985
    %v3118 = vunpack.c.l.b16 %v2986
    %v3119 = vunpack.c.l.b16 %v2987
    %v3120 = vunpack.c.l.b16 %v2988
    %v3121 = vunpack.c.l.b16 %v2989
    %v3122 = vunpack.c.l.b16 %v2990
    %v3123 = vunpack.c.l.b16 %v2991
    %v3124 = vunpack.c.l.b16 %v2992
    %v3125 = vunpack.c.l.b16 %v2993
    %v3126 = vunpack.c.l.b16 %v2994
    %v3127 = vunpack.c.l.b16 %v2995
    %v3128 = vunpack.c.l.b16 %v2996
    %v3129 = vunpack.c.l.b16 %v2997
    %v3130 = vunpack.c.l.b16 %v2998
    %v3131 = vunpack.c.l.b16 %v2999
    %v3132 = vunpack.c.l.b16 %v3000
    %v3133 = vunpack.c.l.b16 %v3001
    %v3134 = vunpack.c.l.b16 %v3002
    %v3135 = vunpack.c.l.b16 %v3003
    %v3136 = vunpack.c.l.b16 %v3004
    %v3137 = vunpack.c.l.b16 %v3005
    %v3138 = vunpack.c.l.b16 %v3006
    %v3139 = vunpack.c.l.b16 %v3007
    %v3140 = vunpack.c.l.b16 %v3008
    %v3141 = vunpack.c.l.b16 %v3009
    %v3142 = vunpack.c.l.b16 %v3010
    %v3143 = vunpack.c.l.b16 %v3011
    %v3144 = vunpack.c.l.b16 %v3012
    %v3145 = vunpack.c.l.b16 %v3013
    %v3146 = vunpack.c.l.b16 %v3014
    %v3147 = vunpack.c.l.b16 %v3015
    %v3148 = vunpack.c.l.b16 %v3016
    %v3149 = vunpack.c.l.b16 %v3017
    %v3150 = vunpack.c.l.b16 %v3018
    %v3151 = vunpack.c.l.b16 %v3019
    %v3152 = vunpack.c.l.b16 %v3020
    %v3153 = vunpack.c.l.b16 %v3021
    %v3154 = vunpack.c.l.b16 %v3022
    %v3155 = vunpack.c.l.b16 %v3023
    %v3156 = vunpack.c.l.b16 %v3024
    %v3157 = vunpack.c.l.b16 %v3025
    %v3158 = vunpack.c.l.b16 %v3026
    %v3159 = vunpack.c.l.b16 %v3027
    %v3160 = vpack.c.b16 %v3097, %v3096
    %v3161 = vpack.c.b16 %v3099, %v3098
    %v3162 = vpack.c.b16 %v3101, %v3100
    %v3163 = vpack.c.b16 %v3103, %v3102
    %v3164 = vpack.c.b16 %v3105, %v3104
    %v3165 = vpack.c.b16 %v3107, %v3106
    %v3166 = vpack.c.b16 %v3109, %v3108
    %v3167 = vpack.c.b16 %v3111, %v3110
    %v3168 = vpack.c.b16 %v3113, %v3112
    %v3169 = vpack.c.b16 %v3115, %v3114
    %v3170 = vpack.c.b16 %v3117, %v3116
    %v3171 = vpack.c.b16 %v3119, %v3118
    %v3172 = vpack.c.b16 %v3121, %v3120
    %v3173 = vpack.c.b16 %v3123, %v3122
    %v3174 = vpack.c.b16 %v3125, %v3124
    %v3175 = vpack.c.b16 %v3127, %v3126
    %v3176 = vpack.c.b16 %v3129, %v3128
    %v3177 = vpack.c.b16 %v3131, %v3130
    %v3178 = vpack.c.b16 %v3133, %v3132
    %v3179 = vpack.c.b16 %v3135, %v3134
    %v3180 = vpack.c.b16 %v3137, %v3136
    %v3181 = vpack.c.b16 %v3139, %v3138
    %v3182 = vpack.c.b16 %v3141, %v3140
    %v3183 = vpack.c.b16 %v3143, %v3142
    %v3184 = vpack.c.b16 %v3145, %v3144
    %v3185 = vpack.c.b16 %v3147, %v3146
    %v3186 = vpack.c.b16 %v3149, %v3148
    %v3187 = vpack.c.b16 %v3151, %v3150
    %v3188 = vpack.c.b16 %v3153, %v3152
    %v3189 = vpack.c.b16 %v3155, %v3154
    %v3190 = vpack.c.b16 %v3157, %v3156
    %v3191 = vpack.c.b16 %v3159, %v3158
    %3224 = vmatpush.bf16.msra.mxu0 %v3167
    %3225 = vmatpush.bf16.msra.mxu0 %v3166
    %3226 = vmatpush.bf16.msra.mxu0 %v3165
    %3227 = vmatpush.bf16.msra.mxu0 %v3164
    %3228 = vmatpush.bf16.msra.mxu0 %v3163
    %3229 = vmatpush.bf16.msra.mxu0 %v3162
    %3230 = vmatpush.bf16.msra.mxu0 %v3161
    %3231 = vmatpush.bf16.msra.mxu0 %v3160
    %3232 = vmatmul.bf16.gmra.mxu0 %v2960
    %v3233 = vpop.f32.mrf.mxu0
    %v3234 = vadd.f32 %v3030, %v3233
    %v3235 = vpop.f32.mrf.mxu0
    %v3236 = vadd.f32 %v3030, %v3235
    %3237 = vdwg.mxu0
    %3238 = vmatpush.bf16.msra.mxu0 %v3175
    %3239 = vmatpush.bf16.msra.mxu0 %v3174
    %3240 = vmatpush.bf16.msra.mxu0 %v3173
    %3241 = vmatpush.bf16.msra.mxu0 %v3172
    %3242 = vmatpush.bf16.msra.mxu0 %v3171
    %3243 = vmatpush.bf16.msra.mxu0 %v3170
    %3244 = vmatpush.bf16.msra.mxu0 %v3169
    %3245 = vmatpush.bf16.msra.mxu0 %v3168
    %3246 = vmatmul.bf16.gmra.mxu0 %v2961
    %v3247 = vpop.f32.mrf.mxu0
    %v3248 = vadd.f32 %v3234, %v3247
    %v3249 = vpop.f32.mrf.mxu0
    %v3250 = vadd.f32 %v3236, %v3249
    %3251 = vdwg.mxu0
    %3252 = vmatpush.bf16.msra.mxu0 %v3183
    %3253 = vmatpush.bf16.msra.mxu0 %v3182
    %3254 = vmatpush.bf16.msra.mxu0 %v3181
    %3255 = vmatpush.bf16.msra.mxu0 %v3180
    %3256 = vmatpush.bf16.msra.mxu0 %v3179
    %3257 = vmatpush.bf16.msra.mxu0 %v3178
    %3258 = vmatpush.bf16.msra.mxu0 %v3177
    %3259 = vmatpush.bf16.msra.mxu0 %v3176
    %3260 = vmatmul.bf16.gmra.mxu0 %v2962
    %v3261 = vpop.f32.mrf.mxu0
    %v3262 = vadd.f32 %v3248, %v3261
    %v3263 = vpop.f32.mrf.mxu0
    %v3264 = vadd.f32 %v3250, %v3263
    %3265 = vdwg.mxu0
    %3266 = vmatpush.bf16.msra.mxu0 %v3191
    %3267 = vmatpush.bf16.msra.mxu0 %v3190
    %3268 = vmatpush.bf16.msra.mxu0 %v3189
    %3269 = vmatpush.bf16.msra.mxu0 %v3188
    %3270 = vmatpush.bf16.msra.mxu0 %v3187
    %3271 = vmatpush.bf16.msra.mxu0 %v3186
    %3272 = vmatpush.bf16.msra.mxu0 %v3185
    %3273 = vmatpush.bf16.msra.mxu0 %v3184
    %3274 = vmatmul.bf16.gmra.mxu0 %v2963
    %v3275 = vpop.f32.mrf.mxu0
    %v3276 = vadd.f32 %v3262, %v3275
    %v3277 = vpop.f32.mrf.mxu0
    %v3278 = vadd.f32 %v3264, %v3277
    %3279 = vdwg.mxu0
    %3280 = vst [vmem:[%s7] sm:$0xff] %v3276
    %3281 = vst [vmem:[%s7 + $0x8] sm:$0xff] %v3278
    // Predicated region
    $region38: #{_mlp_forward.1} parent=1 // pred_check
      _
    $region39: #{_mlp_forward.1} parent=1 // pred_check_branch
      %3283 = sbr.rel (0) target = $region41
    $region40: #{_mlp_forward.1} parent=1 // pred_region
      _
    $region41: #{_mlp_forward.1} parent=1 // pred_fallthru
      _
    // Predicated region
    $region42: #{_mlp_forward.1} parent=1 // pred_check
      _
    $region43: #{_mlp_forward.1} parent=1 // pred_check_branch
      %3285 = sbr.rel (0) target = $region45
    $region44: #{_mlp_forward.1} parent=1 // pred_region
      _
    $region45: #{_mlp_forward.1} parent=1 // pred_fallthru
      _
    %3286 = vsyncpa [#allocation3], 1
    %3287 = vsyncpa [#allocation5], 1

</llo_original>
